<compile_context>
chip_gen: v6e
topology: v6e:2x2x1
jax: 0.10.0
libtpu: 0.0.40
codegen_flags: <defaults>
</compile_context>

<pallas_src>
import functools

import jax
import jax.numpy as jnp
from jax import lax
from jax.experimental import pallas as pl
from jax.experimental.pallas import tpu as pltpu

LN_EPS = 1e-5


# ----------------------------- in-kernel helpers -----------------------------

def _layer_norm(x, g, b):
    """Single-pass LayerNorm: one (sum, sum-of-squares) reduction pair."""
    n = x.shape[-1]
    s1 = jnp.sum(x, axis=-1, keepdims=True)
    s2 = jnp.sum(x * x, axis=-1, keepdims=True)
    mu = s1 * (1.0 / n)
    var = s2 * (1.0 / n) - mu * mu
    return (x - mu) * lax.rsqrt(var + LN_EPS) * g + b


def _attention(q, k, v, num_heads, batch, t_q, t_k, cdt):
    """Multi-head attention core for `batch` row-contiguous examples.

    q: (batch*t_q, C); k, v: (batch*t_k, C), rows batch-major.
    Returns (ctx (batch*t_q, C) pre-output-projection,
             probs (batch*t_q, t_k) head-averaged attention weights, f32).
    """
    _, C = q.shape
    d_h = C // num_heads
    scale = float(d_h) ** -0.5

    ctx_rows = []
    prob_rows = []
    for b in range(batch):                       # static unroll (batch block small)
        qb = (q[b * t_q:(b + 1) * t_q, :] * scale).astype(cdt)
        kb = k[b * t_k:(b + 1) * t_k, :].astype(cdt)
        vb = v[b * t_k:(b + 1) * t_k, :].astype(cdt)
        heads = []
        p_sum = None
        for h in range(num_heads):               # static unroll over heads
            sl = slice(h * d_h, (h + 1) * d_h)
            # scores = qh @ kh^T without materializing a transpose
            s = lax.dot_general(qb[:, sl], kb[:, sl], (((1,), (1,)), ((), ())),
                                preferred_element_type=jnp.float32)   # (t_q, t_k)
            s = s - jnp.max(s, axis=-1, keepdims=True)
            e = jnp.exp(s)
            p = e / jnp.sum(e, axis=-1, keepdims=True)    # exact softmax (ws parity)
            p_sum = p if p_sum is None else p_sum + p
            heads.append(jnp.dot(p.astype(cdt), vb[:, sl],
                                 preferred_element_type=jnp.float32))  # (t_q, d_h)
        ctx_rows.append(jnp.concatenate(heads, axis=-1))              # (t_q, C)
        prob_rows.append(p_sum * (1.0 / num_heads))                   # (t_q, t_k)
    ctx = jnp.concatenate(ctx_rows, axis=0)                           # (batch*t_q, C)
    probs = jnp.concatenate(prob_rows, axis=0)                        # (batch*t_q, t_k)
    return ctx, probs


# ----------------------------- fused decoder kernel -----------------------------

def _make_decoder_kernel(num_heads, num_layers, compute_dtype):
    cdt = compute_dtype
    f32 = jnp.float32

    def kernel(tgt_ref, mem_ref, qpos_ref, pos_ref,
               sa_wq, sa_wk, sa_wv, sa_wo,
               ca_wq, ca_wk, ca_wv, ca_wo,
               w1_ref, w2_ref, b1_ref, vec_ref,
               fng_ref, fnb_ref,
               out_ref, ws_ref):
        l = pl.program_id(1)

        bb, tt, c = out_ref.shape
        tm = mem_ref.shape[1]

        # Layer 0: seed the resident activation (out_ref doubles as the running x,
        # kept in VMEM across all layer steps of this batch block).
        @pl.when(l == 0)
        def _():
            out_ref[...] = tgt_ref[...]

        def mm(a, w_ref):
            return jnp.dot(a.astype(cdt), w_ref[0], preferred_element_type=f32)

        # Batch-major 2-D row views: projections / FFN / LayerNorms run on bb*T
        # rows at once so the MXU sees a deep M dimension.
        x = out_ref[...].astype(f32).reshape(bb * tt, c)
        qpos = qpos_ref[...].astype(f32).reshape(bb * tt, c)
        mem = mem_ref[...].astype(f32).reshape(bb * tm, c)
        mpos = pos_ref[...].astype(f32).reshape(bb * tm, c)

        vec = vec_ref[0]                                   # (15, C) packed per-layer vectors
        sa_bq, sa_bk, sa_bv, sa_bo = vec[0:1], vec[1:2], vec[2:3], vec[3:4]
        ca_bq, ca_bk, ca_bv, ca_bo = vec[4:5], vec[5:6], vec[6:7], vec[7:8]
        b2 = vec[8:9]
        ln1_g, ln1_b = vec[9:10], vec[10:11]
        ln2_g, ln2_b = vec[11:12], vec[12:13]
        ln3_g, ln3_b = vec[13:14], vec[14:15]
        b1 = b1_ref[0]                                     # (1, FF)

        # ---- self-attention: q = k = x + query_pos, v = x ----
        xq = x + qpos
        q = mm(xq, sa_wq) + sa_bq
        k = mm(xq, sa_wk) + sa_bk
        v = mm(x, sa_wv) + sa_bv
        ctx, _ = _attention(q, k, v, num_heads, bb, tt, tt, cdt)
        sa = mm(ctx, sa_wo) + sa_bo                        # single output projection (K = C)
        x = _layer_norm(x + sa, ln1_g, ln1_b)

        # ---- cross-attention: q = x + query_pos, k = memory + pos, v = memory ----
        q = mm(x + qpos, ca_wq) + ca_bq
        k = mm(mem + mpos, ca_wk) + ca_bk
        v = mm(mem, ca_wv) + ca_bv
        ctx, probs = _attention(q, k, v, num_heads, bb, tt, tm, cdt)
        ca = mm(ctx, ca_wo) + ca_bo
        x = _layer_norm(x + ca, ln2_g, ln2_b)

        # ---- FFN (linear2(relu(linear1(x)))) + residual + norm3 ----
        hdn = jnp.maximum(mm(x, w1_ref) + b1, 0.0)
        y = mm(hdn, w2_ref) + b2
        x = _layer_norm(x + y, ln3_g, ln3_b)

        out_ref[...] = x.reshape(bb, tt, c).astype(out_ref.dtype)

        # Last layer: fold the decoder's final LayerNorm and emit the only ws the
        # module returns (head-averaged cross-attention weights of the last layer).
        @pl.when(l == num_layers - 1)
        def _():
            xf = _layer_norm(x, fng_ref[...], fnb_ref[...])
            out_ref[...] = xf.reshape(bb, tt, c).astype(out_ref.dtype)
            ws_ref[...] = probs.reshape(bb, tt, tm).astype(ws_ref.dtype)

    return kernel


# --------------------------- param plumbing (host-side, once) ---------------------------

def prepare_decoder_params(params, compute_dtype=jnp.float32):
    """Convert PyTorch-convention params to the fused-kernel layout ONCE (outside jit).

    Weights: pre-transposed to (Cin, Cout) and stacked on a leading layer axis,
    cast to `compute_dtype` (the MXU operand dtype; bf16 recommended on v6e/v7x).
    All C-length vectors (attn biases, linear2 bias, LayerNorm affines) are packed
    into a single (L, 15, C) f32 tensor; linear1 bias is (L, 1, FF) f32.
    """
    c = params["norm_g"].shape[0]

    def mha_split(m):
        wq, wk, wv = jnp.split(m["in_proj_weight"], 3, axis=0)
        bq, bk, bv = jnp.split(m["in_proj_bias"], 3, axis=0)
        return (wq.T, wk.T, wv.T, m["out_proj_weight"].T,
                bq, bk, bv, m["out_proj_bias"])

    names = ["sa_wq", "sa_wk", "sa_wv", "sa_wo",
             "ca_wq", "ca_wk", "ca_wv", "ca_wo", "w1", "w2", "b1", "vec"]
    stacks = {n: [] for n in names}
    for p in params["layers"]:
        s = mha_split(p["self_attn"])
        cx = mha_split(p["cross_attn"])
        stacks["sa_wq"].append(s[0]); stacks["sa_wk"].append(s[1])
        stacks["sa_wv"].append(s[2]); stacks["sa_wo"].append(s[3])
        stacks["ca_wq"].append(cx[0]); stacks["ca_wk"].append(cx[1])
        stacks["ca_wv"].append(cx[2]); stacks["ca_wo"].append(cx[3])
        stacks["w1"].append(p["linear1_w"].T)
        stacks["w2"].append(p["linear2_w"].T)
        stacks["b1"].append(p["linear1_b"].reshape(1, -1))
        stacks["vec"].append(jnp.stack(
            [s[4], s[5], s[6], s[7], cx[4], cx[5], cx[6], cx[7],
             p["linear2_b"],
             p["norm1_g"], p["norm1_b"], p["norm2_g"], p["norm2_b"],
             p["norm3_g"], p["norm3_b"]], axis=0))

    prep = {n: jnp.stack(v, axis=0) for n, v in stacks.items()}
    for n in ["sa_wq", "sa_wk", "sa_wv", "sa_wo",
              "ca_wq", "ca_wk", "ca_wv", "ca_wo", "w1", "w2"]:
        prep[n] = prep[n].astype(compute_dtype)
    prep["b1"] = prep["b1"].astype(jnp.float32)
    prep["vec"] = prep["vec"].astype(jnp.float32)
    prep["fn_g"] = params["norm_g"].reshape(1, c).astype(jnp.float32)
    prep["fn_b"] = params["norm_b"].reshape(1, c).astype(jnp.float32)
    return prep


# ----------------------------- forward wrapper -----------------------------

def transformer_decoder(tgt, memory, prep, pos, query_pos, *, num_heads,
                        batch_block=None, vmem_limit_bytes=48 * 1024 * 1024):
    """TransformerDecoder forward (return_intermediate=False, norm=LayerNorm(C)).

    tgt/query_pos: (Tt, B, C); memory/pos: (Tm, B, C).
    Returns (output (Tt, B, C), ws (B, Tt, Tm)) — ws is the last layer's
    head-averaged cross-attention weights (PyTorch MHA default).
    """
    # TODO(synk): tgt_mask / memory_mask / key-padding masks unsupported (the
    # reference forward passes them as None); dropout is eval-mode identity.
    tt, bsz, c = tgt.shape
    tm = memory.shape[0]
    n_layers = prep["sa_wq"].shape[0]
    assert c % num_heads == 0
    cdt = prep["sa_wq"].dtype

    # One batch-first transpose per activation tensor (small vs. streamed weights).
    x_b = jnp.transpose(tgt, (1, 0, 2))
    mem_b = jnp.transpose(memory, (1, 0, 2))
    qpos_b = jnp.transpose(query_pos, (1, 0, 2))
    pos_b = jnp.transpose(pos, (1, 0, 2))

    bb = bsz if batch_block is None else max(1, min(batch_block, bsz))
    while bsz % bb:
        bb -= 1
    nb = bsz // bb

    kernel = _make_decoder_kernel(num_heads, n_layers, cdt)

    def act_spec(t):
        return pl.BlockSpec((bb, t, c), lambda bi, l: (bi, 0, 0))

    def layer_spec(arr):
        nd = arr.ndim
        return pl.BlockSpec((1,) + arr.shape[1:],
                            lambda bi, l, _nd=nd: (l,) + (0,) * (_nd - 1))

    def full_spec(arr):
        nd = arr.ndim
        return pl.BlockSpec(arr.shape, lambda bi, l, _nd=nd: (0,) * _nd)

    weight_arrays = [prep["sa_wq"], prep["sa_wk"], prep["sa_wv"], prep["sa_wo"],
                     prep["ca_wq"], prep["ca_wk"], prep["ca_wv"], prep["ca_wo"],
                     prep["w1"], prep["w2"], prep["b1"], prep["vec"]]
    in_arrays = [x_b, mem_b, qpos_b, pos_b] + weight_arrays + [prep["fn_g"], prep["fn_b"]]
    in_specs = ([act_spec(tt), act_spec(tm), act_spec(tt), act_spec(tm)]
                + [layer_spec(a) for a in weight_arrays]
                + [full_spec(prep["fn_g"]), full_spec(prep["fn_b"])])

    out_b, ws = pl.pallas_call(
        kernel,
        grid=(nb, n_layers),                       # layer axis innermost: x stays resident
        out_shape=(jax.ShapeDtypeStruct((bsz, tt, c), tgt.dtype),
                   jax.ShapeDtypeStruct((bsz, tt, tm), jnp.float32)),
        in_specs=in_specs,
        out_specs=(pl.BlockSpec((bb, tt, c), lambda bi, l: (bi, 0, 0)),
                   pl.BlockSpec((bb, tt, tm), lambda bi, l: (bi, 0, 0))),
        compiler_params=pltpu.CompilerParams(
            dimension_semantics=("parallel", "arbitrary"),
            vmem_limit_bytes=vmem_limit_bytes),
    )(*in_arrays)

    return jnp.transpose(out_b, (1, 0, 2)), ws


# ---------------------------- param init (PyTorch layout) ----------------------------

def init_params(key, num_layers, c, ff):
    def mha_params(k):
        k1, k2 = jax.random.split(k)
        return {
            "in_proj_weight": 0.02 * jax.random.normal(k1, (3 * c, c), jnp.float32),
            "in_proj_bias": jnp.zeros((3 * c,), jnp.float32),
            "out_proj_weight": 0.02 * jax.random.normal(k2, (c, c), jnp.float32),
            "out_proj_bias": jnp.zeros((c,), jnp.float32),
        }

    layers = []
    for lk in jax.random.split(key, num_layers):
        ks = jax.random.split(lk, 4)
        layers.append({
            "self_attn": mha_params(ks[0]),
            "cross_attn": mha_params(ks[1]),
            "linear1_w": 0.02 * jax.random.normal(ks[2], (ff, c), jnp.float32),
            "linear1_b": jnp.zeros((ff,), jnp.float32),
            "linear2_w": 0.02 * jax.random.normal(ks[3], (c, ff), jnp.float32),
            "linear2_b": jnp.zeros((c,), jnp.float32),
            "norm1_g": jnp.ones((c,), jnp.float32), "norm1_b": jnp.zeros((c,), jnp.float32),
            "norm2_g": jnp.ones((c,), jnp.float32), "norm2_b": jnp.zeros((c,), jnp.float32),
            "norm3_g": jnp.ones((c,), jnp.float32), "norm3_b": jnp.zeros((c,), jnp.float32),
        })
    return {"layers": layers,
            "norm_g": jnp.ones((c,), jnp.float32),
            "norm_b": jnp.zeros((c,), jnp.float32)}


# ---------------------------- pure-JAX reference (for checking) ----------------------------

def _reference_decoder(tgt, memory, params, pos, query_pos, num_heads):
    def ln(x, g, b):
        mu = x.mean(-1, keepdims=True)
        var = ((x - mu) ** 2).mean(-1, keepdims=True)
        return (x - mu) / jnp.sqrt(var + LN_EPS) * g + b

    def mha(q_in, k_in, v_in, m):
        tq, bsz, c = q_in.shape
        tk = k_in.shape[0]
        h = num_heads
        dh = c // h
        wq, wk, wv = jnp.split(m["in_proj_weight"], 3, axis=0)
        bq, bk, bv = jnp.split(m["in_proj_bias"], 3, axis=0)
        q = q_in @ wq.T + bq
        k = k_in @ wk.T + bk
        v = v_in @ wv.T + bv
        split = lambda x, t: x.reshape(t, bsz, h, dh).transpose(1, 2, 0, 3)
        qh, kh, vh = split(q, tq), split(k, tk), split(v, tk)
        s = jnp.einsum("bhqd,bhkd->bhqk", qh * (dh ** -0.5), kh)
        p = jax.nn.softmax(s, axis=-1)
        o = jnp.einsum("bhqk,bhkd->bhqd", p, vh)
        o = o.transpose(2, 0, 1, 3).reshape(tq, bsz, c)
        return o @ m["out_proj_weight"].T + m["out_proj_bias"], p.mean(axis=1)

    x = tgt
    ws = None
    for p in params["layers"]:
        qk = x + query_pos
        sa, _ = mha(qk, qk, x, p["self_attn"])
        x = ln(x + sa, p["norm1_g"], p["norm1_b"])
        ca, ws = mha(x + query_pos, memory + pos, memory, p["cross_attn"])
        x = ln(x + ca, p["norm2_g"], p["norm2_b"])
        hdn = jax.nn.relu(x @ p["linear1_w"].T + p["linear1_b"])
        y = hdn @ p["linear2_w"].T + p["linear2_b"]
        x = ln(x + y, p["norm3_g"], p["norm3_b"])
    x = ln(x, params["norm_g"], params["norm_b"])
    return x, ws


# ------------------------------- main -------------------------------

if __name__ == "__main__":
    T_MEM, T_TGT, B, C, H, FF, L = 16, 8, 2, 32, 4, 64, 2

    key = jax.random.PRNGKey(0)
    k1, k2, k3, k4, kp = jax.random.split(key, 5)
    tgt = jax.random.normal(k1, (T_TGT, B, C), jnp.float32)      # decoder queries
    memory = jax.random.normal(k2, (T_MEM, B, C), jnp.float32)   # encoder tokens
    query_pos = jax.random.normal(k3, (T_TGT, B, C), jnp.float32)
    pos = jax.random.normal(k4, (T_MEM, B, C), jnp.float32)

    params = init_params(kp, L, C, FF)
    prep = prepare_decoder_params(params)          # once, outside jit (no per-step transposes)

    fwd = jax.jit(functools.partial(transformer_decoder, num_heads=H))
    out, ws = fwd(tgt, memory, prep, pos, query_pos)
    jax.block_until_ready((out, ws))

    assert out.shape == (T_TGT, B, C), out.shape
    assert ws.shape == (B, T_TGT, T_MEM), ws.shape
    assert bool(jnp.all(jnp.isfinite(out))) and bool(jnp.all(jnp.isfinite(ws)))

    ref_out, ref_ws = _reference_decoder(tgt, memory, params, pos, query_pos, H)
    assert bool(jnp.allclose(out, ref_out, atol=2e-4, rtol=2e-4)), \
        float(jnp.max(jnp.abs(out - ref_out)))
    assert bool(jnp.allclose(ws, ref_ws, atol=2e-4, rtol=2e-4)), \
        float(jnp.max(jnp.abs(ws - ref_ws)))
    print("KERNEL_OK")
</pallas_src>

<mosaic_0001>
module attributes {stable_mosaic.version = 11 : i64} {
  func.func @kernel(%arg0: i32, %arg1: i32, %arg2: memref<2x8x32xf32, #tpu.memory_space<vmem>>, %arg3: memref<2x16x32xf32, #tpu.memory_space<vmem>>, %arg4: memref<2x8x32xf32, #tpu.memory_space<vmem>>, %arg5: memref<2x16x32xf32, #tpu.memory_space<vmem>>, %arg6: memref<1x32x32xf32, #tpu.memory_space<vmem>>, %arg7: memref<1x32x32xf32, #tpu.memory_space<vmem>>, %arg8: memref<1x32x32xf32, #tpu.memory_space<vmem>>, %arg9: memref<1x32x32xf32, #tpu.memory_space<vmem>>, %arg10: memref<1x32x32xf32, #tpu.memory_space<vmem>>, %arg11: memref<1x32x32xf32, #tpu.memory_space<vmem>>, %arg12: memref<1x32x32xf32, #tpu.memory_space<vmem>>, %arg13: memref<1x32x32xf32, #tpu.memory_space<vmem>>, %arg14: memref<1x32x64xf32, #tpu.memory_space<vmem>>, %arg15: memref<1x64x32xf32, #tpu.memory_space<vmem>>, %arg16: memref<1x1x64xf32, #tpu.memory_space<vmem>>, %arg17: memref<1x15x32xf32, #tpu.memory_space<vmem>>, %arg18: memref<1x32xf32, #tpu.memory_space<vmem>>, %arg19: memref<1x32xf32, #tpu.memory_space<vmem>>, %arg20: memref<2x8x32xf32, #tpu.memory_space<vmem>>, %arg21: memref<2x8x16xf32, #tpu.memory_space<vmem>>) attributes {dimension_semantics = [#tpu.dimension_semantics<parallel>, #tpu.dimension_semantics<arbitrary>], iteration_bounds = array<i64: 1, 2>, scalar_prefetch = 0 : i64, scratch_operands = 0 : i64, tpu.core_type = #tpu.core_type<tc>, window_params = [{transform_indices = @transform_0, window_bounds = array<i64: 2, 8, 32>}, {transform_indices = @transform_1, window_bounds = array<i64: 2, 16, 32>}, {transform_indices = @transform_2, window_bounds = array<i64: 2, 8, 32>}, {transform_indices = @transform_3, window_bounds = array<i64: 2, 16, 32>}, {transform_indices = @transform_4, window_bounds = array<i64: 1, 32, 32>}, {transform_indices = @transform_5, window_bounds = array<i64: 1, 32, 32>}, {transform_indices = @transform_6, window_bounds = array<i64: 1, 32, 32>}, {transform_indices = @transform_7, window_bounds = array<i64: 1, 32, 32>}, {transform_indices = @transform_8, window_bounds = array<i64: 1, 32, 32>}, {transform_indices = @transform_9, window_bounds = array<i64: 1, 32, 32>}, {transform_indices = @transform_10, window_bounds = array<i64: 1, 32, 32>}, {transform_indices = @transform_11, window_bounds = array<i64: 1, 32, 32>}, {transform_indices = @transform_12, window_bounds = array<i64: 1, 32, 64>}, {transform_indices = @transform_13, window_bounds = array<i64: 1, 64, 32>}, {transform_indices = @transform_14, window_bounds = array<i64: 1, 1, 64>}, {transform_indices = @transform_15, window_bounds = array<i64: 1, 15, 32>}, {pipeline_mode = #tpu.pipeline_mode<synchronous>, transform_indices = @transform_16, window_bounds = array<i64: 1, 32>}, {pipeline_mode = #tpu.pipeline_mode<synchronous>, transform_indices = @transform_17, window_bounds = array<i64: 1, 32>}, {transform_indices = @transform_18, window_bounds = array<i64: 2, 8, 32>}, {transform_indices = @transform_19, window_bounds = array<i64: 2, 8, 16>}]} {
    %c0_i32 = arith.constant 0 : i32
    %0 = arith.cmpi eq, %arg1, %c0_i32 : i32
    %1 = arith.extui %0 : i1 to i32
    %c0_i32_0 = arith.constant 0 : i32
    %2 = arith.cmpi ne, %1, %c0_i32_0 : i32
    scf.if %2 {
      %c0_147 = arith.constant 0 : index
      %c0_148 = arith.constant 0 : index
      %c0_149 = arith.constant 0 : index
      %420 = vector.load %arg2[%c0_147, %c0_148, %c0_149] : memref<2x8x32xf32, #tpu.memory_space<vmem>>, vector<2x8x32xf32>
      %c0_150 = arith.constant 0 : index
      %c0_151 = arith.constant 0 : index
      %c0_152 = arith.constant 0 : index
      %421 = vector.load %arg20[%c0_150, %c0_151, %c0_152] : memref<2x8x32xf32, #tpu.memory_space<vmem>>, vector<2x8x32xf32>
      tpu.vector_store %arg20[%c0_150, %c0_151, %c0_152], %420 {strides = array<i32>} : memref<2x8x32xf32, #tpu.memory_space<vmem>>, vector<2x8x32xf32>,
    } else {
    }
    %c0 = arith.constant 0 : index
    %c0_1 = arith.constant 0 : index
    %c0_2 = arith.constant 0 : index
    %3 = vector.load %arg20[%c0, %c0_1, %c0_2] : memref<2x8x32xf32, #tpu.memory_space<vmem>>, vector<2x8x32xf32>
    %4 = vector.shape_cast %3 : vector<2x8x32xf32> to vector<16x32xf32>
    %c0_3 = arith.constant 0 : index
    %c0_4 = arith.constant 0 : index
    %c0_5 = arith.constant 0 : index
    %5 = vector.load %arg4[%c0_3, %c0_4, %c0_5] : memref<2x8x32xf32, #tpu.memory_space<vmem>>, vector<2x8x32xf32>
    %6 = vector.shape_cast %5 : vector<2x8x32xf32> to vector<16x32xf32>
    %c0_6 = arith.constant 0 : index
    %c0_7 = arith.constant 0 : index
    %c0_8 = arith.constant 0 : index
    %7 = vector.load %arg3[%c0_6, %c0_7, %c0_8] : memref<2x16x32xf32, #tpu.memory_space<vmem>>, vector<2x16x32xf32>
    %8 = vector.shape_cast %7 : vector<2x16x32xf32> to vector<32x32xf32>
    %c0_9 = arith.constant 0 : index
    %c0_10 = arith.constant 0 : index
    %c0_11 = arith.constant 0 : index
    %9 = vector.load %arg5[%c0_9, %c0_10, %c0_11] : memref<2x16x32xf32, #tpu.memory_space<vmem>>, vector<2x16x32xf32>
    %10 = vector.shape_cast %9 : vector<2x16x32xf32> to vector<32x32xf32>
    %c0_12 = arith.constant 0 : index
    %c0_13 = arith.constant 0 : index
    %c0_14 = arith.constant 0 : index
    %11 = vector.load %arg17[%c0_12, %c0_13, %c0_14] : memref<1x15x32xf32, #tpu.memory_space<vmem>>, vector<1x15x32xf32>
    %12 = vector.shape_cast %11 : vector<1x15x32xf32> to vector<15x32xf32>
    %13 = vector.extract_strided_slice %12 {offsets = [0, 0], sizes = [1, 32], strides = [1, 1]} : vector<15x32xf32> to vector<1x32xf32>
    %14 = vector.extract_strided_slice %12 {offsets = [1, 0], sizes = [1, 32], strides = [1, 1]} : vector<15x32xf32> to vector<1x32xf32>
    %15 = vector.extract_strided_slice %12 {offsets = [2, 0], sizes = [1, 32], strides = [1, 1]} : vector<15x32xf32> to vector<1x32xf32>
    %16 = vector.extract_strided_slice %12 {offsets = [3, 0], sizes = [1, 32], strides = [1, 1]} : vector<15x32xf32> to vector<1x32xf32>
    %17 = vector.extract_strided_slice %12 {offsets = [4, 0], sizes = [1, 32], strides = [1, 1]} : vector<15x32xf32> to vector<1x32xf32>
    %18 = vector.extract_strided_slice %12 {offsets = [5, 0], sizes = [1, 32], strides = [1, 1]} : vector<15x32xf32> to vector<1x32xf32>
    %19 = vector.extract_strided_slice %12 {offsets = [6, 0], sizes = [1, 32], strides = [1, 1]} : vector<15x32xf32> to vector<1x32xf32>
    %20 = vector.extract_strided_slice %12 {offsets = [7, 0], sizes = [1, 32], strides = [1, 1]} : vector<15x32xf32> to vector<1x32xf32>
    %21 = vector.extract_strided_slice %12 {offsets = [8, 0], sizes = [1, 32], strides = [1, 1]} : vector<15x32xf32> to vector<1x32xf32>
    %22 = vector.extract_strided_slice %12 {offsets = [9, 0], sizes = [1, 32], strides = [1, 1]} : vector<15x32xf32> to vector<1x32xf32>
    %23 = vector.extract_strided_slice %12 {offsets = [10, 0], sizes = [1, 32], strides = [1, 1]} : vector<15x32xf32> to vector<1x32xf32>
    %24 = vector.extract_strided_slice %12 {offsets = [11, 0], sizes = [1, 32], strides = [1, 1]} : vector<15x32xf32> to vector<1x32xf32>
    %25 = vector.extract_strided_slice %12 {offsets = [12, 0], sizes = [1, 32], strides = [1, 1]} : vector<15x32xf32> to vector<1x32xf32>
    %26 = vector.extract_strided_slice %12 {offsets = [13, 0], sizes = [1, 32], strides = [1, 1]} : vector<15x32xf32> to vector<1x32xf32>
    %27 = vector.extract_strided_slice %12 {offsets = [14, 0], sizes = [1, 32], strides = [1, 1]} : vector<15x32xf32> to vector<1x32xf32>
    %c0_15 = arith.constant 0 : index
    %c0_16 = arith.constant 0 : index
    %c0_17 = arith.constant 0 : index
    %28 = vector.load %arg16[%c0_15, %c0_16, %c0_17] : memref<1x1x64xf32, #tpu.memory_space<vmem>>, vector<1x1x64xf32>
    %29 = vector.shape_cast %28 : vector<1x1x64xf32> to vector<1x64xf32>
    %30 = arith.addf %4, %6 : vector<16x32xf32>
    %c0_18 = arith.constant 0 : index
    %c0_19 = arith.constant 0 : index
    %c0_20 = arith.constant 0 : index
    %31 = vector.load %arg6[%c0_18, %c0_19, %c0_20] : memref<1x32x32xf32, #tpu.memory_space<vmem>>, vector<1x32x32xf32>
    %32 = vector.shape_cast %31 : vector<1x32x32xf32> to vector<32x32xf32>
    %cst = arith.constant dense<0.000000e+00> : vector<16x32xf32>
    %33 = tpu.matmul %30, %32, %cst {dimension_numbers = #tpu.dot_dimension_numbers<[1], [0], [0], [1], [0, 0, 1, 1], [], []>} : vector<16x32xf32>, vector<32x32xf32>, vector<16x32xf32> -> vector<16x32xf32>
    %34 = vector.broadcast %13 : vector<1x32xf32> to vector<16x32xf32>
    %35 = arith.addf %33, %34 : vector<16x32xf32>
    %c0_21 = arith.constant 0 : index
    %c0_22 = arith.constant 0 : index
    %c0_23 = arith.constant 0 : index
    %36 = vector.load %arg7[%c0_21, %c0_22, %c0_23] : memref<1x32x32xf32, #tpu.memory_space<vmem>>, vector<1x32x32xf32>
    %37 = vector.shape_cast %36 : vector<1x32x32xf32> to vector<32x32xf32>
    %cst_24 = arith.constant dense<0.000000e+00> : vector<16x32xf32>
    %38 = tpu.matmul %30, %37, %cst_24 {dimension_numbers = #tpu.dot_dimension_numbers<[1], [0], [0], [1], [0, 0, 1, 1], [], []>} : vector<16x32xf32>, vector<32x32xf32>, vector<16x32xf32> -> vector<16x32xf32>
    %39 = vector.broadcast %14 : vector<1x32xf32> to vector<16x32xf32>
    %40 = arith.addf %38, %39 : vector<16x32xf32>
    %c0_25 = arith.constant 0 : index
    %c0_26 = arith.constant 0 : index
    %c0_27 = arith.constant 0 : index
    %41 = vector.load %arg8[%c0_25, %c0_26, %c0_27] : memref<1x32x32xf32, #tpu.memory_space<vmem>>, vector<1x32x32xf32>
    %42 = vector.shape_cast %41 : vector<1x32x32xf32> to vector<32x32xf32>
    %cst_28 = arith.constant dense<0.000000e+00> : vector<16x32xf32>
    %43 = tpu.matmul %4, %42, %cst_28 {dimension_numbers = #tpu.dot_dimension_numbers<[1], [0], [0], [1], [0, 0, 1, 1], [], []>} : vector<16x32xf32>, vector<32x32xf32>, vector<16x32xf32> -> vector<16x32xf32>
    %44 = vector.broadcast %15 : vector<1x32xf32> to vector<16x32xf32>
    %45 = arith.addf %43, %44 : vector<16x32xf32>
    %46 = vector.extract_strided_slice %35 {offsets = [0, 0], sizes = [8, 32], strides = [1, 1]} : vector<16x32xf32> to vector<8x32xf32>
    %cst_29 = arith.constant 0.353553385 : f32
    %47 = vector.broadcast %cst_29 : f32 to vector<8x32xf32>
    %48 = arith.mulf %46, %47 : vector<8x32xf32>
    %49 = vector.extract_strided_slice %40 {offsets = [0, 0], sizes = [8, 32], strides = [1, 1]} : vector<16x32xf32> to vector<8x32xf32>
    %50 = vector.extract_strided_slice %45 {offsets = [0, 0], sizes = [8, 32], strides = [1, 1]} : vector<16x32xf32> to vector<8x32xf32>
    %51 = vector.extract_strided_slice %48 {offsets = [0, 0], sizes = [8, 8], strides = [1, 1]} : vector<8x32xf32> to vector<8x8xf32>
    %52 = vector.extract_strided_slice %49 {offsets = [0, 0], sizes = [8, 8], strides = [1, 1]} : vector<8x32xf32> to vector<8x8xf32>
    %cst_30 = arith.constant dense<0.000000e+00> : vector<8x8xf32>
    %53 = tpu.matmul %51, %52, %cst_30 {dimension_numbers = #tpu.dot_dimension_numbers<[1], [1], [0], [0], [0, 0, 1, 0], [], []>} : vector<8x8xf32>, vector<8x8xf32>, vector<8x8xf32> -> vector<8x8xf32>
    %cst_31 = arith.constant dense<0xFF800000> : vector<8xf32>
    %54 = vector.multi_reduction <maximumf>, %53, %cst_31 [1] : vector<8x8xf32> to vector<8xf32>
    %55 = vector.shape_cast %54 : vector<8xf32> to vector<8x1xf32>
    %56 = vector.broadcast %55 : vector<8x1xf32> to vector<8x8xf32>
    %57 = arith.subf %53, %56 : vector<8x8xf32>
    %58 = math.exp %57 : vector<8x8xf32>
    %cst_32 = arith.constant dense<0.000000e+00> : vector<8xf32>
    %59 = vector.multi_reduction <add>, %58, %cst_32 [1] : vector<8x8xf32> to vector<8xf32>
    %60 = vector.shape_cast %59 : vector<8xf32> to vector<8x1xf32>
    %61 = vector.broadcast %60 : vector<8x1xf32> to vector<8x8xf32>
    %62 = arith.divf %58, %61 : vector<8x8xf32>
    %63 = vector.extract_strided_slice %50 {offsets = [0, 0], sizes = [8, 8], strides = [1, 1]} : vector<8x32xf32> to vector<8x8xf32>
    %cst_33 = arith.constant dense<0.000000e+00> : vector<8x8xf32>
    %64 = tpu.matmul %62, %63, %cst_33 {dimension_numbers = #tpu.dot_dimension_numbers<[1], [0], [0], [1], [0, 0, 1, 1], [], []>} : vector<8x8xf32>, vector<8x8xf32>, vector<8x8xf32> -> vector<8x8xf32>
    %65 = vector.extract_strided_slice %48 {offsets = [0, 8], sizes = [8, 8], strides = [1, 1]} : vector<8x32xf32> to vector<8x8xf32>
    %66 = vector.extract_strided_slice %49 {offsets = [0, 8], sizes = [8, 8], strides = [1, 1]} : vector<8x32xf32> to vector<8x8xf32>
    %cst_34 = arith.constant dense<0.000000e+00> : vector<8x8xf32>
    %67 = tpu.matmul %65, %66, %cst_34 {dimension_numbers = #tpu.dot_dimension_numbers<[1], [1], [0], [0], [0, 0, 1, 0], [], []>} : vector<8x8xf32>, vector<8x8xf32>, vector<8x8xf32> -> vector<8x8xf32>
    %cst_35 = arith.constant dense<0xFF800000> : vector<8xf32>
    %68 = vector.multi_reduction <maximumf>, %67, %cst_35 [1] : vector<8x8xf32> to vector<8xf32>
    %69 = vector.shape_cast %68 : vector<8xf32> to vector<8x1xf32>
    %70 = vector.broadcast %69 : vector<8x1xf32> to vector<8x8xf32>
    %71 = arith.subf %67, %70 : vector<8x8xf32>
    %72 = math.exp %71 : vector<8x8xf32>
    %cst_36 = arith.constant dense<0.000000e+00> : vector<8xf32>
    %73 = vector.multi_reduction <add>, %72, %cst_36 [1] : vector<8x8xf32> to vector<8xf32>
    %74 = vector.shape_cast %73 : vector<8xf32> to vector<8x1xf32>
    %75 = vector.broadcast %74 : vector<8x1xf32> to vector<8x8xf32>
    %76 = arith.divf %72, %75 : vector<8x8xf32>
    %77 = vector.extract_strided_slice %50 {offsets = [0, 8], sizes = [8, 8], strides = [1, 1]} : vector<8x32xf32> to vector<8x8xf32>
    %cst_37 = arith.constant dense<0.000000e+00> : vector<8x8xf32>
    %78 = tpu.matmul %76, %77, %cst_37 {dimension_numbers = #tpu.dot_dimension_numbers<[1], [0], [0], [1], [0, 0, 1, 1], [], []>} : vector<8x8xf32>, vector<8x8xf32>, vector<8x8xf32> -> vector<8x8xf32>
    %79 = vector.extract_strided_slice %48 {offsets = [0, 16], sizes = [8, 8], strides = [1, 1]} : vector<8x32xf32> to vector<8x8xf32>
    %80 = vector.extract_strided_slice %49 {offsets = [0, 16], sizes = [8, 8], strides = [1, 1]} : vector<8x32xf32> to vector<8x8xf32>
    %cst_38 = arith.constant dense<0.000000e+00> : vector<8x8xf32>
    %81 = tpu.matmul %79, %80, %cst_38 {dimension_numbers = #tpu.dot_dimension_numbers<[1], [1], [0], [0], [0, 0, 1, 0], [], []>} : vector<8x8xf32>, vector<8x8xf32>, vector<8x8xf32> -> vector<8x8xf32>
    %cst_39 = arith.constant dense<0xFF800000> : vector<8xf32>
    %82 = vector.multi_reduction <maximumf>, %81, %cst_39 [1] : vector<8x8xf32> to vector<8xf32>
    %83 = vector.shape_cast %82 : vector<8xf32> to vector<8x1xf32>
    %84 = vector.broadcast %83 : vector<8x1xf32> to vector<8x8xf32>
    %85 = arith.subf %81, %84 : vector<8x8xf32>
    %86 = math.exp %85 : vector<8x8xf32>
    %cst_40 = arith.constant dense<0.000000e+00> : vector<8xf32>
    %87 = vector.multi_reduction <add>, %86, %cst_40 [1] : vector<8x8xf32> to vector<8xf32>
    %88 = vector.shape_cast %87 : vector<8xf32> to vector<8x1xf32>
    %89 = vector.broadcast %88 : vector<8x1xf32> to vector<8x8xf32>
    %90 = arith.divf %86, %89 : vector<8x8xf32>
    %91 = vector.extract_strided_slice %50 {offsets = [0, 16], sizes = [8, 8], strides = [1, 1]} : vector<8x32xf32> to vector<8x8xf32>
    %cst_41 = arith.constant dense<0.000000e+00> : vector<8x8xf32>
    %92 = tpu.matmul %90, %91, %cst_41 {dimension_numbers = #tpu.dot_dimension_numbers<[1], [0], [0], [1], [0, 0, 1, 1], [], []>} : vector<8x8xf32>, vector<8x8xf32>, vector<8x8xf32> -> vector<8x8xf32>
    %93 = vector.extract_strided_slice %48 {offsets = [0, 24], sizes = [8, 8], strides = [1, 1]} : vector<8x32xf32> to vector<8x8xf32>
    %94 = vector.extract_strided_slice %49 {offsets = [0, 24], sizes = [8, 8], strides = [1, 1]} : vector<8x32xf32> to vector<8x8xf32>
    %cst_42 = arith.constant dense<0.000000e+00> : vector<8x8xf32>
    %95 = tpu.matmul %93, %94, %cst_42 {dimension_numbers = #tpu.dot_dimension_numbers<[1], [1], [0], [0], [0, 0, 1, 0], [], []>} : vector<8x8xf32>, vector<8x8xf32>, vector<8x8xf32> -> vector<8x8xf32>
    %cst_43 = arith.constant dense<0xFF800000> : vector<8xf32>
    %96 = vector.multi_reduction <maximumf>, %95, %cst_43 [1] : vector<8x8xf32> to vector<8xf32>
    %97 = vector.shape_cast %96 : vector<8xf32> to vector<8x1xf32>
    %98 = vector.broadcast %97 : vector<8x1xf32> to vector<8x8xf32>
    %99 = arith.subf %95, %98 : vector<8x8xf32>
    %100 = math.exp %99 : vector<8x8xf32>
    %cst_44 = arith.constant dense<0.000000e+00> : vector<8xf32>
    %101 = vector.multi_reduction <add>, %100, %cst_44 [1] : vector<8x8xf32> to vector<8xf32>
    %102 = vector.shape_cast %101 : vector<8xf32> to vector<8x1xf32>
    %103 = vector.broadcast %102 : vector<8x1xf32> to vector<8x8xf32>
    %104 = arith.divf %100, %103 : vector<8x8xf32>
    %105 = vector.extract_strided_slice %50 {offsets = [0, 24], sizes = [8, 8], strides = [1, 1]} : vector<8x32xf32> to vector<8x8xf32>
    %cst_45 = arith.constant dense<0.000000e+00> : vector<8x8xf32>
    %106 = tpu.matmul %104, %105, %cst_45 {dimension_numbers = #tpu.dot_dimension_numbers<[1], [0], [0], [1], [0, 0, 1, 1], [], []>} : vector<8x8xf32>, vector<8x8xf32>, vector<8x8xf32> -> vector<8x8xf32>
    %107 = tpu.concatenate %64, %78, %92, %106 in 1 : vector<8x8xf32>, vector<8x8xf32>, vector<8x8xf32>, vector<8x8xf32> -> vector<8x32xf32>
    %108 = vector.extract_strided_slice %35 {offsets = [8, 0], sizes = [8, 32], strides = [1, 1]} : vector<16x32xf32> to vector<8x32xf32>
    %cst_46 = arith.constant 0.353553385 : f32
    %109 = vector.broadcast %cst_46 : f32 to vector<8x32xf32>
    %110 = arith.mulf %108, %109 : vector<8x32xf32>
    %111 = vector.extract_strided_slice %40 {offsets = [8, 0], sizes = [8, 32], strides = [1, 1]} : vector<16x32xf32> to vector<8x32xf32>
    %112 = vector.extract_strided_slice %45 {offsets = [8, 0], sizes = [8, 32], strides = [1, 1]} : vector<16x32xf32> to vector<8x32xf32>
    %113 = vector.extract_strided_slice %110 {offsets = [0, 0], sizes = [8, 8], strides = [1, 1]} : vector<8x32xf32> to vector<8x8xf32>
    %114 = vector.extract_strided_slice %111 {offsets = [0, 0], sizes = [8, 8], strides = [1, 1]} : vector<8x32xf32> to vector<8x8xf32>
    %cst_47 = arith.constant dense<0.000000e+00> : vector<8x8xf32>
    %115 = tpu.matmul %113, %114, %cst_47 {dimension_numbers = #tpu.dot_dimension_numbers<[1], [1], [0], [0], [0, 0, 1, 0], [], []>} : vector<8x8xf32>, vector<8x8xf32>, vector<8x8xf32> -> vector<8x8xf32>
    %cst_48 = arith.constant dense<0xFF800000> : vector<8xf32>
    %116 = vector.multi_reduction <maximumf>, %115, %cst_48 [1] : vector<8x8xf32> to vector<8xf32>
    %117 = vector.shape_cast %116 : vector<8xf32> to vector<8x1xf32>
    %118 = vector.broadcast %117 : vector<8x1xf32> to vector<8x8xf32>
    %119 = arith.subf %115, %118 : vector<8x8xf32>
    %120 = math.exp %119 : vector<8x8xf32>
    %cst_49 = arith.constant dense<0.000000e+00> : vector<8xf32>
    %121 = vector.multi_reduction <add>, %120, %cst_49 [1] : vector<8x8xf32> to vector<8xf32>
    %122 = vector.shape_cast %121 : vector<8xf32> to vector<8x1xf32>
    %123 = vector.broadcast %122 : vector<8x1xf32> to vector<8x8xf32>
    %124 = arith.divf %120, %123 : vector<8x8xf32>
    %125 = vector.extract_strided_slice %112 {offsets = [0, 0], sizes = [8, 8], strides = [1, 1]} : vector<8x32xf32> to vector<8x8xf32>
    %cst_50 = arith.constant dense<0.000000e+00> : vector<8x8xf32>
    %126 = tpu.matmul %124, %125, %cst_50 {dimension_numbers = #tpu.dot_dimension_numbers<[1], [0], [0], [1], [0, 0, 1, 1], [], []>} : vector<8x8xf32>, vector<8x8xf32>, vector<8x8xf32> -> vector<8x8xf32>
    %127 = vector.extract_strided_slice %110 {offsets = [0, 8], sizes = [8, 8], strides = [1, 1]} : vector<8x32xf32> to vector<8x8xf32>
    %128 = vector.extract_strided_slice %111 {offsets = [0, 8], sizes = [8, 8], strides = [1, 1]} : vector<8x32xf32> to vector<8x8xf32>
    %cst_51 = arith.constant dense<0.000000e+00> : vector<8x8xf32>
    %129 = tpu.matmul %127, %128, %cst_51 {dimension_numbers = #tpu.dot_dimension_numbers<[1], [1], [0], [0], [0, 0, 1, 0], [], []>} : vector<8x8xf32>, vector<8x8xf32>, vector<8x8xf32> -> vector<8x8xf32>
    %cst_52 = arith.constant dense<0xFF800000> : vector<8xf32>
    %130 = vector.multi_reduction <maximumf>, %129, %cst_52 [1] : vector<8x8xf32> to vector<8xf32>
    %131 = vector.shape_cast %130 : vector<8xf32> to vector<8x1xf32>
    %132 = vector.broadcast %131 : vector<8x1xf32> to vector<8x8xf32>
    %133 = arith.subf %129, %132 : vector<8x8xf32>
    %134 = math.exp %133 : vector<8x8xf32>
    %cst_53 = arith.constant dense<0.000000e+00> : vector<8xf32>
    %135 = vector.multi_reduction <add>, %134, %cst_53 [1] : vector<8x8xf32> to vector<8xf32>
    %136 = vector.shape_cast %135 : vector<8xf32> to vector<8x1xf32>
    %137 = vector.broadcast %136 : vector<8x1xf32> to vector<8x8xf32>
    %138 = arith.divf %134, %137 : vector<8x8xf32>
    %139 = vector.extract_strided_slice %112 {offsets = [0, 8], sizes = [8, 8], strides = [1, 1]} : vector<8x32xf32> to vector<8x8xf32>
    %cst_54 = arith.constant dense<0.000000e+00> : vector<8x8xf32>
    %140 = tpu.matmul %138, %139, %cst_54 {dimension_numbers = #tpu.dot_dimension_numbers<[1], [0], [0], [1], [0, 0, 1, 1], [], []>} : vector<8x8xf32>, vector<8x8xf32>, vector<8x8xf32> -> vector<8x8xf32>
    %141 = vector.extract_strided_slice %110 {offsets = [0, 16], sizes = [8, 8], strides = [1, 1]} : vector<8x32xf32> to vector<8x8xf32>
    %142 = vector.extract_strided_slice %111 {offsets = [0, 16], sizes = [8, 8], strides = [1, 1]} : vector<8x32xf32> to vector<8x8xf32>
    %cst_55 = arith.constant dense<0.000000e+00> : vector<8x8xf32>
    %143 = tpu.matmul %141, %142, %cst_55 {dimension_numbers = #tpu.dot_dimension_numbers<[1], [1], [0], [0], [0, 0, 1, 0], [], []>} : vector<8x8xf32>, vector<8x8xf32>, vector<8x8xf32> -> vector<8x8xf32>
    %cst_56 = arith.constant dense<0xFF800000> : vector<8xf32>
    %144 = vector.multi_reduction <maximumf>, %143, %cst_56 [1] : vector<8x8xf32> to vector<8xf32>
    %145 = vector.shape_cast %144 : vector<8xf32> to vector<8x1xf32>
    %146 = vector.broadcast %145 : vector<8x1xf32> to vector<8x8xf32>
    %147 = arith.subf %143, %146 : vector<8x8xf32>
    %148 = math.exp %147 : vector<8x8xf32>
    %cst_57 = arith.constant dense<0.000000e+00> : vector<8xf32>
    %149 = vector.multi_reduction <add>, %148, %cst_57 [1] : vector<8x8xf32> to vector<8xf32>
    %150 = vector.shape_cast %149 : vector<8xf32> to vector<8x1xf32>
    %151 = vector.broadcast %150 : vector<8x1xf32> to vector<8x8xf32>
    %152 = arith.divf %148, %151 : vector<8x8xf32>
    %153 = vector.extract_strided_slice %112 {offsets = [0, 16], sizes = [8, 8], strides = [1, 1]} : vector<8x32xf32> to vector<8x8xf32>
    %cst_58 = arith.constant dense<0.000000e+00> : vector<8x8xf32>
    %154 = tpu.matmul %152, %153, %cst_58 {dimension_numbers = #tpu.dot_dimension_numbers<[1], [0], [0], [1], [0, 0, 1, 1], [], []>} : vector<8x8xf32>, vector<8x8xf32>, vector<8x8xf32> -> vector<8x8xf32>
    %155 = vector.extract_strided_slice %110 {offsets = [0, 24], sizes = [8, 8], strides = [1, 1]} : vector<8x32xf32> to vector<8x8xf32>
    %156 = vector.extract_strided_slice %111 {offsets = [0, 24], sizes = [8, 8], strides = [1, 1]} : vector<8x32xf32> to vector<8x8xf32>
    %cst_59 = arith.constant dense<0.000000e+00> : vector<8x8xf32>
    %157 = tpu.matmul %155, %156, %cst_59 {dimension_numbers = #tpu.dot_dimension_numbers<[1], [1], [0], [0], [0, 0, 1, 0], [], []>} : vector<8x8xf32>, vector<8x8xf32>, vector<8x8xf32> -> vector<8x8xf32>
    %cst_60 = arith.constant dense<0xFF800000> : vector<8xf32>
    %158 = vector.multi_reduction <maximumf>, %157, %cst_60 [1] : vector<8x8xf32> to vector<8xf32>
    %159 = vector.shape_cast %158 : vector<8xf32> to vector<8x1xf32>
    %160 = vector.broadcast %159 : vector<8x1xf32> to vector<8x8xf32>
    %161 = arith.subf %157, %160 : vector<8x8xf32>
    %162 = math.exp %161 : vector<8x8xf32>
    %cst_61 = arith.constant dense<0.000000e+00> : vector<8xf32>
    %163 = vector.multi_reduction <add>, %162, %cst_61 [1] : vector<8x8xf32> to vector<8xf32>
    %164 = vector.shape_cast %163 : vector<8xf32> to vector<8x1xf32>
    %165 = vector.broadcast %164 : vector<8x1xf32> to vector<8x8xf32>
    %166 = arith.divf %162, %165 : vector<8x8xf32>
    %167 = vector.extract_strided_slice %112 {offsets = [0, 24], sizes = [8, 8], strides = [1, 1]} : vector<8x32xf32> to vector<8x8xf32>
    %cst_62 = arith.constant dense<0.000000e+00> : vector<8x8xf32>
    %168 = tpu.matmul %166, %167, %cst_62 {dimension_numbers = #tpu.dot_dimension_numbers<[1], [0], [0], [1], [0, 0, 1, 1], [], []>} : vector<8x8xf32>, vector<8x8xf32>, vector<8x8xf32> -> vector<8x8xf32>
    %169 = tpu.concatenate %126, %140, %154, %168 in 1 : vector<8x8xf32>, vector<8x8xf32>, vector<8x8xf32>, vector<8x8xf32> -> vector<8x32xf32>
    %170 = tpu.concatenate %107, %169 in 0 : vector<8x32xf32>, vector<8x32xf32> -> vector<16x32xf32>
    %c0_63 = arith.constant 0 : index
    %c0_64 = arith.constant 0 : index
    %c0_65 = arith.constant 0 : index
    %171 = vector.load %arg9[%c0_63, %c0_64, %c0_65] : memref<1x32x32xf32, #tpu.memory_space<vmem>>, vector<1x32x32xf32>
    %172 = vector.shape_cast %171 : vector<1x32x32xf32> to vector<32x32xf32>
    %cst_66 = arith.constant dense<0.000000e+00> : vector<16x32xf32>
    %173 = tpu.matmul %170, %172, %cst_66 {dimension_numbers = #tpu.dot_dimension_numbers<[1], [0], [0], [1], [0, 0, 1, 1], [], []>} : vector<16x32xf32>, vector<32x32xf32>, vector<16x32xf32> -> vector<16x32xf32>
    %174 = vector.broadcast %16 : vector<1x32xf32> to vector<16x32xf32>
    %175 = arith.addf %173, %174 : vector<16x32xf32>
    %176 = arith.addf %4, %175 : vector<16x32xf32>
    %cst_67 = arith.constant dense<0.000000e+00> : vector<16xf32>
    %177 = vector.multi_reduction <add>, %176, %cst_67 [1] : vector<16x32xf32> to vector<16xf32>
    %178 = vector.shape_cast %177 : vector<16xf32> to vector<16x1xf32>
    %179 = arith.mulf %176, %176 : vector<16x32xf32>
    %cst_68 = arith.constant dense<0.000000e+00> : vector<16xf32>
    %180 = vector.multi_reduction <add>, %179, %cst_68 [1] : vector<16x32xf32> to vector<16xf32>
    %181 = vector.shape_cast %180 : vector<16xf32> to vector<16x1xf32>
    %cst_69 = arith.constant 3.125000e-02 : f32
    %182 = vector.broadcast %cst_69 : f32 to vector<16x1xf32>
    %183 = arith.mulf %178, %182 : vector<16x1xf32>
    %cst_70 = arith.constant 3.125000e-02 : f32
    %184 = vector.broadcast %cst_70 : f32 to vector<16x1xf32>
    %185 = arith.mulf %181, %184 : vector<16x1xf32>
    %186 = arith.mulf %183, %183 : vector<16x1xf32>
    %187 = arith.subf %185, %186 : vector<16x1xf32>
    %188 = vector.broadcast %183 : vector<16x1xf32> to vector<16x32xf32>
    %189 = arith.subf %176, %188 : vector<16x32xf32>
    %cst_71 = arith.constant 9.99999974E-6 : f32
    %190 = vector.broadcast %cst_71 : f32 to vector<16x1xf32>
    %191 = arith.addf %187, %190 : vector<16x1xf32>
    %192 = math.rsqrt %191 : vector<16x1xf32>
    %193 = vector.broadcast %192 : vector<16x1xf32> to vector<16x32xf32>
    %194 = arith.mulf %189, %193 : vector<16x32xf32>
    %195 = vector.broadcast %22 : vector<1x32xf32> to vector<16x32xf32>
    %196 = arith.mulf %194, %195 : vector<16x32xf32>
    %197 = vector.broadcast %23 : vector<1x32xf32> to vector<16x32xf32>
    %198 = arith.addf %196, %197 : vector<16x32xf32>
    %199 = arith.addf %198, %6 : vector<16x32xf32>
    %c0_72 = arith.constant 0 : index
    %c0_73 = arith.constant 0 : index
    %c0_74 = arith.constant 0 : index
    %200 = vector.load %arg10[%c0_72, %c0_73, %c0_74] : memref<1x32x32xf32, #tpu.memory_space<vmem>>, vector<1x32x32xf32>
    %201 = vector.shape_cast %200 : vector<1x32x32xf32> to vector<32x32xf32>
    %cst_75 = arith.constant dense<0.000000e+00> : vector<16x32xf32>
    %202 = tpu.matmul %199, %201, %cst_75 {dimension_numbers = #tpu.dot_dimension_numbers<[1], [0], [0], [1], [0, 0, 1, 1], [], []>} : vector<16x32xf32>, vector<32x32xf32>, vector<16x32xf32> -> vector<16x32xf32>
    %203 = vector.broadcast %17 : vector<1x32xf32> to vector<16x32xf32>
    %204 = arith.addf %202, %203 : vector<16x32xf32>
    %205 = arith.addf %8, %10 : vector<32x32xf32>
    %c0_76 = arith.constant 0 : index
    %c0_77 = arith.constant 0 : index
    %c0_78 = arith.constant 0 : index
    %206 = vector.load %arg11[%c0_76, %c0_77, %c0_78] : memref<1x32x32xf32, #tpu.memory_space<vmem>>, vector<1x32x32xf32>
    %207 = vector.shape_cast %206 : vector<1x32x32xf32> to vector<32x32xf32>
    %cst_79 = arith.constant dense<0.000000e+00> : vector<32x32xf32>
    %208 = tpu.matmul %205, %207, %cst_79 {dimension_numbers = #tpu.dot_dimension_numbers<[1], [0], [0], [1], [0, 0, 1, 1], [], []>} : vector<32x32xf32>, vector<32x32xf32>, vector<32x32xf32> -> vector<32x32xf32>
    %209 = vector.broadcast %18 : vector<1x32xf32> to vector<32x32xf32>
    %210 = arith.addf %208, %209 : vector<32x32xf32>
    %c0_80 = arith.constant 0 : index
    %c0_81 = arith.constant 0 : index
    %c0_82 = arith.constant 0 : index
    %211 = vector.load %arg12[%c0_80, %c0_81, %c0_82] : memref<1x32x32xf32, #tpu.memory_space<vmem>>, vector<1x32x32xf32>
    %212 = vector.shape_cast %211 : vector<1x32x32xf32> to vector<32x32xf32>
    %cst_83 = arith.constant dense<0.000000e+00> : vector<32x32xf32>
    %213 = tpu.matmul %8, %212, %cst_83 {dimension_numbers = #tpu.dot_dimension_numbers<[1], [0], [0], [1], [0, 0, 1, 1], [], []>} : vector<32x32xf32>, vector<32x32xf32>, vector<32x32xf32> -> vector<32x32xf32>
    %214 = vector.broadcast %19 : vector<1x32xf32> to vector<32x32xf32>
    %215 = arith.addf %213, %214 : vector<32x32xf32>
    %216 = vector.extract_strided_slice %204 {offsets = [0, 0], sizes = [8, 32], strides = [1, 1]} : vector<16x32xf32> to vector<8x32xf32>
    %cst_84 = arith.constant 0.353553385 : f32
    %217 = vector.broadcast %cst_84 : f32 to vector<8x32xf32>
    %218 = arith.mulf %216, %217 : vector<8x32xf32>
    %219 = vector.extract_strided_slice %210 {offsets = [0, 0], sizes = [16, 32], strides = [1, 1]} : vector<32x32xf32> to vector<16x32xf32>
    %220 = vector.extract_strided_slice %215 {offsets = [0, 0], sizes = [16, 32], strides = [1, 1]} : vector<32x32xf32> to vector<16x32xf32>
    %221 = vector.extract_strided_slice %218 {offsets = [0, 0], sizes = [8, 8], strides = [1, 1]} : vector<8x32xf32> to vector<8x8xf32>
    %222 = vector.extract_strided_slice %219 {offsets = [0, 0], sizes = [16, 8], strides = [1, 1]} : vector<16x32xf32> to vector<16x8xf32>
    %cst_85 = arith.constant dense<0.000000e+00> : vector<8x16xf32>
    %223 = tpu.matmul %221, %222, %cst_85 {dimension_numbers = #tpu.dot_dimension_numbers<[1], [1], [0], [0], [0, 0, 1, 0], [], []>} : vector<8x8xf32>, vector<16x8xf32>, vector<8x16xf32> -> vector<8x16xf32>
    %cst_86 = arith.constant dense<0xFF800000> : vector<8xf32>
    %224 = vector.multi_reduction <maximumf>, %223, %cst_86 [1] : vector<8x16xf32> to vector<8xf32>
    %225 = vector.shape_cast %224 : vector<8xf32> to vector<8x1xf32>
    %226 = vector.broadcast %225 : vector<8x1xf32> to vector<8x16xf32>
    %227 = arith.subf %223, %226 : vector<8x16xf32>
    %228 = math.exp %227 : vector<8x16xf32>
    %cst_87 = arith.constant dense<0.000000e+00> : vector<8xf32>
    %229 = vector.multi_reduction <add>, %228, %cst_87 [1] : vector<8x16xf32> to vector<8xf32>
    %230 = vector.shape_cast %229 : vector<8xf32> to vector<8x1xf32>
    %231 = vector.broadcast %230 : vector<8x1xf32> to vector<8x16xf32>
    %232 = arith.divf %228, %231 : vector<8x16xf32>
    %233 = vector.extract_strided_slice %220 {offsets = [0, 0], sizes = [16, 8], strides = [1, 1]} : vector<16x32xf32> to vector<16x8xf32>
    %cst_88 = arith.constant dense<0.000000e+00> : vector<8x8xf32>
    %234 = tpu.matmul %232, %233, %cst_88 {dimension_numbers = #tpu.dot_dimension_numbers<[1], [0], [0], [1], [0, 0, 1, 1], [], []>} : vector<8x16xf32>, vector<16x8xf32>, vector<8x8xf32> -> vector<8x8xf32>
    %235 = vector.extract_strided_slice %218 {offsets = [0, 8], sizes = [8, 8], strides = [1, 1]} : vector<8x32xf32> to vector<8x8xf32>
    %236 = vector.extract_strided_slice %219 {offsets = [0, 8], sizes = [16, 8], strides = [1, 1]} : vector<16x32xf32> to vector<16x8xf32>
    %cst_89 = arith.constant dense<0.000000e+00> : vector<8x16xf32>
    %237 = tpu.matmul %235, %236, %cst_89 {dimension_numbers = #tpu.dot_dimension_numbers<[1], [1], [0], [0], [0, 0, 1, 0], [], []>} : vector<8x8xf32>, vector<16x8xf32>, vector<8x16xf32> -> vector<8x16xf32>
    %cst_90 = arith.constant dense<0xFF800000> : vector<8xf32>
    %238 = vector.multi_reduction <maximumf>, %237, %cst_90 [1] : vector<8x16xf32> to vector<8xf32>
    %239 = vector.shape_cast %238 : vector<8xf32> to vector<8x1xf32>
    %240 = vector.broadcast %239 : vector<8x1xf32> to vector<8x16xf32>
    %241 = arith.subf %237, %240 : vector<8x16xf32>
    %242 = math.exp %241 : vector<8x16xf32>
    %cst_91 = arith.constant dense<0.000000e+00> : vector<8xf32>
    %243 = vector.multi_reduction <add>, %242, %cst_91 [1] : vector<8x16xf32> to vector<8xf32>
    %244 = vector.shape_cast %243 : vector<8xf32> to vector<8x1xf32>
    %245 = vector.broadcast %244 : vector<8x1xf32> to vector<8x16xf32>
    %246 = arith.divf %242, %245 : vector<8x16xf32>
    %247 = arith.addf %232, %246 : vector<8x16xf32>
    %248 = vector.extract_strided_slice %220 {offsets = [0, 8], sizes = [16, 8], strides = [1, 1]} : vector<16x32xf32> to vector<16x8xf32>
    %cst_92 = arith.constant dense<0.000000e+00> : vector<8x8xf32>
    %249 = tpu.matmul %246, %248, %cst_92 {dimension_numbers = #tpu.dot_dimension_numbers<[1], [0], [0], [1], [0, 0, 1, 1], [], []>} : vector<8x16xf32>, vector<16x8xf32>, vector<8x8xf32> -> vector<8x8xf32>
    %250 = vector.extract_strided_slice %218 {offsets = [0, 16], sizes = [8, 8], strides = [1, 1]} : vector<8x32xf32> to vector<8x8xf32>
    %251 = vector.extract_strided_slice %219 {offsets = [0, 16], sizes = [16, 8], strides = [1, 1]} : vector<16x32xf32> to vector<16x8xf32>
    %cst_93 = arith.constant dense<0.000000e+00> : vector<8x16xf32>
    %252 = tpu.matmul %250, %251, %cst_93 {dimension_numbers = #tpu.dot_dimension_numbers<[1], [1], [0], [0], [0, 0, 1, 0], [], []>} : vector<8x8xf32>, vector<16x8xf32>, vector<8x16xf32> -> vector<8x16xf32>
    %cst_94 = arith.constant dense<0xFF800000> : vector<8xf32>
    %253 = vector.multi_reduction <maximumf>, %252, %cst_94 [1] : vector<8x16xf32> to vector<8xf32>
    %254 = vector.shape_cast %253 : vector<8xf32> to vector<8x1xf32>
    %255 = vector.broadcast %254 : vector<8x1xf32> to vector<8x16xf32>
    %256 = arith.subf %252, %255 : vector<8x16xf32>
    %257 = math.exp %256 : vector<8x16xf32>
    %cst_95 = arith.constant dense<0.000000e+00> : vector<8xf32>
    %258 = vector.multi_reduction <add>, %257, %cst_95 [1] : vector<8x16xf32> to vector<8xf32>
    %259 = vector.shape_cast %258 : vector<8xf32> to vector<8x1xf32>
    %260 = vector.broadcast %259 : vector<8x1xf32> to vector<8x16xf32>
    %261 = arith.divf %257, %260 : vector<8x16xf32>
    %262 = arith.addf %247, %261 : vector<8x16xf32>
    %263 = vector.extract_strided_slice %220 {offsets = [0, 16], sizes = [16, 8], strides = [1, 1]} : vector<16x32xf32> to vector<16x8xf32>
    %cst_96 = arith.constant dense<0.000000e+00> : vector<8x8xf32>
    %264 = tpu.matmul %261, %263, %cst_96 {dimension_numbers = #tpu.dot_dimension_numbers<[1], [0], [0], [1], [0, 0, 1, 1], [], []>} : vector<8x16xf32>, vector<16x8xf32>, vector<8x8xf32> -> vector<8x8xf32>
    %265 = vector.extract_strided_slice %218 {offsets = [0, 24], sizes = [8, 8], strides = [1, 1]} : vector<8x32xf32> to vector<8x8xf32>
    %266 = vector.extract_strided_slice %219 {offsets = [0, 24], sizes = [16, 8], strides = [1, 1]} : vector<16x32xf32> to vector<16x8xf32>
    %cst_97 = arith.constant dense<0.000000e+00> : vector<8x16xf32>
    %267 = tpu.matmul %265, %266, %cst_97 {dimension_numbers = #tpu.dot_dimension_numbers<[1], [1], [0], [0], [0, 0, 1, 0], [], []>} : vector<8x8xf32>, vector<16x8xf32>, vector<8x16xf32> -> vector<8x16xf32>
    %cst_98 = arith.constant dense<0xFF800000> : vector<8xf32>
    %268 = vector.multi_reduction <maximumf>, %267, %cst_98 [1] : vector<8x16xf32> to vector<8xf32>
    %269 = vector.shape_cast %268 : vector<8xf32> to vector<8x1xf32>
    %270 = vector.broadcast %269 : vector<8x1xf32> to vector<8x16xf32>
    %271 = arith.subf %267, %270 : vector<8x16xf32>
    %272 = math.exp %271 : vector<8x16xf32>
    %cst_99 = arith.constant dense<0.000000e+00> : vector<8xf32>
    %273 = vector.multi_reduction <add>, %272, %cst_99 [1] : vector<8x16xf32> to vector<8xf32>
    %274 = vector.shape_cast %273 : vector<8xf32> to vector<8x1xf32>
    %275 = vector.broadcast %274 : vector<8x1xf32> to vector<8x16xf32>
    %276 = arith.divf %272, %275 : vector<8x16xf32>
    %277 = arith.addf %262, %276 : vector<8x16xf32>
    %278 = vector.extract_strided_slice %220 {offsets = [0, 24], sizes = [16, 8], strides = [1, 1]} : vector<16x32xf32> to vector<16x8xf32>
    %cst_100 = arith.constant dense<0.000000e+00> : vector<8x8xf32>
    %279 = tpu.matmul %276, %278, %cst_100 {dimension_numbers = #tpu.dot_dimension_numbers<[1], [0], [0], [1], [0, 0, 1, 1], [], []>} : vector<8x16xf32>, vector<16x8xf32>, vector<8x8xf32> -> vector<8x8xf32>
    %280 = tpu.concatenate %234, %249, %264, %279 in 1 : vector<8x8xf32>, vector<8x8xf32>, vector<8x8xf32>, vector<8x8xf32> -> vector<8x32xf32>
    %cst_101 = arith.constant 2.500000e-01 : f32
    %281 = vector.broadcast %cst_101 : f32 to vector<8x16xf32>
    %282 = arith.mulf %277, %281 : vector<8x16xf32>
    %283 = vector.extract_strided_slice %204 {offsets = [8, 0], sizes = [8, 32], strides = [1, 1]} : vector<16x32xf32> to vector<8x32xf32>
    %cst_102 = arith.constant 0.353553385 : f32
    %284 = vector.broadcast %cst_102 : f32 to vector<8x32xf32>
    %285 = arith.mulf %283, %284 : vector<8x32xf32>
    %286 = vector.extract_strided_slice %210 {offsets = [16, 0], sizes = [16, 32], strides = [1, 1]} : vector<32x32xf32> to vector<16x32xf32>
    %287 = vector.extract_strided_slice %215 {offsets = [16, 0], sizes = [16, 32], strides = [1, 1]} : vector<32x32xf32> to vector<16x32xf32>
    %288 = vector.extract_strided_slice %285 {offsets = [0, 0], sizes = [8, 8], strides = [1, 1]} : vector<8x32xf32> to vector<8x8xf32>
    %289 = vector.extract_strided_slice %286 {offsets = [0, 0], sizes = [16, 8], strides = [1, 1]} : vector<16x32xf32> to vector<16x8xf32>
    %cst_103 = arith.constant dense<0.000000e+00> : vector<8x16xf32>
    %290 = tpu.matmul %288, %289, %cst_103 {dimension_numbers = #tpu.dot_dimension_numbers<[1], [1], [0], [0], [0, 0, 1, 0], [], []>} : vector<8x8xf32>, vector<16x8xf32>, vector<8x16xf32> -> vector<8x16xf32>
    %cst_104 = arith.constant dense<0xFF800000> : vector<8xf32>
    %291 = vector.multi_reduction <maximumf>, %290, %cst_104 [1] : vector<8x16xf32> to vector<8xf32>
    %292 = vector.shape_cast %291 : vector<8xf32> to vector<8x1xf32>
    %293 = vector.broadcast %292 : vector<8x1xf32> to vector<8x16xf32>
    %294 = arith.subf %290, %293 : vector<8x16xf32>
    %295 = math.exp %294 : vector<8x16xf32>
    %cst_105 = arith.constant dense<0.000000e+00> : vector<8xf32>
    %296 = vector.multi_reduction <add>, %295, %cst_105 [1] : vector<8x16xf32> to vector<8xf32>
    %297 = vector.shape_cast %296 : vector<8xf32> to vector<8x1xf32>
    %298 = vector.broadcast %297 : vector<8x1xf32> to vector<8x16xf32>
    %299 = arith.divf %295, %298 : vector<8x16xf32>
    %300 = vector.extract_strided_slice %287 {offsets = [0, 0], sizes = [16, 8], strides = [1, 1]} : vector<16x32xf32> to vector<16x8xf32>
    %cst_106 = arith.constant dense<0.000000e+00> : vector<8x8xf32>
    %301 = tpu.matmul %299, %300, %cst_106 {dimension_numbers = #tpu.dot_dimension_numbers<[1], [0], [0], [1], [0, 0, 1, 1], [], []>} : vector<8x16xf32>, vector<16x8xf32>, vector<8x8xf32> -> vector<8x8xf32>
    %302 = vector.extract_strided_slice %285 {offsets = [0, 8], sizes = [8, 8], strides = [1, 1]} : vector<8x32xf32> to vector<8x8xf32>
    %303 = vector.extract_strided_slice %286 {offsets = [0, 8], sizes = [16, 8], strides = [1, 1]} : vector<16x32xf32> to vector<16x8xf32>
    %cst_107 = arith.constant dense<0.000000e+00> : vector<8x16xf32>
    %304 = tpu.matmul %302, %303, %cst_107 {dimension_numbers = #tpu.dot_dimension_numbers<[1], [1], [0], [0], [0, 0, 1, 0], [], []>} : vector<8x8xf32>, vector<16x8xf32>, vector<8x16xf32> -> vector<8x16xf32>
    %cst_108 = arith.constant dense<0xFF800000> : vector<8xf32>
    %305 = vector.multi_reduction <maximumf>, %304, %cst_108 [1] : vector<8x16xf32> to vector<8xf32>
    %306 = vector.shape_cast %305 : vector<8xf32> to vector<8x1xf32>
    %307 = vector.broadcast %306 : vector<8x1xf32> to vector<8x16xf32>
    %308 = arith.subf %304, %307 : vector<8x16xf32>
    %309 = math.exp %308 : vector<8x16xf32>
    %cst_109 = arith.constant dense<0.000000e+00> : vector<8xf32>
    %310 = vector.multi_reduction <add>, %309, %cst_109 [1] : vector<8x16xf32> to vector<8xf32>
    %311 = vector.shape_cast %310 : vector<8xf32> to vector<8x1xf32>
    %312 = vector.broadcast %311 : vector<8x1xf32> to vector<8x16xf32>
    %313 = arith.divf %309, %312 : vector<8x16xf32>
    %314 = arith.addf %299, %313 : vector<8x16xf32>
    %315 = vector.extract_strided_slice %287 {offsets = [0, 8], sizes = [16, 8], strides = [1, 1]} : vector<16x32xf32> to vector<16x8xf32>
    %cst_110 = arith.constant dense<0.000000e+00> : vector<8x8xf32>
    %316 = tpu.matmul %313, %315, %cst_110 {dimension_numbers = #tpu.dot_dimension_numbers<[1], [0], [0], [1], [0, 0, 1, 1], [], []>} : vector<8x16xf32>, vector<16x8xf32>, vector<8x8xf32> -> vector<8x8xf32>
    %317 = vector.extract_strided_slice %285 {offsets = [0, 16], sizes = [8, 8], strides = [1, 1]} : vector<8x32xf32> to vector<8x8xf32>
    %318 = vector.extract_strided_slice %286 {offsets = [0, 16], sizes = [16, 8], strides = [1, 1]} : vector<16x32xf32> to vector<16x8xf32>
    %cst_111 = arith.constant dense<0.000000e+00> : vector<8x16xf32>
    %319 = tpu.matmul %317, %318, %cst_111 {dimension_numbers = #tpu.dot_dimension_numbers<[1], [1], [0], [0], [0, 0, 1, 0], [], []>} : vector<8x8xf32>, vector<16x8xf32>, vector<8x16xf32> -> vector<8x16xf32>
    %cst_112 = arith.constant dense<0xFF800000> : vector<8xf32>
    %320 = vector.multi_reduction <maximumf>, %319, %cst_112 [1] : vector<8x16xf32> to vector<8xf32>
    %321 = vector.shape_cast %320 : vector<8xf32> to vector<8x1xf32>
    %322 = vector.broadcast %321 : vector<8x1xf32> to vector<8x16xf32>
    %323 = arith.subf %319, %322 : vector<8x16xf32>
    %324 = math.exp %323 : vector<8x16xf32>
    %cst_113 = arith.constant dense<0.000000e+00> : vector<8xf32>
    %325 = vector.multi_reduction <add>, %324, %cst_113 [1] : vector<8x16xf32> to vector<8xf32>
    %326 = vector.shape_cast %325 : vector<8xf32> to vector<8x1xf32>
    %327 = vector.broadcast %326 : vector<8x1xf32> to vector<8x16xf32>
    %328 = arith.divf %324, %327 : vector<8x16xf32>
    %329 = arith.addf %314, %328 : vector<8x16xf32>
    %330 = vector.extract_strided_slice %287 {offsets = [0, 16], sizes = [16, 8], strides = [1, 1]} : vector<16x32xf32> to vector<16x8xf32>
    %cst_114 = arith.constant dense<0.000000e+00> : vector<8x8xf32>
    %331 = tpu.matmul %328, %330, %cst_114 {dimension_numbers = #tpu.dot_dimension_numbers<[1], [0], [0], [1], [0, 0, 1, 1], [], []>} : vector<8x16xf32>, vector<16x8xf32>, vector<8x8xf32> -> vector<8x8xf32>
    %332 = vector.extract_strided_slice %285 {offsets = [0, 24], sizes = [8, 8], strides = [1, 1]} : vector<8x32xf32> to vector<8x8xf32>
    %333 = vector.extract_strided_slice %286 {offsets = [0, 24], sizes = [16, 8], strides = [1, 1]} : vector<16x32xf32> to vector<16x8xf32>
    %cst_115 = arith.constant dense<0.000000e+00> : vector<8x16xf32>
    %334 = tpu.matmul %332, %333, %cst_115 {dimension_numbers = #tpu.dot_dimension_numbers<[1], [1], [0], [0], [0, 0, 1, 0], [], []>} : vector<8x8xf32>, vector<16x8xf32>, vector<8x16xf32> -> vector<8x16xf32>
    %cst_116 = arith.constant dense<0xFF800000> : vector<8xf32>
    %335 = vector.multi_reduction <maximumf>, %334, %cst_116 [1] : vector<8x16xf32> to vector<8xf32>
    %336 = vector.shape_cast %335 : vector<8xf32> to vector<8x1xf32>
    %337 = vector.broadcast %336 : vector<8x1xf32> to vector<8x16xf32>
    %338 = arith.subf %334, %337 : vector<8x16xf32>
    %339 = math.exp %338 : vector<8x16xf32>
    %cst_117 = arith.constant dense<0.000000e+00> : vector<8xf32>
    %340 = vector.multi_reduction <add>, %339, %cst_117 [1] : vector<8x16xf32> to vector<8xf32>
    %341 = vector.shape_cast %340 : vector<8xf32> to vector<8x1xf32>
    %342 = vector.broadcast %341 : vector<8x1xf32> to vector<8x16xf32>
    %343 = arith.divf %339, %342 : vector<8x16xf32>
    %344 = arith.addf %329, %343 : vector<8x16xf32>
    %345 = vector.extract_strided_slice %287 {offsets = [0, 24], sizes = [16, 8], strides = [1, 1]} : vector<16x32xf32> to vector<16x8xf32>
    %cst_118 = arith.constant dense<0.000000e+00> : vector<8x8xf32>
    %346 = tpu.matmul %343, %345, %cst_118 {dimension_numbers = #tpu.dot_dimension_numbers<[1], [0], [0], [1], [0, 0, 1, 1], [], []>} : vector<8x16xf32>, vector<16x8xf32>, vector<8x8xf32> -> vector<8x8xf32>
    %347 = tpu.concatenate %301, %316, %331, %346 in 1 : vector<8x8xf32>, vector<8x8xf32>, vector<8x8xf32>, vector<8x8xf32> -> vector<8x32xf32>
    %cst_119 = arith.constant 2.500000e-01 : f32
    %348 = vector.broadcast %cst_119 : f32 to vector<8x16xf32>
    %349 = arith.mulf %344, %348 : vector<8x16xf32>
    %350 = tpu.concatenate %280, %347 in 0 : vector<8x32xf32>, vector<8x32xf32> -> vector<16x32xf32>
    %351 = tpu.concatenate %282, %349 in 0 : vector<8x16xf32>, vector<8x16xf32> -> vector<16x16xf32>
    %c0_120 = arith.constant 0 : index
    %c0_121 = arith.constant 0 : index
    %c0_122 = arith.constant 0 : index
    %352 = vector.load %arg13[%c0_120, %c0_121, %c0_122] : memref<1x32x32xf32, #tpu.memory_space<vmem>>, vector<1x32x32xf32>
    %353 = vector.shape_cast %352 : vector<1x32x32xf32> to vector<32x32xf32>
    %cst_123 = arith.constant dense<0.000000e+00> : vector<16x32xf32>
    %354 = tpu.matmul %350, %353, %cst_123 {dimension_numbers = #tpu.dot_dimension_numbers<[1], [0], [0], [1], [0, 0, 1, 1], [], []>} : vector<16x32xf32>, vector<32x32xf32>, vector<16x32xf32> -> vector<16x32xf32>
    %355 = vector.broadcast %20 : vector<1x32xf32> to vector<16x32xf32>
    %356 = arith.addf %354, %355 : vector<16x32xf32>
    %357 = arith.addf %198, %356 : vector<16x32xf32>
    %cst_124 = arith.constant dense<0.000000e+00> : vector<16xf32>
    %358 = vector.multi_reduction <add>, %357, %cst_124 [1] : vector<16x32xf32> to vector<16xf32>
    %359 = vector.shape_cast %358 : vector<16xf32> to vector<16x1xf32>
    %360 = arith.mulf %357, %357 : vector<16x32xf32>
    %cst_125 = arith.constant dense<0.000000e+00> : vector<16xf32>
    %361 = vector.multi_reduction <add>, %360, %cst_125 [1] : vector<16x32xf32> to vector<16xf32>
    %362 = vector.shape_cast %361 : vector<16xf32> to vector<16x1xf32>
    %cst_126 = arith.constant 3.125000e-02 : f32
    %363 = vector.broadcast %cst_126 : f32 to vector<16x1xf32>
    %364 = arith.mulf %359, %363 : vector<16x1xf32>
    %cst_127 = arith.constant 3.125000e-02 : f32
    %365 = vector.broadcast %cst_127 : f32 to vector<16x1xf32>
    %366 = arith.mulf %362, %365 : vector<16x1xf32>
    %367 = arith.mulf %364, %364 : vector<16x1xf32>
    %368 = arith.subf %366, %367 : vector<16x1xf32>
    %369 = vector.broadcast %364 : vector<16x1xf32> to vector<16x32xf32>
    %370 = arith.subf %357, %369 : vector<16x32xf32>
    %cst_128 = arith.constant 9.99999974E-6 : f32
    %371 = vector.broadcast %cst_128 : f32 to vector<16x1xf32>
    %372 = arith.addf %368, %371 : vector<16x1xf32>
    %373 = math.rsqrt %372 : vector<16x1xf32>
    %374 = vector.broadcast %373 : vector<16x1xf32> to vector<16x32xf32>
    %375 = arith.mulf %370, %374 : vector<16x32xf32>
    %376 = vector.broadcast %24 : vector<1x32xf32> to vector<16x32xf32>
    %377 = arith.mulf %375, %376 : vector<16x32xf32>
    %378 = vector.broadcast %25 : vector<1x32xf32> to vector<16x32xf32>
    %379 = arith.addf %377, %378 : vector<16x32xf32>
    %c0_129 = arith.constant 0 : index
    %c0_130 = arith.constant 0 : index
    %c0_131 = arith.constant 0 : index
    %380 = vector.load %arg14[%c0_129, %c0_130, %c0_131] : memref<1x32x64xf32, #tpu.memory_space<vmem>>, vector<1x32x64xf32>
    %381 = vector.shape_cast %380 : vector<1x32x64xf32> to vector<32x64xf32>
    %cst_132 = arith.constant dense<0.000000e+00> : vector<16x64xf32>
    %382 = tpu.matmul %379, %381, %cst_132 {dimension_numbers = #tpu.dot_dimension_numbers<[1], [0], [0], [1], [0, 0, 1, 1], [], []>} : vector<16x32xf32>, vector<32x64xf32>, vector<16x64xf32> -> vector<16x64xf32>
    %383 = vector.broadcast %29 : vector<1x64xf32> to vector<16x64xf32>
    %384 = arith.addf %382, %383 : vector<16x64xf32>
    %cst_133 = arith.constant 0.000000e+00 : f32
    %385 = vector.broadcast %cst_133 : f32 to vector<16x64xf32>
    %386 = arith.maximumf %384, %385 : vector<16x64xf32>
    %c0_134 = arith.constant 0 : index
    %c0_135 = arith.constant 0 : index
    %c0_136 = arith.constant 0 : index
    %387 = vector.load %arg15[%c0_134, %c0_135, %c0_136] : memref<1x64x32xf32, #tpu.memory_space<vmem>>, vector<1x64x32xf32>
    %388 = vector.shape_cast %387 : vector<1x64x32xf32> to vector<64x32xf32>
    %cst_137 = arith.constant dense<0.000000e+00> : vector<16x32xf32>
    %389 = tpu.matmul %386, %388, %cst_137 {dimension_numbers = #tpu.dot_dimension_numbers<[1], [0], [0], [1], [0, 0, 1, 1], [], []>} : vector<16x64xf32>, vector<64x32xf32>, vector<16x32xf32> -> vector<16x32xf32>
    %390 = vector.broadcast %21 : vector<1x32xf32> to vector<16x32xf32>
    %391 = arith.addf %389, %390 : vector<16x32xf32>
    %392 = arith.addf %379, %391 : vector<16x32xf32>
    %cst_138 = arith.constant dense<0.000000e+00> : vector<16xf32>
    %393 = vector.multi_reduction <add>, %392, %cst_138 [1] : vector<16x32xf32> to vector<16xf32>
    %394 = vector.shape_cast %393 : vector<16xf32> to vector<16x1xf32>
    %395 = arith.mulf %392, %392 : vector<16x32xf32>
    %cst_139 = arith.constant dense<0.000000e+00> : vector<16xf32>
    %396 = vector.multi_reduction <add>, %395, %cst_139 [1] : vector<16x32xf32> to vector<16xf32>
    %397 = vector.shape_cast %396 : vector<16xf32> to vector<16x1xf32>
    %cst_140 = arith.constant 3.125000e-02 : f32
    %398 = vector.broadcast %cst_140 : f32 to vector<16x1xf32>
    %399 = arith.mulf %394, %398 : vector<16x1xf32>
    %cst_141 = arith.constant 3.125000e-02 : f32
    %400 = vector.broadcast %cst_141 : f32 to vector<16x1xf32>
    %401 = arith.mulf %397, %400 : vector<16x1xf32>
    %402 = arith.mulf %399, %399 : vector<16x1xf32>
    %403 = arith.subf %401, %402 : vector<16x1xf32>
    %404 = vector.broadcast %399 : vector<16x1xf32> to vector<16x32xf32>
    %405 = arith.subf %392, %404 : vector<16x32xf32>
    %cst_142 = arith.constant 9.99999974E-6 : f32
    %406 = vector.broadcast %cst_142 : f32 to vector<16x1xf32>
    %407 = arith.addf %403, %406 : vector<16x1xf32>
    %408 = math.rsqrt %407 : vector<16x1xf32>
    %409 = vector.broadcast %408 : vector<16x1xf32> to vector<16x32xf32>
    %410 = arith.mulf %405, %409 : vector<16x32xf32>
    %411 = vector.broadcast %26 : vector<1x32xf32> to vector<16x32xf32>
    %412 = arith.mulf %410, %411 : vector<16x32xf32>
    %413 = vector.broadcast %27 : vector<1x32xf32> to vector<16x32xf32>
    %414 = arith.addf %412, %413 : vector<16x32xf32>
    %415 = vector.shape_cast %414 : vector<16x32xf32> to vector<2x8x32xf32>
    %c0_143 = arith.constant 0 : index
    %c0_144 = arith.constant 0 : index
    %c0_145 = arith.constant 0 : index
    %416 = vector.load %arg20[%c0_143, %c0_144, %c0_145] : memref<2x8x32xf32, #tpu.memory_space<vmem>>, vector<2x8x32xf32>
    tpu.vector_store %arg20[%c0_143, %c0_144, %c0_145], %415 {strides = array<i32>} : memref<2x8x32xf32, #tpu.memory_space<vmem>>, vector<2x8x32xf32>,
    %c1_i32 = arith.constant 1 : i32
    %417 = arith.cmpi eq, %arg1, %c1_i32 : i32
    %418 = arith.extui %417 : i1 to i32
    %c0_i32_146 = arith.constant 0 : i32
    %419 = arith.cmpi ne, %418, %c0_i32_146 : i32
    scf.if %419 {
      %c0_147 = arith.constant 0 : index
      %c0_148 = arith.constant 0 : index
      %420 = vector.load %arg18[%c0_147, %c0_148] : memref<1x32xf32, #tpu.memory_space<vmem>>, vector<1x32xf32>
      %c0_149 = arith.constant 0 : index
      %c0_150 = arith.constant 0 : index
      %421 = vector.load %arg19[%c0_149, %c0_150] : memref<1x32xf32, #tpu.memory_space<vmem>>, vector<1x32xf32>
      %cst_151 = arith.constant dense<0.000000e+00> : vector<16xf32>
      %422 = vector.multi_reduction <add>, %414, %cst_151 [1] : vector<16x32xf32> to vector<16xf32>
      %423 = vector.shape_cast %422 : vector<16xf32> to vector<16x1xf32>
      %424 = arith.mulf %414, %414 : vector<16x32xf32>
      %cst_152 = arith.constant dense<0.000000e+00> : vector<16xf32>
      %425 = vector.multi_reduction <add>, %424, %cst_152 [1] : vector<16x32xf32> to vector<16xf32>
      %426 = vector.shape_cast %425 : vector<16xf32> to vector<16x1xf32>
      %cst_153 = arith.constant 3.125000e-02 : f32
      %427 = vector.broadcast %cst_153 : f32 to vector<16x1xf32>
      %428 = arith.mulf %423, %427 : vector<16x1xf32>
      %cst_154 = arith.constant 3.125000e-02 : f32
      %429 = vector.broadcast %cst_154 : f32 to vector<16x1xf32>
      %430 = arith.mulf %426, %429 : vector<16x1xf32>
      %431 = arith.mulf %428, %428 : vector<16x1xf32>
      %432 = arith.subf %430, %431 : vector<16x1xf32>
      %433 = vector.broadcast %428 : vector<16x1xf32> to vector<16x32xf32>
      %434 = arith.subf %414, %433 : vector<16x32xf32>
      %cst_155 = arith.constant 9.99999974E-6 : f32
      %435 = vector.broadcast %cst_155 : f32 to vector<16x1xf32>
      %436 = arith.addf %432, %435 : vector<16x1xf32>
      %437 = math.rsqrt %436 : vector<16x1xf32>
      %438 = vector.broadcast %437 : vector<16x1xf32> to vector<16x32xf32>
      %439 = arith.mulf %434, %438 : vector<16x32xf32>
      %440 = vector.broadcast %420 : vector<1x32xf32> to vector<16x32xf32>
      %441 = arith.mulf %439, %440 : vector<16x32xf32>
      %442 = vector.broadcast %421 : vector<1x32xf32> to vector<16x32xf32>
      %443 = arith.addf %441, %442 : vector<16x32xf32>
      %444 = vector.shape_cast %443 : vector<16x32xf32> to vector<2x8x32xf32>
      %c0_156 = arith.constant 0 : index
      %c0_157 = arith.constant 0 : index
      %c0_158 = arith.constant 0 : index
      %445 = vector.load %arg20[%c0_156, %c0_157, %c0_158] : memref<2x8x32xf32, #tpu.memory_space<vmem>>, vector<2x8x32xf32>
      tpu.vector_store %arg20[%c0_156, %c0_157, %c0_158], %444 {strides = array<i32>} : memref<2x8x32xf32, #tpu.memory_space<vmem>>, vector<2x8x32xf32>,
      %446 = vector.shape_cast %351 : vector<16x16xf32> to vector<2x8x16xf32>
      %c0_159 = arith.constant 0 : index
      %c0_160 = arith.constant 0 : index
      %c0_161 = arith.constant 0 : index
      %447 = vector.load %arg21[%c0_159, %c0_160, %c0_161] : memref<2x8x16xf32, #tpu.memory_space<vmem>>, vector<2x8x16xf32>
      tpu.vector_store %arg21[%c0_159, %c0_160, %c0_161], %446 {strides = array<i32>} : memref<2x8x16xf32, #tpu.memory_space<vmem>>, vector<2x8x16xf32>,
    } else {
    }
    return
  }
  func.func @transform_0(%arg0: i32, %arg1: i32) -> (i32, i32, i32) {
    %c0_i32 = arith.constant 0 : i32
    %c0_i32_0 = arith.constant 0 : i32
    %c0_i32_1 = arith.constant 0 : i32
    return %arg0, %c0_i32, %c0_i32_0 : i32, i32, i32
  }
  func.func @transform_1(%arg0: i32, %arg1: i32) -> (i32, i32, i32) {
    %c0_i32 = arith.constant 0 : i32
    %c0_i32_0 = arith.constant 0 : i32
    %c0_i32_1 = arith.constant 0 : i32
    return %arg0, %c0_i32, %c0_i32_0 : i32, i32, i32
  }
  func.func @transform_2(%arg0: i32, %arg1: i32) -> (i32, i32, i32) {
    %c0_i32 = arith.constant 0 : i32
    %c0_i32_0 = arith.constant 0 : i32
    %c0_i32_1 = arith.constant 0 : i32
    return %arg0, %c0_i32, %c0_i32_0 : i32, i32, i32
  }
  func.func @transform_3(%arg0: i32, %arg1: i32) -> (i32, i32, i32) {
    %c0_i32 = arith.constant 0 : i32
    %c0_i32_0 = arith.constant 0 : i32
    %c0_i32_1 = arith.constant 0 : i32
    return %arg0, %c0_i32, %c0_i32_0 : i32, i32, i32
  }
  func.func @transform_4(%arg0: i32, %arg1: i32) -> (i32, i32, i32) {
    %c0_i32 = arith.constant 0 : i32
    %c0_i32_0 = arith.constant 0 : i32
    %c0_i32_1 = arith.constant 0 : i32
    return %arg1, %c0_i32, %c0_i32_0 : i32, i32, i32
  }
  func.func @transform_5(%arg0: i32, %arg1: i32) -> (i32, i32, i32) {
    %c0_i32 = arith.constant 0 : i32
    %c0_i32_0 = arith.constant 0 : i32
    %c0_i32_1 = arith.constant 0 : i32
    return %arg1, %c0_i32, %c0_i32_0 : i32, i32, i32
  }
  func.func @transform_6(%arg0: i32, %arg1: i32) -> (i32, i32, i32) {
    %c0_i32 = arith.constant 0 : i32
    %c0_i32_0 = arith.constant 0 : i32
    %c0_i32_1 = arith.constant 0 : i32
    return %arg1, %c0_i32, %c0_i32_0 : i32, i32, i32
  }
  func.func @transform_7(%arg0: i32, %arg1: i32) -> (i32, i32, i32) {
    %c0_i32 = arith.constant 0 : i32
    %c0_i32_0 = arith.constant 0 : i32
    %c0_i32_1 = arith.constant 0 : i32
    return %arg1, %c0_i32, %c0_i32_0 : i32, i32, i32
  }
  func.func @transform_8(%arg0: i32, %arg1: i32) -> (i32, i32, i32) {
    %c0_i32 = arith.constant 0 : i32
    %c0_i32_0 = arith.constant 0 : i32
    %c0_i32_1 = arith.constant 0 : i32
    return %arg1, %c0_i32, %c0_i32_0 : i32, i32, i32
  }
  func.func @transform_9(%arg0: i32, %arg1: i32) -> (i32, i32, i32) {
    %c0_i32 = arith.constant 0 : i32
    %c0_i32_0 = arith.constant 0 : i32
    %c0_i32_1 = arith.constant 0 : i32
    return %arg1, %c0_i32, %c0_i32_0 : i32, i32, i32
  }
  func.func @transform_10(%arg0: i32, %arg1: i32) -> (i32, i32, i32) {
    %c0_i32 = arith.constant 0 : i32
    %c0_i32_0 = arith.constant 0 : i32
    %c0_i32_1 = arith.constant 0 : i32
    return %arg1, %c0_i32, %c0_i32_0 : i32, i32, i32
  }
  func.func @transform_11(%arg0: i32, %arg1: i32) -> (i32, i32, i32) {
    %c0_i32 = arith.constant 0 : i32
    %c0_i32_0 = arith.constant 0 : i32
    %c0_i32_1 = arith.constant 0 : i32
    return %arg1, %c0_i32, %c0_i32_0 : i32, i32, i32
  }
  func.func @transform_12(%arg0: i32, %arg1: i32) -> (i32, i32, i32) {
    %c0_i32 = arith.constant 0 : i32
    %c0_i32_0 = arith.constant 0 : i32
    %c0_i32_1 = arith.constant 0 : i32
    return %arg1, %c0_i32, %c0_i32_0 : i32, i32, i32
  }
  func.func @transform_13(%arg0: i32, %arg1: i32) -> (i32, i32, i32) {
    %c0_i32 = arith.constant 0 : i32
    %c0_i32_0 = arith.constant 0 : i32
    %c0_i32_1 = arith.constant 0 : i32
    return %arg1, %c0_i32, %c0_i32_0 : i32, i32, i32
  }
  func.func @transform_14(%arg0: i32, %arg1: i32) -> (i32, i32, i32) {
    %c0_i32 = arith.constant 0 : i32
    %c0_i32_0 = arith.constant 0 : i32
    %c0_i32_1 = arith.constant 0 : i32
    return %arg1, %c0_i32, %c0_i32_0 : i32, i32, i32
  }
  func.func @transform_15(%arg0: i32, %arg1: i32) -> (i32, i32, i32) {
    %c0_i32 = arith.constant 0 : i32
    %c0_i32_0 = arith.constant 0 : i32
    %c0_i32_1 = arith.constant 0 : i32
    return %arg1, %c0_i32, %c0_i32_0 : i32, i32, i32
  }
  func.func @transform_16(%arg0: i32, %arg1: i32) -> (i32, i32) {
    %c0_i32 = arith.constant 0 : i32
    %c0_i32_0 = arith.constant 0 : i32
    %c0_i32_1 = arith.constant 0 : i32
    return %c0_i32, %c0_i32_0 : i32, i32
  }
  func.func @transform_17(%arg0: i32, %arg1: i32) -> (i32, i32) {
    %c0_i32 = arith.constant 0 : i32
    %c0_i32_0 = arith.constant 0 : i32
    %c0_i32_1 = arith.constant 0 : i32
    return %c0_i32, %c0_i32_0 : i32, i32
  }
  func.func @transform_18(%arg0: i32, %arg1: i32) -> (i32, i32, i32) {
    %c0_i32 = arith.constant 0 : i32
    %c0_i32_0 = arith.constant 0 : i32
    %c0_i32_1 = arith.constant 0 : i32
    return %arg0, %c0_i32, %c0_i32_0 : i32, i32, i32
  }
  func.func @transform_19(%arg0: i32, %arg1: i32) -> (i32, i32, i32) {
    %c0_i32 = arith.constant 0 : i32
    %c0_i32_0 = arith.constant 0 : i32
    %c0_i32_1 = arith.constant 0 : i32
    return %arg0, %c0_i32, %c0_i32_0 : i32, i32, i32
  }
}

</mosaic_0001>

<llo_original>
// kernel: transformer_decoder.1
$region0: #{transformer_decoder.1}
  #allocation0 [shape = 'u32[]', space=smem, size = 0x4, offset = 0x4, fixed_abs, tag = 'smem constant byte address 0x4 - core index']
  #allocation1 [shape = 'u32[144,128]{1,0:T(1,128)}', space=vmem, size = 0x12000, scoped, tag = 'internal scratch']
  %s0 = inlined_call_operand.vmem [shape: f32[2,8,32], index: 0, kind: input, shape index: {}]
  %s1 = inlined_call_operand.vmem [shape: f32[2,16,32], index: 1, kind: input, shape index: {}]
  %s2 = inlined_call_operand.vmem [shape: f32[2,8,32], index: 2, kind: input, shape index: {}]
  %s3 = inlined_call_operand.vmem [shape: f32[2,16,32], index: 3, kind: input, shape index: {}]
  %s4 = inlined_call_operand.vmem [shape: f32[2,32,32], index: 4, kind: input, shape index: {}]
  %s5 = inlined_call_operand.vmem [shape: f32[2,32,32], index: 5, kind: input, shape index: {}]
  %s6 = inlined_call_operand.vmem [shape: f32[2,32,32], index: 6, kind: input, shape index: {}]
  %s7 = inlined_call_operand.vmem [shape: f32[2,32,32], index: 7, kind: input, shape index: {}]
  %s8 = inlined_call_operand.vmem [shape: f32[2,32,32], index: 8, kind: input, shape index: {}]
  %s9 = inlined_call_operand.vmem [shape: f32[2,32,32], index: 9, kind: input, shape index: {}]
  %s10 = inlined_call_operand.hbm [shape: f32[2,32,32], index: 10, kind: input, shape index: {}]
  %s11 = inlined_call_operand.hbm [shape: f32[2,32,32], index: 11, kind: input, shape index: {}]
  %s12 = inlined_call_operand.hbm [shape: f32[2,32,64], index: 12, kind: input, shape index: {}]
  %s13 = inlined_call_operand.vmem [shape: f32[2,64,32], index: 13, kind: input, shape index: {}]
  %s14 = inlined_call_operand.hbm [shape: f32[2,1,64], index: 14, kind: input, shape index: {}]
  %s15 = inlined_call_operand.vmem [shape: f32[2,15,32], index: 15, kind: input, shape index: {}]
  %s16 = inlined_call_operand.hbm [shape: f32[1,32], index: 16, kind: input, shape index: {}]
  %s17 = inlined_call_operand.hbm [shape: f32[1,32], index: 17, kind: input, shape index: {}]
  %s18 = inlined_call_operand.vmem [shape: f32[2,8,32], index: 18, kind: output, shape index: {0}]
  %s19 = inlined_call_operand.hbm [shape: f32[2,8,16], index: 19, kind: output, shape index: {1}]
  %20 = xla_tuple %s18, %s19
  %s21 = sld [smem:[#allocation0]]
  $region145: #{transformer_decoder.1} parent=0
    _
  %s23 = ssub.s32 1, %s21
  %s24 = scalar_select 0, %s23, %s21
  $region1: #{transformer_decoder.1} parent=0
    #allocation2 [shape = 'u8[32768]{0}', space=vmem, size = 0x8000, scoped, tag = 'input window, operand 10']
    #allocation3 [shape = 's32[2]{0}', space=sflag, size = 0x8, scoped, tag = 'scoped memory for transformer_decoder.1']
    #allocation4 [shape = 's32[2]{0}', space=sflag, size = 0x8, scoped, tag = 'scoped memory for transformer_decoder.1']
    #allocation5 [shape = 'u8[32768]{0}', space=vmem, size = 0x8000, scoped, tag = 'input window, operand 11']
    #allocation6 [shape = 's32[2]{0}', space=sflag, size = 0x8, scoped, tag = 'scoped memory for transformer_decoder.1']
    #allocation7 [shape = 'u8[32768]{0}', space=vmem, size = 0x8000, scoped, tag = 'input window, operand 12']
    #allocation8 [shape = 'u8[1024]{0}', space=vmem, size = 0x400, scoped, tag = 'input window, operand 14']
    #allocation9 [shape = 's32[2]{0}', space=sflag, size = 0x8, scoped, tag = 'scoped memory for transformer_decoder.1']
    #allocation10 [shape = 'u8[512]{0}', space=vmem, size = 0x400, scoped, tag = 'input window, operand 16, single buffered']
    #allocation11 [shape = 'u8[512]{0}', space=vmem, size = 0x400, scoped, tag = 'input window, operand 17, single buffered']
    #allocation12 [shape = 's32[1]{0}', space=sflag, size = 0x4, scoped, tag = 'scoped memory for transformer_decoder.1']
    #allocation13 [shape = 'u8[8192]{0}', space=vmem, size = 0x2000, scoped, tag = 'output window, operand 1, single buffered']
    %25 = vsyncpa [#allocation3], 0
    %s26 = scalar_lea.sflag [#allocation3], 1
    %27 = vsyncpa %s26, 0
    %28 = vsyncpa [#allocation6], 0
    %s29 = scalar_lea.sflag [#allocation6], 1
    %30 = vsyncpa %s29, 0
    %31 = vsyncpa [#allocation9], 0
    %s32 = scalar_lea.sflag [#allocation9], 1
    %33 = vsyncpa %s32, 0
    %34 = vsyncpa [#allocation12], 0
    %35 = vsyncpa [#allocation4], 0
    loop: start=0, step=1, limit=4
    $region2: #{transformer_decoder.1} parent=1 // loop_pre_header
      _
    $region3: #{transformer_decoder.1} parent=1 // loop_header
      %s37 = sphi 0, %s41
      %p38 = scmp.ge.s32.totalorder %s37, 4
      %s44 = sphi 0, %s56
      %s45 = sphi 0, %s52
      %s46 = sphi 0, %s44
      %s47 = sphi 0, %s45
      %s48 = sphi 0, %s46
      %s49 = sphi 0, %s47
      %s59 = sphi 0, %s61
      %s62 = sphi 0, %s59
      %s63 = sphi 0, %s62
      %s79 = sphi 0, %s63
      %s85 = sphi 0, %s87
      %s88 = sphi 0, %s85
      %s89 = sphi 0, %s88
      %s105 = sphi 0, %s89
      %s111 = sphi 0, %s113
      %s114 = sphi 0, %s111
      %s115 = sphi 0, %s114
      %s131 = sphi 0, %s115
      %s137 = sphi 0, %s139
      %s140 = sphi 0, %s137
      %s141 = sphi 0, %s140
      %s157 = sphi 0, %s141
      %s163 = sphi 0, %s165
      %s166 = sphi 0, %s163
      %s167 = sphi 0, %s166
      %s183 = sphi 0, %s167
      %s189 = sphi 0, %s191
      %s192 = sphi 0, %s189
      %s193 = sphi 0, %s192
      %s209 = sphi 0, %s193
      %s215 = sphi 0, %s217
      %s218 = sphi 0, %s215
      %s219 = sphi 0, %s218
      %s235 = sphi 0, %s219
      %s241 = sphi 0, %s243
      %s244 = sphi 0, %s241
      %s245 = sphi 0, %s244
      %s261 = sphi 0, %s245
      %s267 = sphi 0, %s269
      %s270 = sphi 0, %s267
      %s271 = sphi 0, %s270
      %s287 = sphi 0, %s271
      %s293 = sphi 0, %s295
      %s296 = sphi 0, %s293
      %s297 = sphi 0, %s296
      %s313 = sphi 0, %s297
      %s319 = sphi 0, %s321
      %s322 = sphi 0, %s319
      %s323 = sphi 0, %s322
      %s339 = sphi 0, %s323
      %s345 = sphi 0, %s347
      %s348 = sphi 0, %s345
      %s349 = sphi 0, %s348
      %s365 = sphi 0, %s349
      %s371 = sphi 0, %s373
      %s374 = sphi 0, %s371
      %s375 = sphi 0, %s374
      %s391 = sphi 0, %s375
      %s397 = sphi 0, %s399
      %s400 = sphi 0, %s397
      %s401 = sphi 0, %s400
      %s417 = sphi 0, %s401
      %s423 = sphi 0, %s425
      %s426 = sphi 0, %s423
      %s427 = sphi 0, %s426
      %s443 = sphi 0, %s427
      %s449 = sphi 0, %s451
      %s452 = sphi 0, %s449
      %s453 = sphi 0, %s452
      %s469 = sphi 0, %s453
      %s473 = sphi 0, %s473
      %s475 = sphi 0, %s473
      %s476 = sphi 0, %s475
      %s490 = sphi 0, %s476
      %s494 = sphi 0, %s494
      %s496 = sphi 0, %s494
      %s497 = sphi 0, %s496
      %s511 = sphi 0, %s497
      %s517 = sphi 0, %s519
      %s520 = sphi 0, %s517
      %s521 = sphi 0, %s520
      %s537 = sphi 0, %s521
      %s543 = sphi 0, %s545
      %s546 = sphi 0, %s543
      %s547 = sphi 0, %s546
      %s563 = sphi 0, %s547
    $region4: #{transformer_decoder.1} parent=1 // loop_header_branch
      %40 = sbr.rel (%p38) target = $region8
    $region5: #{transformer_decoder.1} parent=1 // loop_body
      %s42 = ssub.s32 %s37, 1
      %s43 = ssub.s32 %s37, 2
      %s50 = sadd.s32 1, %s45
      %p51 = scmp.ge.s32.totalorder %s50, 2
      %s52 = scalar_select %p51, 0, %s50
      %s53 = sadd.s32 1, %s44
      %s54 = scalar_select %p51, %s53, %s44
      %p55 = scmp.ge.s32.totalorder %s54, 1
      %s56 = scalar_select %p55, 0, %s54
      %s57 = ssub.s32 %s44, %s56
      %p58 = scmp.eq.s32.totalorder %s57, 0
      %s60 = sadd.s32 %s59, 1
      %s61 = scalar_select %p58, %s59, %s60
      %p64 = pneg %p58
      %p65 = scmp.eq.s32.totalorder %s37, 1
      %p66 = por %p64, %p65
      %p67 = scmp.ne.s32.totalorder %s59, %s62
      %p68 = scmp.eq.s32.totalorder %s37, 0
      %p69 = por %p67, %p68
      %p70 = scmp.ne.s32.totalorder %s59, %s62
      %p71 = scmp.eq.s32.totalorder %s42, 1
      %p72 = por %p70, %p71
      %p73 = scmp.ne.s32.totalorder %s62, %s63
      %p74 = scmp.eq.s32.totalorder %s42, 0
      %p75 = por %p73, %p74
      %p76 = scmp.ne.s32.totalorder %s62, %s63
      %p77 = scmp.eq.s32.totalorder %s43, 1
      %p78 = por %p76, %p77
      %p80 = scmp.ne.s32.totalorder %s63, %s79
      %p81 = scmp.eq.s32.totalorder %s43, 0
      %p82 = por %p80, %p81
      %s83 = ssub.s32 %s44, %s56
      %p84 = scmp.eq.s32.totalorder %s83, 0
      %s86 = sadd.s32 %s85, 1
      %s87 = scalar_select %p84, %s85, %s86
      %p90 = pneg %p84
      %p91 = scmp.eq.s32.totalorder %s37, 1
      %p92 = por %p90, %p91
      %p93 = scmp.ne.s32.totalorder %s85, %s88
      %p94 = scmp.eq.s32.totalorder %s37, 0
      %p95 = por %p93, %p94
      %p96 = scmp.ne.s32.totalorder %s85, %s88
      %p97 = scmp.eq.s32.totalorder %s42, 1
      %p98 = por %p96, %p97
      %p99 = scmp.ne.s32.totalorder %s88, %s89
      %p100 = scmp.eq.s32.totalorder %s42, 0
      %p101 = por %p99, %p100
      %p102 = scmp.ne.s32.totalorder %s88, %s89
      %p103 = scmp.eq.s32.totalorder %s43, 1
      %p104 = por %p102, %p103
      %p106 = scmp.ne.s32.totalorder %s89, %s105
      %p107 = scmp.eq.s32.totalorder %s43, 0
      %p108 = por %p106, %p107
      %s109 = ssub.s32 %s44, %s56
      %p110 = scmp.eq.s32.totalorder %s109, 0
      %s112 = sadd.s32 %s111, 1
      %s113 = scalar_select %p110, %s111, %s112
      %p116 = pneg %p110
      %p117 = scmp.eq.s32.totalorder %s37, 1
      %p118 = por %p116, %p117
      %p119 = scmp.ne.s32.totalorder %s111, %s114
      %p120 = scmp.eq.s32.totalorder %s37, 0
      %p121 = por %p119, %p120
      %p122 = scmp.ne.s32.totalorder %s111, %s114
      %p123 = scmp.eq.s32.totalorder %s42, 1
      %p124 = por %p122, %p123
      %p125 = scmp.ne.s32.totalorder %s114, %s115
      %p126 = scmp.eq.s32.totalorder %s42, 0
      %p127 = por %p125, %p126
      %p128 = scmp.ne.s32.totalorder %s114, %s115
      %p129 = scmp.eq.s32.totalorder %s43, 1
      %p130 = por %p128, %p129
      %p132 = scmp.ne.s32.totalorder %s115, %s131
      %p133 = scmp.eq.s32.totalorder %s43, 0
      %p134 = por %p132, %p133
      %s135 = ssub.s32 %s44, %s56
      %p136 = scmp.eq.s32.totalorder %s135, 0
      %s138 = sadd.s32 %s137, 1
      %s139 = scalar_select %p136, %s137, %s138
      %p142 = pneg %p136
      %p143 = scmp.eq.s32.totalorder %s37, 1
      %p144 = por %p142, %p143
      %p145 = scmp.ne.s32.totalorder %s137, %s140
      %p146 = scmp.eq.s32.totalorder %s37, 0
      %p147 = por %p145, %p146
      %p148 = scmp.ne.s32.totalorder %s137, %s140
      %p149 = scmp.eq.s32.totalorder %s42, 1
      %p150 = por %p148, %p149
      %p151 = scmp.ne.s32.totalorder %s140, %s141
      %p152 = scmp.eq.s32.totalorder %s42, 0
      %p153 = por %p151, %p152
      %p154 = scmp.ne.s32.totalorder %s140, %s141
      %p155 = scmp.eq.s32.totalorder %s43, 1
      %p156 = por %p154, %p155
      %p158 = scmp.ne.s32.totalorder %s141, %s157
      %p159 = scmp.eq.s32.totalorder %s43, 0
      %p160 = por %p158, %p159
      %s161 = ssub.s32 %s45, %s52
      %p162 = scmp.eq.s32.totalorder %s161, 0
      %s164 = sadd.s32 %s163, 1
      %s165 = scalar_select %p162, %s163, %s164
      %p168 = pneg %p162
      %p169 = scmp.eq.s32.totalorder %s37, 1
      %p170 = por %p168, %p169
      %p171 = scmp.ne.s32.totalorder %s163, %s166
      %p172 = scmp.eq.s32.totalorder %s37, 0
      %p173 = por %p171, %p172
      %p174 = scmp.ne.s32.totalorder %s163, %s166
      %p175 = scmp.eq.s32.totalorder %s42, 1
      %p176 = por %p174, %p175
      %p177 = scmp.ne.s32.totalorder %s166, %s167
      %p178 = scmp.eq.s32.totalorder %s42, 0
      %p179 = por %p177, %p178
      %p180 = scmp.ne.s32.totalorder %s166, %s167
      %p181 = scmp.eq.s32.totalorder %s43, 1
      %p182 = por %p180, %p181
      %p184 = scmp.ne.s32.totalorder %s167, %s183
      %p185 = scmp.eq.s32.totalorder %s43, 0
      %p186 = por %p184, %p185
      %s187 = ssub.s32 %s45, %s52
      %p188 = scmp.eq.s32.totalorder %s187, 0
      %s190 = sadd.s32 %s189, 1
      %s191 = scalar_select %p188, %s189, %s190
      %p194 = pneg %p188
      %p195 = scmp.eq.s32.totalorder %s37, 1
      %p196 = por %p194, %p195
      %p197 = scmp.ne.s32.totalorder %s189, %s192
      %p198 = scmp.eq.s32.totalorder %s37, 0
      %p199 = por %p197, %p198
      %p200 = scmp.ne.s32.totalorder %s189, %s192
      %p201 = scmp.eq.s32.totalorder %s42, 1
      %p202 = por %p200, %p201
      %p203 = scmp.ne.s32.totalorder %s192, %s193
      %p204 = scmp.eq.s32.totalorder %s42, 0
      %p205 = por %p203, %p204
      %p206 = scmp.ne.s32.totalorder %s192, %s193
      %p207 = scmp.eq.s32.totalorder %s43, 1
      %p208 = por %p206, %p207
      %p210 = scmp.ne.s32.totalorder %s193, %s209
      %p211 = scmp.eq.s32.totalorder %s43, 0
      %p212 = por %p210, %p211
      %s213 = ssub.s32 %s45, %s52
      %p214 = scmp.eq.s32.totalorder %s213, 0
      %s216 = sadd.s32 %s215, 1
      %s217 = scalar_select %p214, %s215, %s216
      %p220 = pneg %p214
      %p221 = scmp.eq.s32.totalorder %s37, 1
      %p222 = por %p220, %p221
      %p223 = scmp.ne.s32.totalorder %s215, %s218
      %p224 = scmp.eq.s32.totalorder %s37, 0
      %p225 = por %p223, %p224
      %p226 = scmp.ne.s32.totalorder %s215, %s218
      %p227 = scmp.eq.s32.totalorder %s42, 1
      %p228 = por %p226, %p227
      %p229 = scmp.ne.s32.totalorder %s218, %s219
      %p230 = scmp.eq.s32.totalorder %s42, 0
      %p231 = por %p229, %p230
      %p232 = scmp.ne.s32.totalorder %s218, %s219
      %p233 = scmp.eq.s32.totalorder %s43, 1
      %p234 = por %p232, %p233
      %p236 = scmp.ne.s32.totalorder %s219, %s235
      %p237 = scmp.eq.s32.totalorder %s43, 0
      %p238 = por %p236, %p237
      %s239 = ssub.s32 %s45, %s52
      %p240 = scmp.eq.s32.totalorder %s239, 0
      %s242 = sadd.s32 %s241, 1
      %s243 = scalar_select %p240, %s241, %s242
      %p246 = pneg %p240
      %p247 = scmp.eq.s32.totalorder %s37, 1
      %p248 = por %p246, %p247
      %p249 = scmp.ne.s32.totalorder %s241, %s244
      %p250 = scmp.eq.s32.totalorder %s37, 0
      %p251 = por %p249, %p250
      %p252 = scmp.ne.s32.totalorder %s241, %s244
      %p253 = scmp.eq.s32.totalorder %s42, 1
      %p254 = por %p252, %p253
      %p255 = scmp.ne.s32.totalorder %s244, %s245
      %p256 = scmp.eq.s32.totalorder %s42, 0
      %p257 = por %p255, %p256
      %p258 = scmp.ne.s32.totalorder %s244, %s245
      %p259 = scmp.eq.s32.totalorder %s43, 1
      %p260 = por %p258, %p259
      %p262 = scmp.ne.s32.totalorder %s245, %s261
      %p263 = scmp.eq.s32.totalorder %s43, 0
      %p264 = por %p262, %p263
      %s265 = ssub.s32 %s45, %s52
      %p266 = scmp.eq.s32.totalorder %s265, 0
      %s268 = sadd.s32 %s267, 1
      %s269 = scalar_select %p266, %s267, %s268
      %p272 = pneg %p266
      %p273 = scmp.eq.s32.totalorder %s37, 1
      %p274 = por %p272, %p273
      %p275 = scmp.ne.s32.totalorder %s267, %s270
      %p276 = scmp.eq.s32.totalorder %s37, 0
      %p277 = por %p275, %p276
      %p278 = scmp.ne.s32.totalorder %s267, %s270
      %p279 = scmp.eq.s32.totalorder %s42, 1
      %p280 = por %p278, %p279
      %p281 = scmp.ne.s32.totalorder %s270, %s271
      %p282 = scmp.eq.s32.totalorder %s42, 0
      %p283 = por %p281, %p282
      %p284 = scmp.ne.s32.totalorder %s270, %s271
      %p285 = scmp.eq.s32.totalorder %s43, 1
      %p286 = por %p284, %p285
      %p288 = scmp.ne.s32.totalorder %s271, %s287
      %p289 = scmp.eq.s32.totalorder %s43, 0
      %p290 = por %p288, %p289
      %s291 = ssub.s32 %s45, %s52
      %p292 = scmp.eq.s32.totalorder %s291, 0
      %s294 = sadd.s32 %s293, 1
      %s295 = scalar_select %p292, %s293, %s294
      %p298 = pneg %p292
      %p299 = scmp.eq.s32.totalorder %s37, 1
      %p300 = por %p298, %p299
      %p301 = scmp.ne.s32.totalorder %s293, %s296
      %p302 = scmp.eq.s32.totalorder %s37, 0
      %p303 = por %p301, %p302
      %p304 = scmp.ne.s32.totalorder %s293, %s296
      %p305 = scmp.eq.s32.totalorder %s42, 1
      %p306 = por %p304, %p305
      %p307 = scmp.ne.s32.totalorder %s296, %s297
      %p308 = scmp.eq.s32.totalorder %s42, 0
      %p309 = por %p307, %p308
      %p310 = scmp.ne.s32.totalorder %s296, %s297
      %p311 = scmp.eq.s32.totalorder %s43, 1
      %p312 = por %p310, %p311
      %p314 = scmp.ne.s32.totalorder %s297, %s313
      %p315 = scmp.eq.s32.totalorder %s43, 0
      %p316 = por %p314, %p315
      %s317 = ssub.s32 %s45, %s52
      %p318 = scmp.eq.s32.totalorder %s317, 0
      %s320 = sadd.s32 %s319, 1
      %s321 = scalar_select %p318, %s319, %s320
      %p324 = pneg %p318
      %p325 = scmp.eq.s32.totalorder %s37, 1
      %p326 = por %p324, %p325
      %p327 = scmp.ne.s32.totalorder %s319, %s322
      %p328 = scmp.eq.s32.totalorder %s37, 0
      %p329 = por %p327, %p328
      %p330 = scmp.ne.s32.totalorder %s319, %s322
      %p331 = scmp.eq.s32.totalorder %s42, 1
      %p332 = por %p330, %p331
      %p333 = scmp.ne.s32.totalorder %s322, %s323
      %p334 = scmp.eq.s32.totalorder %s42, 0
      %p335 = por %p333, %p334
      %p336 = scmp.ne.s32.totalorder %s322, %s323
      %p337 = scmp.eq.s32.totalorder %s43, 1
      %p338 = por %p336, %p337
      %p340 = scmp.ne.s32.totalorder %s323, %s339
      %p341 = scmp.eq.s32.totalorder %s43, 0
      %p342 = por %p340, %p341
      %s343 = ssub.s32 %s45, %s52
      %p344 = scmp.eq.s32.totalorder %s343, 0
      %s346 = sadd.s32 %s345, 1
      %s347 = scalar_select %p344, %s345, %s346
      %p350 = pneg %p344
      %p351 = scmp.eq.s32.totalorder %s37, 1
      %p352 = por %p350, %p351
      %p353 = scmp.ne.s32.totalorder %s345, %s348
      %p354 = scmp.eq.s32.totalorder %s37, 0
      %p355 = por %p353, %p354
      %p356 = scmp.ne.s32.totalorder %s345, %s348
      %p357 = scmp.eq.s32.totalorder %s42, 1
      %p358 = por %p356, %p357
      %p359 = scmp.ne.s32.totalorder %s348, %s349
      %p360 = scmp.eq.s32.totalorder %s42, 0
      %p361 = por %p359, %p360
      %p362 = scmp.ne.s32.totalorder %s348, %s349
      %p363 = scmp.eq.s32.totalorder %s43, 1
      %p364 = por %p362, %p363
      %p366 = scmp.ne.s32.totalorder %s349, %s365
      %p367 = scmp.eq.s32.totalorder %s43, 0
      %p368 = por %p366, %p367
      %s369 = ssub.s32 %s45, %s52
      %p370 = scmp.eq.s32.totalorder %s369, 0
      %s372 = sadd.s32 %s371, 1
      %s373 = scalar_select %p370, %s371, %s372
      %p376 = pneg %p370
      %p377 = scmp.eq.s32.totalorder %s37, 1
      %p378 = por %p376, %p377
      %p379 = scmp.ne.s32.totalorder %s371, %s374
      %p380 = scmp.eq.s32.totalorder %s37, 0
      %p381 = por %p379, %p380
      %p382 = scmp.ne.s32.totalorder %s371, %s374
      %p383 = scmp.eq.s32.totalorder %s42, 1
      %p384 = por %p382, %p383
      %p385 = scmp.ne.s32.totalorder %s374, %s375
      %p386 = scmp.eq.s32.totalorder %s42, 0
      %p387 = por %p385, %p386
      %p388 = scmp.ne.s32.totalorder %s374, %s375
      %p389 = scmp.eq.s32.totalorder %s43, 1
      %p390 = por %p388, %p389
      %p392 = scmp.ne.s32.totalorder %s375, %s391
      %p393 = scmp.eq.s32.totalorder %s43, 0
      %p394 = por %p392, %p393
      %s395 = ssub.s32 %s45, %s52
      %p396 = scmp.eq.s32.totalorder %s395, 0
      %s398 = sadd.s32 %s397, 1
      %s399 = scalar_select %p396, %s397, %s398
      %p402 = pneg %p396
      %p403 = scmp.eq.s32.totalorder %s37, 1
      %p404 = por %p402, %p403
      %p405 = scmp.ne.s32.totalorder %s397, %s400
      %p406 = scmp.eq.s32.totalorder %s37, 0
      %p407 = por %p405, %p406
      %p408 = scmp.ne.s32.totalorder %s397, %s400
      %p409 = scmp.eq.s32.totalorder %s42, 1
      %p410 = por %p408, %p409
      %p411 = scmp.ne.s32.totalorder %s400, %s401
      %p412 = scmp.eq.s32.totalorder %s42, 0
      %p413 = por %p411, %p412
      %p414 = scmp.ne.s32.totalorder %s400, %s401
      %p415 = scmp.eq.s32.totalorder %s43, 1
      %p416 = por %p414, %p415
      %p418 = scmp.ne.s32.totalorder %s401, %s417
      %p419 = scmp.eq.s32.totalorder %s43, 0
      %p420 = por %p418, %p419
      %s421 = ssub.s32 %s45, %s52
      %p422 = scmp.eq.s32.totalorder %s421, 0
      %s424 = sadd.s32 %s423, 1
      %s425 = scalar_select %p422, %s423, %s424
      %p428 = pneg %p422
      %p429 = scmp.eq.s32.totalorder %s37, 1
      %p430 = por %p428, %p429
      %p431 = scmp.ne.s32.totalorder %s423, %s426
      %p432 = scmp.eq.s32.totalorder %s37, 0
      %p433 = por %p431, %p432
      %p434 = scmp.ne.s32.totalorder %s423, %s426
      %p435 = scmp.eq.s32.totalorder %s42, 1
      %p436 = por %p434, %p435
      %p437 = scmp.ne.s32.totalorder %s426, %s427
      %p438 = scmp.eq.s32.totalorder %s42, 0
      %p439 = por %p437, %p438
      %p440 = scmp.ne.s32.totalorder %s426, %s427
      %p441 = scmp.eq.s32.totalorder %s43, 1
      %p442 = por %p440, %p441
      %p444 = scmp.ne.s32.totalorder %s427, %s443
      %p445 = scmp.eq.s32.totalorder %s43, 0
      %p446 = por %p444, %p445
      %s447 = ssub.s32 %s45, %s52
      %p448 = scmp.eq.s32.totalorder %s447, 0
      %s450 = sadd.s32 %s449, 1
      %s451 = scalar_select %p448, %s449, %s450
      %p454 = pneg %p448
      %p455 = scmp.eq.s32.totalorder %s37, 1
      %p456 = por %p454, %p455
      %p457 = scmp.ne.s32.totalorder %s449, %s452
      %p458 = scmp.eq.s32.totalorder %s37, 0
      %p459 = por %p457, %p458
      %p460 = scmp.ne.s32.totalorder %s449, %s452
      %p461 = scmp.eq.s32.totalorder %s42, 1
      %p462 = por %p460, %p461
      %p463 = scmp.ne.s32.totalorder %s452, %s453
      %p464 = scmp.eq.s32.totalorder %s42, 0
      %p465 = por %p463, %p464
      %p466 = scmp.ne.s32.totalorder %s452, %s453
      %p467 = scmp.eq.s32.totalorder %s43, 1
      %p468 = por %p466, %p467
      %p470 = scmp.ne.s32.totalorder %s453, %s469
      %p471 = scmp.eq.s32.totalorder %s43, 0
      %p472 = por %p470, %p471
      %s474 = sadd.s32 %s473, 1
      %p477 = scmp.eq.s32.totalorder %s37, 1
      %p478 = scmp.ne.s32.totalorder %s473, %s475
      %p479 = scmp.eq.s32.totalorder %s37, 0
      %p480 = por %p478, %p479
      %p481 = scmp.ne.s32.totalorder %s473, %s475
      %p482 = scmp.eq.s32.totalorder %s42, 1
      %p483 = por %p481, %p482
      %p484 = scmp.ne.s32.totalorder %s475, %s476
      %p485 = scmp.eq.s32.totalorder %s42, 0
      %p486 = por %p484, %p485
      %p487 = scmp.ne.s32.totalorder %s475, %s476
      %p488 = scmp.eq.s32.totalorder %s43, 1
      %p489 = por %p487, %p488
      %p491 = scmp.ne.s32.totalorder %s476, %s490
      %p492 = scmp.eq.s32.totalorder %s43, 0
      %p493 = por %p491, %p492
      %s495 = sadd.s32 %s494, 1
      %p498 = scmp.eq.s32.totalorder %s37, 1
      %p499 = scmp.ne.s32.totalorder %s494, %s496
      %p500 = scmp.eq.s32.totalorder %s37, 0
      %p501 = por %p499, %p500
      %p502 = scmp.ne.s32.totalorder %s494, %s496
      %p503 = scmp.eq.s32.totalorder %s42, 1
      %p504 = por %p502, %p503
      %p505 = scmp.ne.s32.totalorder %s496, %s497
      %p506 = scmp.eq.s32.totalorder %s42, 0
      %p507 = por %p505, %p506
      %p508 = scmp.ne.s32.totalorder %s496, %s497
      %p509 = scmp.eq.s32.totalorder %s43, 1
      %p510 = por %p508, %p509
      %p512 = scmp.ne.s32.totalorder %s497, %s511
      %p513 = scmp.eq.s32.totalorder %s43, 0
      %p514 = por %p512, %p513
      %s515 = ssub.s32 %s44, %s56
      %p516 = scmp.eq.s32.totalorder %s515, 0
      %s518 = sadd.s32 %s517, 1
      %s519 = scalar_select %p516, %s517, %s518
      %p522 = pneg %p516
      %p523 = scmp.eq.s32.totalorder %s37, 1
      %p524 = por %p522, %p523
      %p525 = scmp.ne.s32.totalorder %s517, %s520
      %p526 = scmp.eq.s32.totalorder %s37, 0
      %p527 = por %p525, %p526
      %p528 = scmp.ne.s32.totalorder %s517, %s520
      %p529 = scmp.eq.s32.totalorder %s42, 1
      %p530 = por %p528, %p529
      %p531 = scmp.ne.s32.totalorder %s520, %s521
      %p532 = scmp.eq.s32.totalorder %s42, 0
      %p533 = por %p531, %p532
      %p534 = scmp.ne.s32.totalorder %s520, %s521
      %p535 = scmp.eq.s32.totalorder %s43, 1
      %p536 = por %p534, %p535
      %p538 = scmp.ne.s32.totalorder %s521, %s537
      %p539 = scmp.eq.s32.totalorder %s43, 0
      %p540 = por %p538, %p539
      %s541 = ssub.s32 %s44, %s56
      %p542 = scmp.eq.s32.totalorder %s541, 0
      %s544 = sadd.s32 %s543, 1
      %s545 = scalar_select %p542, %s543, %s544
      %p548 = pneg %p542
      %p549 = scmp.eq.s32.totalorder %s37, 1
      %p550 = por %p548, %p549
      %p551 = scmp.ne.s32.totalorder %s543, %s546
      %p552 = scmp.eq.s32.totalorder %s37, 0
      %p553 = por %p551, %p552
      %p554 = scmp.ne.s32.totalorder %s543, %s546
      %p555 = scmp.eq.s32.totalorder %s42, 1
      %p556 = por %p554, %p555
      %p557 = scmp.ne.s32.totalorder %s546, %s547
      %p558 = scmp.eq.s32.totalorder %s42, 0
      %p559 = por %p557, %p558
      %p560 = scmp.ne.s32.totalorder %s546, %s547
      %p561 = scmp.eq.s32.totalorder %s43, 1
      %p562 = por %p560, %p561
      %p564 = scmp.ne.s32.totalorder %s547, %s563
      %p565 = scmp.eq.s32.totalorder %s43, 0
      %p566 = por %p564, %p565
      %p567 = scmp.le.s32.totalorder 1, %s37
      %p568 = scmp.lt.s32.totalorder %s37, 3
      %p569 = pnand %p567, %p568
      %p570 = pneg %p569
      // Predicated region
      $region9: #{transformer_decoder.1} parent=5 // pred_check
        _
      $region10: #{transformer_decoder.1} parent=5 // pred_check_branch
        %572 = sbr.rel (%p569) target = $region12
      $region11: #{transformer_decoder.1} parent=5 // pred_region
        %s573 = ssub.s32 %s37, 1
        // Predicated region
        $region13: #{transformer_decoder.1} parent=11 // pred_check
          %p574 = pneg %p75
        $region14: #{transformer_decoder.1} parent=11 // pred_check_branch
          %576 = sbr.rel (%p574) target = $region16
        $region15: #{transformer_decoder.1} parent=11 // pred_region
          %s577 = smul.u32 2, %s46
          %p578 = scmp.lt.s32.totalorder %s577, 1
          %s579 = scalar_select %p578, %s577, 1
          %s580 = smul.addr %s579, 8
          %s581 = scalar_lea.vmem %s0, %s580
          %s582 = smul.u32 2, %s46
        $region16: #{transformer_decoder.1} parent=11 // pred_fallthru
          _
        // Predicated region
        $region17: #{transformer_decoder.1} parent=11 // pred_check
          %p583 = pneg %p101
        $region18: #{transformer_decoder.1} parent=11 // pred_check_branch
          %585 = sbr.rel (%p583) target = $region20
        $region19: #{transformer_decoder.1} parent=11 // pred_region
          %s586 = smul.u32 2, %s46
          %p587 = scmp.lt.s32.totalorder %s586, 1
          %s588 = scalar_select %p587, %s586, 1
          %s589 = smul.addr %s588, 2
          %s590 = smul.addr %s589, 8
          %s591 = scalar_lea.vmem %s1, %s590
          %s592 = smul.u32 2, %s46
        $region20: #{transformer_decoder.1} parent=11 // pred_fallthru
          _
        // Predicated region
        $region21: #{transformer_decoder.1} parent=11 // pred_check
          %p593 = pneg %p127
        $region22: #{transformer_decoder.1} parent=11 // pred_check_branch
          %595 = sbr.rel (%p593) target = $region24
        $region23: #{transformer_decoder.1} parent=11 // pred_region
          %s596 = smul.u32 2, %s46
          %p597 = scmp.lt.s32.totalorder %s596, 1
          %s598 = scalar_select %p597, %s596, 1
          %s599 = smul.addr %s598, 8
          %s600 = scalar_lea.vmem %s2, %s599
          %s601 = smul.u32 2, %s46
        $region24: #{transformer_decoder.1} parent=11 // pred_fallthru
          _
        // Predicated region
        $region25: #{transformer_decoder.1} parent=11 // pred_check
          %p602 = pneg %p153
        $region26: #{transformer_decoder.1} parent=11 // pred_check_branch
          %604 = sbr.rel (%p602) target = $region28
        $region27: #{transformer_decoder.1} parent=11 // pred_region
          %s605 = smul.u32 2, %s46
          %p606 = scmp.lt.s32.totalorder %s605, 1
          %s607 = scalar_select %p606, %s605, 1
          %s608 = smul.addr %s607, 2
          %s609 = smul.addr %s608, 8
          %s610 = scalar_lea.vmem %s3, %s609
          %s611 = smul.u32 2, %s46
        $region28: #{transformer_decoder.1} parent=11 // pred_fallthru
          _
        // Predicated region
        $region29: #{transformer_decoder.1} parent=11 // pred_check
          %p612 = pneg %p486
        $region30: #{transformer_decoder.1} parent=11 // pred_check_branch
          %614 = sbr.rel (%p612) target = $region32
        $region31: #{transformer_decoder.1} parent=11 // pred_region
          %s616 = ssub.s32 16, 16
          %617 = vsyncadd [#allocation9], %s616
          %s619 = sshll.u32 [#allocation10], 4
          %s620 = int_to_ptr.vmem [resolvable:$true] %s619
          %622 = dma.hbm_to_vmem [thread:$0]  %s16, 16, %s620, [#allocation9]
        $region32: #{transformer_decoder.1} parent=11 // pred_fallthru
          _
        // Predicated region
        $region33: #{transformer_decoder.1} parent=11 // pred_check
          %p623 = pneg %p507
        $region34: #{transformer_decoder.1} parent=11 // pred_check_branch
          %625 = sbr.rel (%p623) target = $region36
        $region35: #{transformer_decoder.1} parent=11 // pred_region
          %s627 = ssub.s32 16, 16
          %628 = vsyncadd [#allocation12], %s627
          %s630 = sshll.u32 [#allocation11], 4
          %s631 = int_to_ptr.vmem [resolvable:$true] %s630
          %633 = dma.hbm_to_vmem [thread:$0]  %s17, 16, %s631, [#allocation12]
        $region36: #{transformer_decoder.1} parent=11 // pred_fallthru
          _
      $region12: #{transformer_decoder.1} parent=5 // pred_fallthru
        _
      %p634 = scmp.lt.s32.totalorder %s37, 2
      // Predicated region
      $region37: #{transformer_decoder.1} parent=5 // pred_check
        %p635 = pneg %p634
      $region38: #{transformer_decoder.1} parent=5 // pred_check_branch
        %637 = sbr.rel (%p635) target = $region40
      $region39: #{transformer_decoder.1} parent=5 // pred_region
        // Predicated region
        $region41: #{transformer_decoder.1} parent=39 // pred_check
          %p638 = pneg %p173
        $region42: #{transformer_decoder.1} parent=39 // pred_check_branch
          %640 = sbr.rel (%p638) target = $region44
        $region43: #{transformer_decoder.1} parent=39 // pred_region
          %p641 = scmp.lt.s32.totalorder %s45, 1
          %s642 = scalar_select %p641, %s45, 1
          %s643 = smul.addr %s642, 4
          %s644 = smul.addr %s643, 8
          %s645 = scalar_lea.vmem %s4, %s644
        $region44: #{transformer_decoder.1} parent=39 // pred_fallthru
          _
        // Predicated region
        $region45: #{transformer_decoder.1} parent=39 // pred_check
          %p646 = pneg %p199
        $region46: #{transformer_decoder.1} parent=39 // pred_check_branch
          %648 = sbr.rel (%p646) target = $region48
        $region47: #{transformer_decoder.1} parent=39 // pred_region
          %p649 = scmp.lt.s32.totalorder %s45, 1
          %s650 = scalar_select %p649, %s45, 1
          %s651 = smul.addr %s650, 4
          %s652 = smul.addr %s651, 8
          %s653 = scalar_lea.vmem %s5, %s652
        $region48: #{transformer_decoder.1} parent=39 // pred_fallthru
          _
        // Predicated region
        $region49: #{transformer_decoder.1} parent=39 // pred_check
          %p654 = pneg %p225
        $region50: #{transformer_decoder.1} parent=39 // pred_check_branch
          %656 = sbr.rel (%p654) target = $region52
        $region51: #{transformer_decoder.1} parent=39 // pred_region
          %p657 = scmp.lt.s32.totalorder %s45, 1
          %s658 = scalar_select %p657, %s45, 1
          %s659 = smul.addr %s658, 4
          %s660 = smul.addr %s659, 8
          %s661 = scalar_lea.vmem %s6, %s660
        $region52: #{transformer_decoder.1} parent=39 // pred_fallthru
          _
        // Predicated region
        $region53: #{transformer_decoder.1} parent=39 // pred_check
          %p662 = pneg %p251
        $region54: #{transformer_decoder.1} parent=39 // pred_check_branch
          %664 = sbr.rel (%p662) target = $region56
        $region55: #{transformer_decoder.1} parent=39 // pred_region
          %p665 = scmp.lt.s32.totalorder %s45, 1
          %s666 = scalar_select %p665, %s45, 1
          %s667 = smul.addr %s666, 4
          %s668 = smul.addr %s667, 8
          %s669 = scalar_lea.vmem %s7, %s668
        $region56: #{transformer_decoder.1} parent=39 // pred_fallthru
          _
        // Predicated region
        $region57: #{transformer_decoder.1} parent=39 // pred_check
          %p670 = pneg %p277
        $region58: #{transformer_decoder.1} parent=39 // pred_check_branch
          %672 = sbr.rel (%p670) target = $region60
        $region59: #{transformer_decoder.1} parent=39 // pred_region
          %p673 = scmp.lt.s32.totalorder %s45, 1
          %s674 = scalar_select %p673, %s45, 1
          %s675 = smul.addr %s674, 4
          %s676 = smul.addr %s675, 8
          %s677 = scalar_lea.vmem %s8, %s676
        $region60: #{transformer_decoder.1} parent=39 // pred_fallthru
          _
        // Predicated region
        $region61: #{transformer_decoder.1} parent=39 // pred_check
          %p678 = pneg %p303
        $region62: #{transformer_decoder.1} parent=39 // pred_check_branch
          %680 = sbr.rel (%p678) target = $region64
        $region63: #{transformer_decoder.1} parent=39 // pred_region
          %p681 = scmp.lt.s32.totalorder %s45, 1
          %s682 = scalar_select %p681, %s45, 1
          %s683 = smul.addr %s682, 4
          %s684 = smul.addr %s683, 8
          %s685 = scalar_lea.vmem %s9, %s684
        $region64: #{transformer_decoder.1} parent=39 // pred_fallthru
          _
        // Predicated region
        $region65: #{transformer_decoder.1} parent=39 // pred_check
          %p686 = pneg %p329
        $region66: #{transformer_decoder.1} parent=39 // pred_check_branch
          %688 = sbr.rel (%p686) target = $region68
        $region67: #{transformer_decoder.1} parent=39 // pred_region
          %s689 = sand.u32 %s319, 1
          %s690 = scalar_lea.sflag [#allocation3], %s689
          %s691 = sand.u32 %s319, 1
          %s692 = smul.addr %s691, 32
          %s693 = scalar_lea.vmem [#allocation2], %s692
          %s695 = ssub.s32 512, 512
          %696 = vsyncadd %s690, %s695
          %s697 = smul.addr %s45, 4
          %s698 = smul.addr %s697, 128
          %s699 = scalar_lea.hbm %s10, %s698
          %s700 = sshll.u32 %s693, 4
          %s701 = int_to_ptr.vmem [resolvable:$true] %s700
          %706 = dma.hbm_to_vmem [thread:$0]  %s699, 512, %s701, %s690, 128, 128, 8
        $region68: #{transformer_decoder.1} parent=39 // pred_fallthru
          _
        // Predicated region
        $region69: #{transformer_decoder.1} parent=39 // pred_check
          %p707 = pneg %p355
        $region70: #{transformer_decoder.1} parent=39 // pred_check_branch
          %709 = sbr.rel (%p707) target = $region72
        $region71: #{transformer_decoder.1} parent=39 // pred_region
          %s710 = sand.u32 %s37, 1
          %s711 = scalar_lea.sflag [#allocation6], %s710
          %s712 = sand.u32 %s345, 1
          %s713 = smul.addr %s712, 32
          %s714 = scalar_lea.vmem [#allocation5], %s713
          %s716 = ssub.s32 512, 512
          %717 = vsyncadd %s711, %s716
          %s718 = smul.addr %s45, 4
          %s719 = smul.addr %s718, 128
          %s720 = scalar_lea.hbm %s11, %s719
          %s721 = sshll.u32 %s714, 4
          %s722 = int_to_ptr.vmem [resolvable:$true] %s721
          %727 = dma.hbm_to_vmem [thread:$0]  %s720, 512, %s722, %s711, 128, 128, 8
        $region72: #{transformer_decoder.1} parent=39 // pred_fallthru
          _
        // Predicated region
        $region73: #{transformer_decoder.1} parent=39 // pred_check
          %p728 = pneg %p381
        $region74: #{transformer_decoder.1} parent=39 // pred_check_branch
          %730 = sbr.rel (%p728) target = $region76
        $region75: #{transformer_decoder.1} parent=39 // pred_region
          %s731 = sand.u32 %s37, 1
          %s732 = scalar_lea.sflag [#allocation6], %s731
          %s733 = sand.u32 %s371, 1
          %s734 = smul.addr %s733, 32
          %s735 = scalar_lea.vmem [#allocation7], %s734
          %s737 = ssub.s32 512, 512
          %738 = vsyncadd %s732, %s737
          %s739 = smul.addr %s45, 4
          %s740 = smul.addr %s739, 128
          %s741 = scalar_lea.hbm %s12, %s740
          %s742 = sshll.u32 %s735, 4
          %s743 = int_to_ptr.vmem [resolvable:$true] %s742
          %748 = dma.hbm_to_vmem [thread:$0]  %s741, 512, %s743, %s732, 128, 128, 8
        $region76: #{transformer_decoder.1} parent=39 // pred_fallthru
          _
        // Predicated region
        $region77: #{transformer_decoder.1} parent=39 // pred_check
          %p749 = pneg %p407
        $region78: #{transformer_decoder.1} parent=39 // pred_check_branch
          %751 = sbr.rel (%p749) target = $region80
        $region79: #{transformer_decoder.1} parent=39 // pred_region
          %p752 = scmp.lt.s32.totalorder %s45, 1
          %s753 = scalar_select %p752, %s45, 1
          %s754 = smul.addr %s753, 8
          %s755 = smul.addr %s754, 8
          %s756 = scalar_lea.vmem %s13, %s755
        $region80: #{transformer_decoder.1} parent=39 // pred_fallthru
          _
        // Predicated region
        $region81: #{transformer_decoder.1} parent=39 // pred_check
          %p757 = pneg %p433
        $region82: #{transformer_decoder.1} parent=39 // pred_check_branch
          %759 = sbr.rel (%p757) target = $region84
        $region83: #{transformer_decoder.1} parent=39 // pred_region
          %s760 = sand.u32 %s37, 1
          %s761 = scalar_lea.sflag [#allocation9], %s760
          %s762 = sand.u32 %s423, 1
          %s763 = scalar_lea.vmem [#allocation8], %s762
          %s765 = ssub.s32 16, 16
          %766 = vsyncadd %s761, %s765
          %s767 = smul.addr %s45, 16
          %s768 = scalar_lea.hbm %s14, %s767
          %s770 = sshll.u32 %s763, 4
          %s771 = int_to_ptr.vmem [resolvable:$true] %s770
          %773 = dma.hbm_to_vmem [thread:$0]  %s768, 16, %s771, %s761
        $region84: #{transformer_decoder.1} parent=39 // pred_fallthru
          _
        // Predicated region
        $region85: #{transformer_decoder.1} parent=39 // pred_check
          %p774 = pneg %p459
        $region86: #{transformer_decoder.1} parent=39 // pred_check_branch
          %776 = sbr.rel (%p774) target = $region88
        $region87: #{transformer_decoder.1} parent=39 // pred_region
          %p777 = scmp.lt.s32.totalorder %s45, 1
          %s778 = scalar_select %p777, %s45, 1
          %s779 = smul.addr %s778, 2
          %s780 = smul.addr %s779, 8
          %s781 = scalar_lea.vmem %s15, %s780
        $region88: #{transformer_decoder.1} parent=39 // pred_fallthru
          _
      $region40: #{transformer_decoder.1} parent=5 // pred_fallthru
        _
      %p782 = scmp.le.s32.totalorder 1, %s37
      %p783 = scmp.lt.s32.totalorder %s37, 3
      %p784 = pnand %p782, %p783
      %p785 = pneg %p784
      // Predicated region
      $region89: #{transformer_decoder.1} parent=5 // pred_check
        _
      $region90: #{transformer_decoder.1} parent=5 // pred_check_branch
        %787 = sbr.rel (%p784) target = $region92
      $region91: #{transformer_decoder.1} parent=5 // pred_region
        %s788 = ssub.s32 %s37, 1
        %s789 = sand.u32 %s322, 1
        %s790 = scalar_lea.sflag [#allocation3], %s789
        %s791 = sand.u32 %s322, 1
        %s792 = smul.addr %s791, 32
        %s793 = scalar_lea.vmem [#allocation2], %s792
        // Predicated region
        $region93: #{transformer_decoder.1} parent=91 // pred_check
          %p794 = pneg %p335
        $region94: #{transformer_decoder.1} parent=91 // pred_check_branch
          %796 = sbr.rel (%p794) target = $region96
        $region95: #{transformer_decoder.1} parent=91 // pred_region
          %797 = dma.done %s790, 512
        $region96: #{transformer_decoder.1} parent=91 // pred_fallthru
          _
        %s798 = sand.u32 %s42, 1
        %s799 = scalar_lea.sflag [#allocation6], %s798
        %s800 = sand.u32 %s348, 1
        %s801 = smul.addr %s800, 32
        %s802 = scalar_lea.vmem [#allocation5], %s801
        // Predicated region
        $region97: #{transformer_decoder.1} parent=91 // pred_check
          %p803 = pneg %p361
        $region98: #{transformer_decoder.1} parent=91 // pred_check_branch
          %805 = sbr.rel (%p803) target = $region100
        $region99: #{transformer_decoder.1} parent=91 // pred_region
          %806 = dma.done %s799, 512
        $region100: #{transformer_decoder.1} parent=91 // pred_fallthru
          _
        %s807 = sand.u32 %s42, 1
        %s808 = scalar_lea.sflag [#allocation6], %s807
        %s809 = sand.u32 %s374, 1
        %s810 = smul.addr %s809, 32
        %s811 = scalar_lea.vmem [#allocation7], %s810
        // Predicated region
        $region101: #{transformer_decoder.1} parent=91 // pred_check
          %p812 = pneg %p387
        $region102: #{transformer_decoder.1} parent=91 // pred_check_branch
          %814 = sbr.rel (%p812) target = $region104
        $region103: #{transformer_decoder.1} parent=91 // pred_region
          %815 = dma.done %s808, 512
        $region104: #{transformer_decoder.1} parent=91 // pred_fallthru
          _
        %s816 = sand.u32 %s42, 1
        %s817 = scalar_lea.sflag [#allocation9], %s816
        %s818 = sand.u32 %s426, 1
        %s819 = scalar_lea.vmem [#allocation8], %s818
        // Predicated region
        $region105: #{transformer_decoder.1} parent=91 // pred_check
          %p820 = pneg %p439
        $region106: #{transformer_decoder.1} parent=91 // pred_check_branch
          %822 = sbr.rel (%p820) target = $region108
        $region107: #{transformer_decoder.1} parent=91 // pred_region
          %823 = dma.done %s817, 16
        $region108: #{transformer_decoder.1} parent=91 // pred_fallthru
          _
        // Predicated region
        $region109: #{transformer_decoder.1} parent=91 // pred_check
          %p824 = pneg %p486
        $region110: #{transformer_decoder.1} parent=91 // pred_check_branch
          %826 = sbr.rel (%p824) target = $region112
        $region111: #{transformer_decoder.1} parent=91 // pred_region
          %827 = dma.done [#allocation9], 16
        $region112: #{transformer_decoder.1} parent=91 // pred_fallthru
          _
        // Predicated region
        $region113: #{transformer_decoder.1} parent=91 // pred_check
          %p828 = pneg %p507
        $region114: #{transformer_decoder.1} parent=91 // pred_check_branch
          %830 = sbr.rel (%p828) target = $region116
        $region115: #{transformer_decoder.1} parent=91 // pred_region
          %831 = dma.done [#allocation12], 16
        $region116: #{transformer_decoder.1} parent=91 // pred_fallthru
          _
        %s832 = smul.u32 2, %s46
        %p833 = scmp.lt.s32.totalorder %s832, 1
        %s834 = scalar_select %p833, %s832, 1
        %s835 = smul.addr %s834, 8
        %s836 = scalar_lea.vmem %s0, %s835
        %p837 = pneg %p75
        %p838 = pneg %p72
        %s839 = smul.u32 2, %s46
        %p840 = scmp.lt.s32.totalorder %s839, 1
        %s841 = scalar_select %p840, %s839, 1
        %s842 = smul.addr %s841, 2
        %s843 = smul.addr %s842, 8
        %s844 = scalar_lea.vmem %s1, %s843
        %p845 = pneg %p101
        %p846 = pneg %p98
        %s847 = smul.u32 2, %s46
        %p848 = scmp.lt.s32.totalorder %s847, 1
        %s849 = scalar_select %p848, %s847, 1
        %s850 = smul.addr %s849, 8
        %s851 = scalar_lea.vmem %s2, %s850
        %p852 = pneg %p127
        %p853 = pneg %p124
        %s854 = smul.u32 2, %s46
        %p855 = scmp.lt.s32.totalorder %s854, 1
        %s856 = scalar_select %p855, %s854, 1
        %s857 = smul.addr %s856, 2
        %s858 = smul.addr %s857, 8
        %s859 = scalar_lea.vmem %s3, %s858
        %p860 = pneg %p153
        %p861 = pneg %p150
        %p862 = scmp.lt.s32.totalorder %s47, 1
        %s863 = scalar_select %p862, %s47, 1
        %s864 = smul.addr %s863, 4
        %s865 = smul.addr %s864, 8
        %s866 = scalar_lea.vmem %s4, %s865
        %p867 = pneg %p179
        %p868 = pneg %p176
        %p869 = scmp.lt.s32.totalorder %s47, 1
        %s870 = scalar_select %p869, %s47, 1
        %s871 = smul.addr %s870, 4
        %s872 = smul.addr %s871, 8
        %s873 = scalar_lea.vmem %s5, %s872
        %p874 = pneg %p205
        %p875 = pneg %p202
        %p876 = scmp.lt.s32.totalorder %s47, 1
        %s877 = scalar_select %p876, %s47, 1
        %s878 = smul.addr %s877, 4
        %s879 = smul.addr %s878, 8
        %s880 = scalar_lea.vmem %s6, %s879
        %p881 = pneg %p231
        %p882 = pneg %p228
        %p883 = scmp.lt.s32.totalorder %s47, 1
        %s884 = scalar_select %p883, %s47, 1
        %s885 = smul.addr %s884, 4
        %s886 = smul.addr %s885, 8
        %s887 = scalar_lea.vmem %s7, %s886
        %p888 = pneg %p257
        %p889 = pneg %p254
        %p890 = scmp.lt.s32.totalorder %s47, 1
        %s891 = scalar_select %p890, %s47, 1
        %s892 = smul.addr %s891, 4
        %s893 = smul.addr %s892, 8
        %s894 = scalar_lea.vmem %s8, %s893
        %p895 = pneg %p283
        %p896 = pneg %p280
        %p897 = scmp.lt.s32.totalorder %s47, 1
        %s898 = scalar_select %p897, %s47, 1
        %s899 = smul.addr %s898, 4
        %s900 = smul.addr %s899, 8
        %s901 = scalar_lea.vmem %s9, %s900
        %p902 = pneg %p309
        %p903 = pneg %p306
        %s904 = sand.u32 %s322, 1
        %s905 = scalar_lea.sflag [#allocation3], %s904
        %s906 = sand.u32 %s322, 1
        %s907 = smul.addr %s906, 32
        %s908 = scalar_lea.vmem [#allocation2], %s907
        %p909 = pneg %p335
        %p910 = pneg %p332
        %s911 = sand.u32 %s42, 1
        %s912 = scalar_lea.sflag [#allocation6], %s911
        %s913 = sand.u32 %s348, 1
        %s914 = smul.addr %s913, 32
        %s915 = scalar_lea.vmem [#allocation5], %s914
        %p916 = pneg %p361
        %p917 = pneg %p358
        %s918 = sand.u32 %s42, 1
        %s919 = scalar_lea.sflag [#allocation6], %s918
        %s920 = sand.u32 %s374, 1
        %s921 = smul.addr %s920, 32
        %s922 = scalar_lea.vmem [#allocation7], %s921
        %p923 = pneg %p387
        %p924 = pneg %p384
        %p925 = scmp.lt.s32.totalorder %s47, 1
        %s926 = scalar_select %p925, %s47, 1
        %s927 = smul.addr %s926, 8
        %s928 = smul.addr %s927, 8
        %s929 = scalar_lea.vmem %s13, %s928
        %p930 = pneg %p413
        %p931 = pneg %p410
        %s932 = sand.u32 %s42, 1
        %s933 = scalar_lea.sflag [#allocation9], %s932
        %s934 = sand.u32 %s426, 1
        %s935 = scalar_lea.vmem [#allocation8], %s934
        %p936 = pneg %p439
        %p937 = pneg %p436
        %p938 = scmp.lt.s32.totalorder %s47, 1
        %s939 = scalar_select %p938, %s47, 1
        %s940 = smul.addr %s939, 2
        %s941 = smul.addr %s940, 8
        %s942 = scalar_lea.vmem %s15, %s941
        %p943 = pneg %p465
        %p944 = pneg %p462
        %p945 = pneg %p486
        %p946 = pneg %p483
        %p947 = pneg %p507
        %p948 = pneg %p504
        %p949 = pneg %p533
        %p950 = pneg %p530
        %s951 = smul.u32 2, %s46
        %p952 = scmp.lt.s32.totalorder %s951, 1
        %s953 = scalar_select %p952, %s951, 1
        %s954 = smul.addr %s953, 8
        %s955 = scalar_lea.vmem %s18, %s954
        %p956 = pneg %p559
        %p957 = pneg %p556
        %s958 = smul.u32 2, %s46
        %p959 = scmp.lt.s32.totalorder %s958, 1
        %s960 = scalar_select %p959, %s958, 1
        %s961 = smul.addr %s960, 8
        %s962 = scalar_lea.vmem %s0, %s961
        %s963 = smul.u32 2, %s46
        %s964 = smul.u32 2, %s46
        %p965 = scmp.lt.s32.totalorder %s964, 1
        %s966 = scalar_select %p965, %s964, 1
        %s967 = smul.addr %s966, 2
        %s968 = smul.addr %s967, 8
        %s969 = scalar_lea.vmem %s1, %s968
        %s970 = smul.u32 2, %s46
        %s971 = smul.u32 2, %s46
        %p972 = scmp.lt.s32.totalorder %s971, 1
        %s973 = scalar_select %p972, %s971, 1
        %s974 = smul.addr %s973, 8
        %s975 = scalar_lea.vmem %s2, %s974
        %s976 = smul.u32 2, %s46
        %s977 = smul.u32 2, %s46
        %p978 = scmp.lt.s32.totalorder %s977, 1
        %s979 = scalar_select %p978, %s977, 1
        %s980 = smul.addr %s979, 2
        %s981 = smul.addr %s980, 8
        %s982 = scalar_lea.vmem %s3, %s981
        %s983 = smul.u32 2, %s46
        %p984 = scmp.lt.s32.totalorder %s47, 1
        %s985 = scalar_select %p984, %s47, 1
        %s986 = smul.addr %s985, 4
        %s987 = smul.addr %s986, 8
        %s988 = scalar_lea.vmem %s4, %s987
        %p989 = scmp.lt.s32.totalorder %s47, 1
        %s990 = scalar_select %p989, %s47, 1
        %s991 = smul.addr %s990, 4
        %s992 = smul.addr %s991, 8
        %s993 = scalar_lea.vmem %s5, %s992
        %p994 = scmp.lt.s32.totalorder %s47, 1
        %s995 = scalar_select %p994, %s47, 1
        %s996 = smul.addr %s995, 4
        %s997 = smul.addr %s996, 8
        %s998 = scalar_lea.vmem %s6, %s997
        %p999 = scmp.lt.s32.totalorder %s47, 1
        %s1000 = scalar_select %p999, %s47, 1
        %s1001 = smul.addr %s1000, 4
        %s1002 = smul.addr %s1001, 8
        %s1003 = scalar_lea.vmem %s7, %s1002
        %p1004 = scmp.lt.s32.totalorder %s47, 1
        %s1005 = scalar_select %p1004, %s47, 1
        %s1006 = smul.addr %s1005, 4
        %s1007 = smul.addr %s1006, 8
        %s1008 = scalar_lea.vmem %s8, %s1007
        %p1009 = scmp.lt.s32.totalorder %s47, 1
        %s1010 = scalar_select %p1009, %s47, 1
        %s1011 = smul.addr %s1010, 4
        %s1012 = smul.addr %s1011, 8
        %s1013 = scalar_lea.vmem %s9, %s1012
        %p1014 = scmp.lt.s32.totalorder %s47, 1
        %s1015 = scalar_select %p1014, %s47, 1
        %s1016 = smul.addr %s1015, 8
        %s1017 = smul.addr %s1016, 8
        %s1018 = scalar_lea.vmem %s13, %s1017
        %p1019 = scmp.lt.s32.totalorder %s47, 1
        %s1020 = scalar_select %p1019, %s47, 1
        %s1021 = smul.addr %s1020, 2
        %s1022 = smul.addr %s1021, 8
        %s1023 = scalar_lea.vmem %s15, %s1022
        %s1024 = smul.u32 2, %s46
        %p1025 = scmp.lt.s32.totalorder %s1024, 1
        %s1026 = scalar_select %p1025, %s1024, 1
        %s1027 = smul.addr %s1026, 8
        %s1028 = scalar_lea.vmem %s18, %s1027
        %s1029 = smul.u32 2, %s46
        %s1030 = smul.u32 2, %s46
        %p1031 = scmp.eq.s32.totalorder %s47, 0
        // Predicated region
        $region117: #{transformer_decoder.1} parent=91 // pred_check
          %p1032 = pneg %p1031
        $region118: #{transformer_decoder.1} parent=91 // pred_check_branch
          %1034 = sbr.rel (%p1032) target = $region120
        $region119: #{transformer_decoder.1} parent=91 // pred_region
          %v1035 = vld [vmem:[%s962] sm:$0xff]
          %v1036 = vld [vmem:[%s962 + $0x8] sm:$0xff]
          %vm1037 = vcmask 261120
          %1038 = vst.msk [vmem:[%s1028] sm:$0xff] %vm1037, %v1035
          %1039 = vst.msk [vmem:[%s1028 + $0x8] sm:$0xff] %vm1037, %v1036
        $region120: #{transformer_decoder.1} parent=91 // pred_fallthru
          _
        %v1040 = vld [vmem:[%s1028] sm:$0xff]
        %v1041 = vld [vmem:[%s1028 + $0x8] sm:$0xff]
        %v1042 = vld [vmem:[%s975] sm:$0xff]
        %v1043 = vld [vmem:[%s975 + $0x8] sm:$0xff]
        %v1044 = vld [vmem:[%s969] sm:$0xff]
        %v1045 = vld [vmem:[%s969 + $0x8] sm:$0xff]
        %v1046 = vld [vmem:[%s969 + $0x10] sm:$0xff]
        %v1047 = vld [vmem:[%s969 + $0x18] sm:$0xff]
        %v1048 = vld [vmem:[%s982] sm:$0xff]
        %v1049 = vld [vmem:[%s982 + $0x8] sm:$0xff]
        %v1050 = vld [vmem:[%s982 + $0x10] sm:$0xff]
        %v1051 = vld [vmem:[%s982 + $0x18] sm:$0xff]
        %v1052 = vld [vmem:[%s1023] sm:$0xff]
        %v1053 = vld [vmem:[%s1023 + $0x8] sm:$0x7f]
        %v1054 = vld [vmem:[%s819] sm:$0x1]
        %v1055 = vadd.f32 %v1040, %v1042
        %v1056 = vadd.f32 %v1041, %v1043
        %v1057 = vld [vmem:[%s988] sm:$0xff]
        %v1058 = vld [vmem:[%s988 + $0x8] sm:$0xff]
        %v1059 = vld [vmem:[%s988 + $0x10] sm:$0xff]
        %v1060 = vld [vmem:[%s988 + $0x18] sm:$0xff]
        %v1061 = vlaneseq
        %v1062 = vshrl.u32 %v1061, 7
        %v1063 = vsub.s32 0, %v1062
        %v1064 = vrot.slane %v1052, %v1063
        %vm1065 = vcmask 261120
        %v1067 = vsel %vm1065, %v1055, 0
        %v1070 = vsel %vm1065, %v1056, 0
        %1072 = vmatprep.subr.mxu0 0.0
        %1073 = vmatpush1.msra.mxu0 0.0
        %1074 = vmatprep.subr.mxu0 0.0
        %1075 = vmatpush1.msra.mxu0 0.0
        %1076 = vmatprep.subr.mxu0 0.0
        %1077 = vmatpush1.msra.mxu0 0.0
        %1078 = vmatprep.subr.mxu0 0.0
        %1079 = vmatpush1.msra.mxu0 0.0
        %1080 = vmatprep.subr.mxu0 0.0
        %1081 = vmatpush1.msra.mxu0 0.0
        %1082 = vmatprep.subr.mxu0 0.0
        %1083 = vmatpush1.msra.mxu0 0.0
        %1084 = vmatprep.subr.mxu0 0.0
        %1085 = vmatpush1.msra.mxu0 0.0
        %1086 = vmatprep.subr.mxu0 0.0
        %1087 = vmatpush1.msra.mxu0 0.0
        %1088 = vmatprep.subr.mxu0 0.0
        %1089 = vmatpush1.msra.mxu0 0.0
        %1090 = vmatprep.subr.mxu0 0.0
        %1091 = vmatpush1.msra.mxu0 0.0
        %1092 = vmatprep.subr.mxu0 0.0
        %1093 = vmatpush1.msra.mxu0 0.0
        %1094 = vmatprep.subr.mxu0 0.0
        %1095 = vmatpush1.msra.mxu0 0.0
        %1096 = vmatprep.subr.mxu0 0.0
        %1097 = vmatpush1.msra.mxu0 %v1060
        %1098 = vmatprep.subr.mxu0 0.0
        %1099 = vmatpush1.msra.mxu0 %v1059
        %1100 = vmatprep.subr.mxu0 0.0
        %1101 = vmatpush1.msra.mxu0 %v1058
        %1102 = vmatprep.subr.mxu0 0.0
        %1103 = vmatpush1.msra.mxu0 %v1057
        %1104 = vmatprep.subr.mxu0 0.0
        %1105 = vmatpush2.msra.mxu0 0.0
        %1106 = vmatprep.subr.mxu0 0.0
        %1107 = vmatpush2.msra.mxu0 0.0
        %1108 = vmatprep.subr.mxu0 0.0
        %1109 = vmatpush2.msra.mxu0 0.0
        %1110 = vmatprep.subr.mxu0 0.0
        %1111 = vmatpush2.msra.mxu0 0.0
        %1112 = vmatprep.subr.mxu0 0.0
        %1113 = vmatpush2.msra.mxu0 0.0
        %1114 = vmatprep.subr.mxu0 0.0
        %1115 = vmatpush2.msra.mxu0 0.0
        %1116 = vmatprep.subr.mxu0 0.0
        %1117 = vmatpush2.msra.mxu0 0.0
        %1118 = vmatprep.subr.mxu0 0.0
        %1119 = vmatpush2.msra.mxu0 0.0
        %1120 = vmatprep.subr.mxu0 0.0
        %1121 = vmatpush2.msra.mxu0 0.0
        %1122 = vmatprep.subr.mxu0 0.0
        %1123 = vmatpush2.msra.mxu0 0.0
        %1124 = vmatprep.subr.mxu0 0.0
        %1125 = vmatpush2.msra.mxu0 0.0
        %1126 = vmatprep.subr.mxu0 0.0
        %1127 = vmatpush2.msra.mxu0 0.0
        %1128 = vmatprep.subr.mxu0 0.0
        %1129 = vmatpush2.msra.mxu0 0.0
        %1130 = vmatprep.subr.mxu0 0.0
        %1131 = vmatpush2.msra.mxu0 0.0
        %1132 = vmatprep.subr.mxu0 0.0
        %1133 = vmatpush2.msra.mxu0 0.0
        %1134 = vmatprep.subr.mxu0 0.0
        %1135 = vmatpush2.msra.mxu0 0.0
        %1136 = vmatprep.mubr.f32.mxu0 0.0
        %1137 = vmatmul.mubr.f32.gmra.mxu0 %v1067
        %v1138 = vpop.f32.mrf.mxu0
        %v1139 = vadd.f32 %v1064, %v1138
        %v1140 = vpop.f32.mrf.mxu0
        %1141 = vmatprep.mubr.f32.mxu0 0.0
        %1142 = vmatmul.mubr.f32.gmra.mxu0 %v1070
        %v1143 = vpop.f32.mrf.mxu0
        %v1144 = vadd.f32 %v1064, %v1143
        %v1145 = vpop.f32.mrf.mxu0
        %1146 = vdwg.mxu0
        %v1147 = vld [vmem:[%s993] sm:$0xff]
        %v1148 = vld [vmem:[%s993 + $0x8] sm:$0xff]
        %v1149 = vld [vmem:[%s993 + $0x10] sm:$0xff]
        %v1150 = vld [vmem:[%s993 + $0x18] sm:$0xff]
        %v1151 = vlaneseq
        %v1152 = vshrl.u32 %v1151, 7
        %v1153 = vsub.s32 1, %v1152
        %v1154 = vrot.slane %v1052, %v1153
        %1155 = vmatprep.subr.mxu0 0.0
        %1156 = vmatpush1.msra.mxu0 0.0
        %1157 = vmatprep.subr.mxu0 0.0
        %1158 = vmatpush1.msra.mxu0 0.0
        %1159 = vmatprep.subr.mxu0 0.0
        %1160 = vmatpush1.msra.mxu0 0.0
        %1161 = vmatprep.subr.mxu0 0.0
        %1162 = vmatpush1.msra.mxu0 0.0
        %1163 = vmatprep.subr.mxu0 0.0
        %1164 = vmatpush1.msra.mxu0 0.0
        %1165 = vmatprep.subr.mxu0 0.0
        %1166 = vmatpush1.msra.mxu0 0.0
        %1167 = vmatprep.subr.mxu0 0.0
        %1168 = vmatpush1.msra.mxu0 0.0
        %1169 = vmatprep.subr.mxu0 0.0
        %1170 = vmatpush1.msra.mxu0 0.0
        %1171 = vmatprep.subr.mxu0 0.0
        %1172 = vmatpush1.msra.mxu0 0.0
        %1173 = vmatprep.subr.mxu0 0.0
        %1174 = vmatpush1.msra.mxu0 0.0
        %1175 = vmatprep.subr.mxu0 0.0
        %1176 = vmatpush1.msra.mxu0 0.0
        %1177 = vmatprep.subr.mxu0 0.0
        %1178 = vmatpush1.msra.mxu0 0.0
        %1179 = vmatprep.subr.mxu0 0.0
        %1180 = vmatpush1.msra.mxu0 %v1150
        %1181 = vmatprep.subr.mxu0 0.0
        %1182 = vmatpush1.msra.mxu0 %v1149
        %1183 = vmatprep.subr.mxu0 0.0
        %1184 = vmatpush1.msra.mxu0 %v1148
        %1185 = vmatprep.subr.mxu0 0.0
        %1186 = vmatpush1.msra.mxu0 %v1147
        %1187 = vmatprep.subr.mxu0 0.0
        %1188 = vmatpush2.msra.mxu0 0.0
        %1189 = vmatprep.subr.mxu0 0.0
        %1190 = vmatpush2.msra.mxu0 0.0
        %1191 = vmatprep.subr.mxu0 0.0
        %1192 = vmatpush2.msra.mxu0 0.0
        %1193 = vmatprep.subr.mxu0 0.0
        %1194 = vmatpush2.msra.mxu0 0.0
        %1195 = vmatprep.subr.mxu0 0.0
        %1196 = vmatpush2.msra.mxu0 0.0
        %1197 = vmatprep.subr.mxu0 0.0
        %1198 = vmatpush2.msra.mxu0 0.0
        %1199 = vmatprep.subr.mxu0 0.0
        %1200 = vmatpush2.msra.mxu0 0.0
        %1201 = vmatprep.subr.mxu0 0.0
        %1202 = vmatpush2.msra.mxu0 0.0
        %1203 = vmatprep.subr.mxu0 0.0
        %1204 = vmatpush2.msra.mxu0 0.0
        %1205 = vmatprep.subr.mxu0 0.0
        %1206 = vmatpush2.msra.mxu0 0.0
        %1207 = vmatprep.subr.mxu0 0.0
        %1208 = vmatpush2.msra.mxu0 0.0
        %1209 = vmatprep.subr.mxu0 0.0
        %1210 = vmatpush2.msra.mxu0 0.0
        %1211 = vmatprep.subr.mxu0 0.0
        %1212 = vmatpush2.msra.mxu0 0.0
        %1213 = vmatprep.subr.mxu0 0.0
        %1214 = vmatpush2.msra.mxu0 0.0
        %1215 = vmatprep.subr.mxu0 0.0
        %1216 = vmatpush2.msra.mxu0 0.0
        %1217 = vmatprep.subr.mxu0 0.0
        %1218 = vmatpush2.msra.mxu0 0.0
        %1219 = vmatprep.mubr.f32.mxu0 0.0
        %1220 = vmatmul.mubr.f32.gmra.mxu0 %v1067
        %v1221 = vpop.f32.mrf.mxu0
        %v1222 = vadd.f32 %v1154, %v1221
        %v1223 = vpop.f32.mrf.mxu0
        %1224 = vmatprep.mubr.f32.mxu0 0.0
        %1225 = vmatmul.mubr.f32.gmra.mxu0 %v1070
        %v1226 = vpop.f32.mrf.mxu0
        %v1227 = vadd.f32 %v1154, %v1226
        %v1228 = vpop.f32.mrf.mxu0
        %1229 = vdwg.mxu0
        %v1230 = vld [vmem:[%s998] sm:$0xff]
        %v1231 = vld [vmem:[%s998 + $0x8] sm:$0xff]
        %v1232 = vld [vmem:[%s998 + $0x10] sm:$0xff]
        %v1233 = vld [vmem:[%s998 + $0x18] sm:$0xff]
        %v1234 = vlaneseq
        %v1235 = vshrl.u32 %v1234, 7
        %v1236 = vsub.s32 2, %v1235
        %v1237 = vrot.slane %v1052, %v1236
        %v1239 = vsel %vm1065, %v1040, 0
        %v1242 = vsel %vm1065, %v1041, 0
        %1244 = vmatprep.subr.mxu0 0.0
        %1245 = vmatpush1.msra.mxu0 0.0
        %1246 = vmatprep.subr.mxu0 0.0
        %1247 = vmatpush1.msra.mxu0 0.0
        %1248 = vmatprep.subr.mxu0 0.0
        %1249 = vmatpush1.msra.mxu0 0.0
        %1250 = vmatprep.subr.mxu0 0.0
        %1251 = vmatpush1.msra.mxu0 0.0
        %1252 = vmatprep.subr.mxu0 0.0
        %1253 = vmatpush1.msra.mxu0 0.0
        %1254 = vmatprep.subr.mxu0 0.0
        %1255 = vmatpush1.msra.mxu0 0.0
        %1256 = vmatprep.subr.mxu0 0.0
        %1257 = vmatpush1.msra.mxu0 0.0
        %1258 = vmatprep.subr.mxu0 0.0
        %1259 = vmatpush1.msra.mxu0 0.0
        %1260 = vmatprep.subr.mxu0 0.0
        %1261 = vmatpush1.msra.mxu0 0.0
        %1262 = vmatprep.subr.mxu0 0.0
        %1263 = vmatpush1.msra.mxu0 0.0
        %1264 = vmatprep.subr.mxu0 0.0
        %1265 = vmatpush1.msra.mxu0 0.0
        %1266 = vmatprep.subr.mxu0 0.0
        %1267 = vmatpush1.msra.mxu0 0.0
        %1268 = vmatprep.subr.mxu0 0.0
        %1269 = vmatpush1.msra.mxu0 %v1233
        %1270 = vmatprep.subr.mxu0 0.0
        %1271 = vmatpush1.msra.mxu0 %v1232
        %1272 = vmatprep.subr.mxu0 0.0
        %1273 = vmatpush1.msra.mxu0 %v1231
        %1274 = vmatprep.subr.mxu0 0.0
        %1275 = vmatpush1.msra.mxu0 %v1230
        %1276 = vmatprep.subr.mxu0 0.0
        %1277 = vmatpush2.msra.mxu0 0.0
        %1278 = vmatprep.subr.mxu0 0.0
        %1279 = vmatpush2.msra.mxu0 0.0
        %1280 = vmatprep.subr.mxu0 0.0
        %1281 = vmatpush2.msra.mxu0 0.0
        %1282 = vmatprep.subr.mxu0 0.0
        %1283 = vmatpush2.msra.mxu0 0.0
        %1284 = vmatprep.subr.mxu0 0.0
        %1285 = vmatpush2.msra.mxu0 0.0
        %1286 = vmatprep.subr.mxu0 0.0
        %1287 = vmatpush2.msra.mxu0 0.0
        %1288 = vmatprep.subr.mxu0 0.0
        %1289 = vmatpush2.msra.mxu0 0.0
        %1290 = vmatprep.subr.mxu0 0.0
        %1291 = vmatpush2.msra.mxu0 0.0
        %1292 = vmatprep.subr.mxu0 0.0
        %1293 = vmatpush2.msra.mxu0 0.0
        %1294 = vmatprep.subr.mxu0 0.0
        %1295 = vmatpush2.msra.mxu0 0.0
        %1296 = vmatprep.subr.mxu0 0.0
        %1297 = vmatpush2.msra.mxu0 0.0
        %1298 = vmatprep.subr.mxu0 0.0
        %1299 = vmatpush2.msra.mxu0 0.0
        %1300 = vmatprep.subr.mxu0 0.0
        %1301 = vmatpush2.msra.mxu0 0.0
        %1302 = vmatprep.subr.mxu0 0.0
        %1303 = vmatpush2.msra.mxu0 0.0
        %1304 = vmatprep.subr.mxu0 0.0
        %1305 = vmatpush2.msra.mxu0 0.0
        %1306 = vmatprep.subr.mxu0 0.0
        %1307 = vmatpush2.msra.mxu0 0.0
        %1308 = vmatprep.mubr.f32.mxu0 0.0
        %1309 = vmatmul.mubr.f32.gmra.mxu0 %v1239
        %v1310 = vpop.f32.mrf.mxu0
        %v1311 = vadd.f32 %v1237, %v1310
        %v1312 = vpop.f32.mrf.mxu0
        %1313 = vmatprep.mubr.f32.mxu0 0.0
        %1314 = vmatmul.mubr.f32.gmra.mxu0 %v1242
        %v1315 = vpop.f32.mrf.mxu0
        %v1316 = vadd.f32 %v1237, %v1315
        %v1317 = vpop.f32.mrf.mxu0
        %1318 = vdwg.mxu0
        %v1319 = vmul.f32 %v1139, 0.35355338
        %vm1320 = vcmask 64512
        %v1322 = vsel %vm1320, %v1319, 0
        %v1325 = vsel %vm1320, %v1222, 0
        %1327 = vmatprep.subr.mxu0 0.0
        %1328 = vmatpush1.xpose.msra.mxu0 0.0
        %1329 = vmatprep.subr.mxu0 0.0
        %1330 = vmatpush1.xpose.msra.mxu0 0.0
        %1331 = vmatprep.subr.mxu0 0.0
        %1332 = vmatpush1.xpose.msra.mxu0 0.0
        %1333 = vmatprep.subr.mxu0 0.0
        %1334 = vmatpush1.xpose.msra.mxu0 0.0
        %1335 = vmatprep.subr.mxu0 0.0
        %1336 = vmatpush1.xpose.msra.mxu0 0.0
        %1337 = vmatprep.subr.mxu0 0.0
        %1338 = vmatpush1.xpose.msra.mxu0 0.0
        %1339 = vmatprep.subr.mxu0 0.0
        %1340 = vmatpush1.xpose.msra.mxu0 0.0
        %1341 = vmatprep.subr.mxu0 0.0
        %1342 = vmatpush1.xpose.msra.mxu0 0.0
        %1343 = vmatprep.subr.mxu0 0.0
        %1344 = vmatpush1.xpose.msra.mxu0 0.0
        %1345 = vmatprep.subr.mxu0 0.0
        %1346 = vmatpush1.xpose.msra.mxu0 0.0
        %1347 = vmatprep.subr.mxu0 0.0
        %1348 = vmatpush1.xpose.msra.mxu0 0.0
        %1349 = vmatprep.subr.mxu0 0.0
        %1350 = vmatpush1.xpose.msra.mxu0 0.0
        %1351 = vmatprep.subr.mxu0 0.0
        %1352 = vmatpush1.xpose.msra.mxu0 0.0
        %1353 = vmatprep.subr.mxu0 0.0
        %1354 = vmatpush1.xpose.msra.mxu0 0.0
        %1355 = vmatprep.subr.mxu0 0.0
        %1356 = vmatpush1.xpose.msra.mxu0 0.0
        %1357 = vmatprep.subr.mxu0 0.0
        %1358 = vmatpush1.xpose.msra.mxu0 %v1325
        %1359 = vmatprep.subr.mxu0 0.0
        %1360 = vmatpush2.xpose.msra.mxu0 0.0
        %1361 = vmatprep.subr.mxu0 0.0
        %1362 = vmatpush2.xpose.msra.mxu0 0.0
        %1363 = vmatprep.subr.mxu0 0.0
        %1364 = vmatpush2.xpose.msra.mxu0 0.0
        %1365 = vmatprep.subr.mxu0 0.0
        %1366 = vmatpush2.xpose.msra.mxu0 0.0
        %1367 = vmatprep.subr.mxu0 0.0
        %1368 = vmatpush2.xpose.msra.mxu0 0.0
        %1369 = vmatprep.subr.mxu0 0.0
        %1370 = vmatpush2.xpose.msra.mxu0 0.0
        %1371 = vmatprep.subr.mxu0 0.0
        %1372 = vmatpush2.xpose.msra.mxu0 0.0
        %1373 = vmatprep.subr.mxu0 0.0
        %1374 = vmatpush2.xpose.msra.mxu0 0.0
        %1375 = vmatprep.subr.mxu0 0.0
        %1376 = vmatpush2.xpose.msra.mxu0 0.0
        %1377 = vmatprep.subr.mxu0 0.0
        %1378 = vmatpush2.xpose.msra.mxu0 0.0
        %1379 = vmatprep.subr.mxu0 0.0
        %1380 = vmatpush2.xpose.msra.mxu0 0.0
        %1381 = vmatprep.subr.mxu0 0.0
        %1382 = vmatpush2.xpose.msra.mxu0 0.0
        %1383 = vmatprep.subr.mxu0 0.0
        %1384 = vmatpush2.xpose.msra.mxu0 0.0
        %1385 = vmatprep.subr.mxu0 0.0
        %1386 = vmatpush2.xpose.msra.mxu0 0.0
        %1387 = vmatprep.subr.mxu0 0.0
        %1388 = vmatpush2.xpose.msra.mxu0 0.0
        %1389 = vmatprep.subr.mxu0 0.0
        %1390 = vmatpush2.xpose.msra.mxu0 0.0
        %1391 = vmatprep.mubr.f32.mxu0 0.0
        %1392 = vmatmul.mubr.f32.gmra.mxu0 %v1322
        %v1393 = vpop.f32.mrf.mxu0
        %v1394 = vadd.f32 0.0, %v1393
        %v1395 = vpop.f32.mrf.mxu0
        %1396 = vdwg.mxu0
        %v1397 = vsel %vm1320, %v1394, -inf
        %1398 = vmax.xlane.f32.xlu0 %v1397
        %v1399 = vpop.xlane.xlu0 %1398
        %v1400 = vsub.f32 %v1394, %v1399
        %v1401 = vmul.f32 %v1400, 1.442695
        %v1402 = vpow.pop %v1401
        %v1403 = vsel %vm1320, %v1402, 0.0
        %1404 = vadd.xlane.f32.xlu0 %v1403
        %v1405 = vpop.xlane.xlu0 %1404
        %v1406 = vrcp.pop %v1405
        %v1407 = vmul.f32 %v1402, %v1406
        %v1409 = vsel %vm1320, %v1407, 0
        %1411 = vmatprep.subr.mxu0 0.0
        %1412 = vmatpush1.msra.mxu0 0.0
        %1413 = vmatprep.subr.mxu0 0.0
        %1414 = vmatpush1.msra.mxu0 0.0
        %1415 = vmatprep.subr.mxu0 0.0
        %1416 = vmatpush1.msra.mxu0 0.0
        %1417 = vmatprep.subr.mxu0 0.0
        %1418 = vmatpush1.msra.mxu0 0.0
        %1419 = vmatprep.subr.mxu0 0.0
        %1420 = vmatpush1.msra.mxu0 0.0
        %1421 = vmatprep.subr.mxu0 0.0
        %1422 = vmatpush1.msra.mxu0 0.0
        %1423 = vmatprep.subr.mxu0 0.0
        %1424 = vmatpush1.msra.mxu0 0.0
        %1425 = vmatprep.subr.mxu0 0.0
        %1426 = vmatpush1.msra.mxu0 0.0
        %1427 = vmatprep.subr.mxu0 0.0
        %1428 = vmatpush1.msra.mxu0 0.0
        %1429 = vmatprep.subr.mxu0 0.0
        %1430 = vmatpush1.msra.mxu0 0.0
        %1431 = vmatprep.subr.mxu0 0.0
        %1432 = vmatpush1.msra.mxu0 0.0
        %1433 = vmatprep.subr.mxu0 0.0
        %1434 = vmatpush1.msra.mxu0 0.0
        %1435 = vmatprep.subr.mxu0 0.0
        %1436 = vmatpush1.msra.mxu0 0.0
        %1437 = vmatprep.subr.mxu0 0.0
        %1438 = vmatpush1.msra.mxu0 0.0
        %1439 = vmatprep.subr.mxu0 0.0
        %1440 = vmatpush1.msra.mxu0 0.0
        %1441 = vmatprep.subr.mxu0 0.0
        %1442 = vmatpush1.msra.mxu0 %v1311
        %1443 = vmatprep.subr.mxu0 0.0
        %1444 = vmatpush2.msra.mxu0 0.0
        %1445 = vmatprep.subr.mxu0 0.0
        %1446 = vmatpush2.msra.mxu0 0.0
        %1447 = vmatprep.subr.mxu0 0.0
        %1448 = vmatpush2.msra.mxu0 0.0
        %1449 = vmatprep.subr.mxu0 0.0
        %1450 = vmatpush2.msra.mxu0 0.0
        %1451 = vmatprep.subr.mxu0 0.0
        %1452 = vmatpush2.msra.mxu0 0.0
        %1453 = vmatprep.subr.mxu0 0.0
        %1454 = vmatpush2.msra.mxu0 0.0
        %1455 = vmatprep.subr.mxu0 0.0
        %1456 = vmatpush2.msra.mxu0 0.0
        %1457 = vmatprep.subr.mxu0 0.0
        %1458 = vmatpush2.msra.mxu0 0.0
        %1459 = vmatprep.subr.mxu0 0.0
        %1460 = vmatpush2.msra.mxu0 0.0
        %1461 = vmatprep.subr.mxu0 0.0
        %1462 = vmatpush2.msra.mxu0 0.0
        %1463 = vmatprep.subr.mxu0 0.0
        %1464 = vmatpush2.msra.mxu0 0.0
        %1465 = vmatprep.subr.mxu0 0.0
        %1466 = vmatpush2.msra.mxu0 0.0
        %1467 = vmatprep.subr.mxu0 0.0
        %1468 = vmatpush2.msra.mxu0 0.0
        %1469 = vmatprep.subr.mxu0 0.0
        %1470 = vmatpush2.msra.mxu0 0.0
        %1471 = vmatprep.subr.mxu0 0.0
        %1472 = vmatpush2.msra.mxu0 0.0
        %1473 = vmatprep.subr.mxu0 0.0
        %1474 = vmatpush2.msra.mxu0 0.0
        %1475 = vmatprep.mubr.f32.mxu0 0.0
        %1476 = vmatmul.mubr.f32.gmra.mxu0 %v1409
        %v1477 = vpop.f32.mrf.mxu0
        %v1478 = vadd.f32 0.0, %v1477
        %v1479 = vpop.f32.mrf.mxu0
        %1480 = vdwg.mxu0
        %1481 = vrot.lane.b32.xlu0 %v1319, 120
        %v1482 = vpop.permute.xlu0 %1481
        %1483 = vrot.lane.b32.xlu0 %v1222, 120
        %v1484 = vpop.permute.xlu0 %1483
        %v1485 = vsel %vm1320, %v1482, 0
        %v1487 = vsel %vm1320, %v1484, 0
        %1489 = vmatprep.subr.mxu0 0.0
        %1490 = vmatpush1.xpose.msra.mxu0 0.0
        %1491 = vmatprep.subr.mxu0 0.0
        %1492 = vmatpush1.xpose.msra.mxu0 0.0
        %1493 = vmatprep.subr.mxu0 0.0
        %1494 = vmatpush1.xpose.msra.mxu0 0.0
        %1495 = vmatprep.subr.mxu0 0.0
        %1496 = vmatpush1.xpose.msra.mxu0 0.0
        %1497 = vmatprep.subr.mxu0 0.0
        %1498 = vmatpush1.xpose.msra.mxu0 0.0
        %1499 = vmatprep.subr.mxu0 0.0
        %1500 = vmatpush1.xpose.msra.mxu0 0.0
        %1501 = vmatprep.subr.mxu0 0.0
        %1502 = vmatpush1.xpose.msra.mxu0 0.0
        %1503 = vmatprep.subr.mxu0 0.0
        %1504 = vmatpush1.xpose.msra.mxu0 0.0
        %1505 = vmatprep.subr.mxu0 0.0
        %1506 = vmatpush1.xpose.msra.mxu0 0.0
        %1507 = vmatprep.subr.mxu0 0.0
        %1508 = vmatpush1.xpose.msra.mxu0 0.0
        %1509 = vmatprep.subr.mxu0 0.0
        %1510 = vmatpush1.xpose.msra.mxu0 0.0
        %1511 = vmatprep.subr.mxu0 0.0
        %1512 = vmatpush1.xpose.msra.mxu0 0.0
        %1513 = vmatprep.subr.mxu0 0.0
        %1514 = vmatpush1.xpose.msra.mxu0 0.0
        %1515 = vmatprep.subr.mxu0 0.0
        %1516 = vmatpush1.xpose.msra.mxu0 0.0
        %1517 = vmatprep.subr.mxu0 0.0
        %1518 = vmatpush1.xpose.msra.mxu0 0.0
        %1519 = vmatprep.subr.mxu0 0.0
        %1520 = vmatpush1.xpose.msra.mxu0 %v1487
        %1521 = vmatprep.subr.mxu0 0.0
        %1522 = vmatpush2.xpose.msra.mxu0 0.0
        %1523 = vmatprep.subr.mxu0 0.0
        %1524 = vmatpush2.xpose.msra.mxu0 0.0
        %1525 = vmatprep.subr.mxu0 0.0
        %1526 = vmatpush2.xpose.msra.mxu0 0.0
        %1527 = vmatprep.subr.mxu0 0.0
        %1528 = vmatpush2.xpose.msra.mxu0 0.0
        %1529 = vmatprep.subr.mxu0 0.0
        %1530 = vmatpush2.xpose.msra.mxu0 0.0
        %1531 = vmatprep.subr.mxu0 0.0
        %1532 = vmatpush2.xpose.msra.mxu0 0.0
        %1533 = vmatprep.subr.mxu0 0.0
        %1534 = vmatpush2.xpose.msra.mxu0 0.0
        %1535 = vmatprep.subr.mxu0 0.0
        %1536 = vmatpush2.xpose.msra.mxu0 0.0
        %1537 = vmatprep.subr.mxu0 0.0
        %1538 = vmatpush2.xpose.msra.mxu0 0.0
        %1539 = vmatprep.subr.mxu0 0.0
        %1540 = vmatpush2.xpose.msra.mxu0 0.0
        %1541 = vmatprep.subr.mxu0 0.0
        %1542 = vmatpush2.xpose.msra.mxu0 0.0
        %1543 = vmatprep.subr.mxu0 0.0
        %1544 = vmatpush2.xpose.msra.mxu0 0.0
        %1545 = vmatprep.subr.mxu0 0.0
        %1546 = vmatpush2.xpose.msra.mxu0 0.0
        %1547 = vmatprep.subr.mxu0 0.0
        %1548 = vmatpush2.xpose.msra.mxu0 0.0
        %1549 = vmatprep.subr.mxu0 0.0
        %1550 = vmatpush2.xpose.msra.mxu0 0.0
        %1551 = vmatprep.subr.mxu0 0.0
        %1552 = vmatpush2.xpose.msra.mxu0 0.0
        %1553 = vmatprep.mubr.f32.mxu0 0.0
        %1554 = vmatmul.mubr.f32.gmra.mxu0 %v1485
        %v1555 = vpop.f32.mrf.mxu0
        %v1556 = vadd.f32 0.0, %v1555
        %v1557 = vpop.f32.mrf.mxu0
        %1558 = vdwg.mxu0
        %v1559 = vsel %vm1320, %v1556, -inf
        %1560 = vmax.xlane.f32.xlu0 %v1559
        %v1561 = vpop.xlane.xlu0 %1560
        %v1562 = vsub.f32 %v1556, %v1561
        %v1563 = vmul.f32 %v1562, 1.442695
        %v1564 = vpow.pop %v1563
        %v1565 = vsel %vm1320, %v1564, 0.0
        %1566 = vadd.xlane.f32.xlu0 %v1565
        %v1567 = vpop.xlane.xlu0 %1566
        %v1568 = vrcp.pop %v1567
        %v1569 = vmul.f32 %v1564, %v1568
        %1571 = vrot.lane.b32.xlu0 %v1311, 120
        %v1572 = vpop.permute.xlu0 %1571
        %v1575 = vsel %vm1320, %v1569, 0
        %1577 = vmatprep.subr.mxu0 0.0
        %1578 = vmatpush1.msra.mxu0 0.0
        %1579 = vmatprep.subr.mxu0 0.0
        %1580 = vmatpush1.msra.mxu0 0.0
        %1581 = vmatprep.subr.mxu0 0.0
        %1582 = vmatpush1.msra.mxu0 0.0
        %1583 = vmatprep.subr.mxu0 0.0
        %1584 = vmatpush1.msra.mxu0 0.0
        %1585 = vmatprep.subr.mxu0 0.0
        %1586 = vmatpush1.msra.mxu0 0.0
        %1587 = vmatprep.subr.mxu0 0.0
        %1588 = vmatpush1.msra.mxu0 0.0
        %1589 = vmatprep.subr.mxu0 0.0
        %1590 = vmatpush1.msra.mxu0 0.0
        %1591 = vmatprep.subr.mxu0 0.0
        %1592 = vmatpush1.msra.mxu0 0.0
        %1593 = vmatprep.subr.mxu0 0.0
        %1594 = vmatpush1.msra.mxu0 0.0
        %1595 = vmatprep.subr.mxu0 0.0
        %1596 = vmatpush1.msra.mxu0 0.0
        %1597 = vmatprep.subr.mxu0 0.0
        %1598 = vmatpush1.msra.mxu0 0.0
        %1599 = vmatprep.subr.mxu0 0.0
        %1600 = vmatpush1.msra.mxu0 0.0
        %1601 = vmatprep.subr.mxu0 0.0
        %1602 = vmatpush1.msra.mxu0 0.0
        %1603 = vmatprep.subr.mxu0 0.0
        %1604 = vmatpush1.msra.mxu0 0.0
        %1605 = vmatprep.subr.mxu0 0.0
        %1606 = vmatpush1.msra.mxu0 0.0
        %1607 = vmatprep.subr.mxu0 0.0
        %1608 = vmatpush1.msra.mxu0 %v1572
        %1609 = vmatprep.subr.mxu0 0.0
        %1610 = vmatpush2.msra.mxu0 0.0
        %1611 = vmatprep.subr.mxu0 0.0
        %1612 = vmatpush2.msra.mxu0 0.0
        %1613 = vmatprep.subr.mxu0 0.0
        %1614 = vmatpush2.msra.mxu0 0.0
        %1615 = vmatprep.subr.mxu0 0.0
        %1616 = vmatpush2.msra.mxu0 0.0
        %1617 = vmatprep.subr.mxu0 0.0
        %1618 = vmatpush2.msra.mxu0 0.0
        %1619 = vmatprep.subr.mxu0 0.0
        %1620 = vmatpush2.msra.mxu0 0.0
        %1621 = vmatprep.subr.mxu0 0.0
        %1622 = vmatpush2.msra.mxu0 0.0
        %1623 = vmatprep.subr.mxu0 0.0
        %1624 = vmatpush2.msra.mxu0 0.0
        %1625 = vmatprep.subr.mxu0 0.0
        %1626 = vmatpush2.msra.mxu0 0.0
        %1627 = vmatprep.subr.mxu0 0.0
        %1628 = vmatpush2.msra.mxu0 0.0
        %1629 = vmatprep.subr.mxu0 0.0
        %1630 = vmatpush2.msra.mxu0 0.0
        %1631 = vmatprep.subr.mxu0 0.0
        %1632 = vmatpush2.msra.mxu0 0.0
        %1633 = vmatprep.subr.mxu0 0.0
        %1634 = vmatpush2.msra.mxu0 0.0
        %1635 = vmatprep.subr.mxu0 0.0
        %1636 = vmatpush2.msra.mxu0 0.0
        %1637 = vmatprep.subr.mxu0 0.0
        %1638 = vmatpush2.msra.mxu0 0.0
        %1639 = vmatprep.subr.mxu0 0.0
        %1640 = vmatpush2.msra.mxu0 0.0
        %1641 = vmatprep.mubr.f32.mxu0 0.0
        %1642 = vmatmul.mubr.f32.gmra.mxu0 %v1575
        %v1643 = vpop.f32.mrf.mxu0
        %v1644 = vadd.f32 0.0, %v1643
        %v1645 = vpop.f32.mrf.mxu0
        %1646 = vdwg.mxu0
        %1647 = vrot.lane.b32.xlu0 %v1319, 112
        %v1648 = vpop.permute.xlu0 %1647
        %1649 = vrot.lane.b32.xlu0 %v1222, 112
        %v1650 = vpop.permute.xlu0 %1649
        %v1651 = vsel %vm1320, %v1648, 0
        %v1653 = vsel %vm1320, %v1650, 0
        %1655 = vmatprep.subr.mxu0 0.0
        %1656 = vmatpush1.xpose.msra.mxu0 0.0
        %1657 = vmatprep.subr.mxu0 0.0
        %1658 = vmatpush1.xpose.msra.mxu0 0.0
        %1659 = vmatprep.subr.mxu0 0.0
        %1660 = vmatpush1.xpose.msra.mxu0 0.0
        %1661 = vmatprep.subr.mxu0 0.0
        %1662 = vmatpush1.xpose.msra.mxu0 0.0
        %1663 = vmatprep.subr.mxu0 0.0
        %1664 = vmatpush1.xpose.msra.mxu0 0.0
        %1665 = vmatprep.subr.mxu0 0.0
        %1666 = vmatpush1.xpose.msra.mxu0 0.0
        %1667 = vmatprep.subr.mxu0 0.0
        %1668 = vmatpush1.xpose.msra.mxu0 0.0
        %1669 = vmatprep.subr.mxu0 0.0
        %1670 = vmatpush1.xpose.msra.mxu0 0.0
        %1671 = vmatprep.subr.mxu0 0.0
        %1672 = vmatpush1.xpose.msra.mxu0 0.0
        %1673 = vmatprep.subr.mxu0 0.0
        %1674 = vmatpush1.xpose.msra.mxu0 0.0
        %1675 = vmatprep.subr.mxu0 0.0
        %1676 = vmatpush1.xpose.msra.mxu0 0.0
        %1677 = vmatprep.subr.mxu0 0.0
        %1678 = vmatpush1.xpose.msra.mxu0 0.0
        %1679 = vmatprep.subr.mxu0 0.0
        %1680 = vmatpush1.xpose.msra.mxu0 0.0
        %1681 = vmatprep.subr.mxu0 0.0
        %1682 = vmatpush1.xpose.msra.mxu0 0.0
        %1683 = vmatprep.subr.mxu0 0.0
        %1684 = vmatpush1.xpose.msra.mxu0 0.0
        %1685 = vmatprep.subr.mxu0 0.0
        %1686 = vmatpush1.xpose.msra.mxu0 %v1653
        %1687 = vmatprep.subr.mxu0 0.0
        %1688 = vmatpush2.xpose.msra.mxu0 0.0
        %1689 = vmatprep.subr.mxu0 0.0
        %1690 = vmatpush2.xpose.msra.mxu0 0.0
        %1691 = vmatprep.subr.mxu0 0.0
        %1692 = vmatpush2.xpose.msra.mxu0 0.0
        %1693 = vmatprep.subr.mxu0 0.0
        %1694 = vmatpush2.xpose.msra.mxu0 0.0
        %1695 = vmatprep.subr.mxu0 0.0
        %1696 = vmatpush2.xpose.msra.mxu0 0.0
        %1697 = vmatprep.subr.mxu0 0.0
        %1698 = vmatpush2.xpose.msra.mxu0 0.0
        %1699 = vmatprep.subr.mxu0 0.0
        %1700 = vmatpush2.xpose.msra.mxu0 0.0
        %1701 = vmatprep.subr.mxu0 0.0
        %1702 = vmatpush2.xpose.msra.mxu0 0.0
        %1703 = vmatprep.subr.mxu0 0.0
        %1704 = vmatpush2.xpose.msra.mxu0 0.0
        %1705 = vmatprep.subr.mxu0 0.0
        %1706 = vmatpush2.xpose.msra.mxu0 0.0
        %1707 = vmatprep.subr.mxu0 0.0
        %1708 = vmatpush2.xpose.msra.mxu0 0.0
        %1709 = vmatprep.subr.mxu0 0.0
        %1710 = vmatpush2.xpose.msra.mxu0 0.0
        %1711 = vmatprep.subr.mxu0 0.0
        %1712 = vmatpush2.xpose.msra.mxu0 0.0
        %1713 = vmatprep.subr.mxu0 0.0
        %1714 = vmatpush2.xpose.msra.mxu0 0.0
        %1715 = vmatprep.subr.mxu0 0.0
        %1716 = vmatpush2.xpose.msra.mxu0 0.0
        %1717 = vmatprep.subr.mxu0 0.0
        %1718 = vmatpush2.xpose.msra.mxu0 0.0
        %1719 = vmatprep.mubr.f32.mxu0 0.0
        %1720 = vmatmul.mubr.f32.gmra.mxu0 %v1651
        %v1721 = vpop.f32.mrf.mxu0
        %v1722 = vadd.f32 0.0, %v1721
        %v1723 = vpop.f32.mrf.mxu0
        %1724 = vdwg.mxu0
        %v1725 = vsel %vm1320, %v1722, -inf
        %1726 = vmax.xlane.f32.xlu0 %v1725
        %v1727 = vpop.xlane.xlu0 %1726
        %v1728 = vsub.f32 %v1722, %v1727
        %v1729 = vmul.f32 %v1728, 1.442695
        %v1730 = vpow.pop %v1729
        %v1731 = vsel %vm1320, %v1730, 0.0
        %1732 = vadd.xlane.f32.xlu0 %v1731
        %v1733 = vpop.xlane.xlu0 %1732
        %v1734 = vrcp.pop %v1733
        %v1735 = vmul.f32 %v1730, %v1734
        %1736 = vrot.lane.b32.xlu0 %v1311, 112
        %v1737 = vpop.permute.xlu0 %1736
        %v1740 = vsel %vm1320, %v1735, 0
        %1742 = vmatprep.subr.mxu0 0.0
        %1743 = vmatpush1.msra.mxu0 0.0
        %1744 = vmatprep.subr.mxu0 0.0
        %1745 = vmatpush1.msra.mxu0 0.0
        %1746 = vmatprep.subr.mxu0 0.0
        %1747 = vmatpush1.msra.mxu0 0.0
        %1748 = vmatprep.subr.mxu0 0.0
        %1749 = vmatpush1.msra.mxu0 0.0
        %1750 = vmatprep.subr.mxu0 0.0
        %1751 = vmatpush1.msra.mxu0 0.0
        %1752 = vmatprep.subr.mxu0 0.0
        %1753 = vmatpush1.msra.mxu0 0.0
        %1754 = vmatprep.subr.mxu0 0.0
        %1755 = vmatpush1.msra.mxu0 0.0
        %1756 = vmatprep.subr.mxu0 0.0
        %1757 = vmatpush1.msra.mxu0 0.0
        %1758 = vmatprep.subr.mxu0 0.0
        %1759 = vmatpush1.msra.mxu0 0.0
        %1760 = vmatprep.subr.mxu0 0.0
        %1761 = vmatpush1.msra.mxu0 0.0
        %1762 = vmatprep.subr.mxu0 0.0
        %1763 = vmatpush1.msra.mxu0 0.0
        %1764 = vmatprep.subr.mxu0 0.0
        %1765 = vmatpush1.msra.mxu0 0.0
        %1766 = vmatprep.subr.mxu0 0.0
        %1767 = vmatpush1.msra.mxu0 0.0
        %1768 = vmatprep.subr.mxu0 0.0
        %1769 = vmatpush1.msra.mxu0 0.0
        %1770 = vmatprep.subr.mxu0 0.0
        %1771 = vmatpush1.msra.mxu0 0.0
        %1772 = vmatprep.subr.mxu0 0.0
        %1773 = vmatpush1.msra.mxu0 %v1737
        %1774 = vmatprep.subr.mxu0 0.0
        %1775 = vmatpush2.msra.mxu0 0.0
        %1776 = vmatprep.subr.mxu0 0.0
        %1777 = vmatpush2.msra.mxu0 0.0
        %1778 = vmatprep.subr.mxu0 0.0
        %1779 = vmatpush2.msra.mxu0 0.0
        %1780 = vmatprep.subr.mxu0 0.0
        %1781 = vmatpush2.msra.mxu0 0.0
        %1782 = vmatprep.subr.mxu0 0.0
        %1783 = vmatpush2.msra.mxu0 0.0
        %1784 = vmatprep.subr.mxu0 0.0
        %1785 = vmatpush2.msra.mxu0 0.0
        %1786 = vmatprep.subr.mxu0 0.0
        %1787 = vmatpush2.msra.mxu0 0.0
        %1788 = vmatprep.subr.mxu0 0.0
        %1789 = vmatpush2.msra.mxu0 0.0
        %1790 = vmatprep.subr.mxu0 0.0
        %1791 = vmatpush2.msra.mxu0 0.0
        %1792 = vmatprep.subr.mxu0 0.0
        %1793 = vmatpush2.msra.mxu0 0.0
        %1794 = vmatprep.subr.mxu0 0.0
        %1795 = vmatpush2.msra.mxu0 0.0
        %1796 = vmatprep.subr.mxu0 0.0
        %1797 = vmatpush2.msra.mxu0 0.0
        %1798 = vmatprep.subr.mxu0 0.0
        %1799 = vmatpush2.msra.mxu0 0.0
        %1800 = vmatprep.subr.mxu0 0.0
        %1801 = vmatpush2.msra.mxu0 0.0
        %1802 = vmatprep.subr.mxu0 0.0
        %1803 = vmatpush2.msra.mxu0 0.0
        %1804 = vmatprep.subr.mxu0 0.0
        %1805 = vmatpush2.msra.mxu0 0.0
        %1806 = vmatprep.mubr.f32.mxu0 0.0
        %1807 = vmatmul.mubr.f32.gmra.mxu0 %v1740
        %v1808 = vpop.f32.mrf.mxu0
        %v1809 = vadd.f32 0.0, %v1808
        %v1810 = vpop.f32.mrf.mxu0
        %1811 = vdwg.mxu0
        %1812 = vrot.lane.b32.xlu0 %v1319, 104
        %v1813 = vpop.permute.xlu0 %1812
        %1814 = vrot.lane.b32.xlu0 %v1222, 104
        %v1815 = vpop.permute.xlu0 %1814
        %v1816 = vsel %vm1320, %v1813, 0
        %v1818 = vsel %vm1320, %v1815, 0
        %1820 = vmatprep.subr.mxu0 0.0
        %1821 = vmatpush1.xpose.msra.mxu0 0.0
        %1822 = vmatprep.subr.mxu0 0.0
        %1823 = vmatpush1.xpose.msra.mxu0 0.0
        %1824 = vmatprep.subr.mxu0 0.0
        %1825 = vmatpush1.xpose.msra.mxu0 0.0
        %1826 = vmatprep.subr.mxu0 0.0
        %1827 = vmatpush1.xpose.msra.mxu0 0.0
        %1828 = vmatprep.subr.mxu0 0.0
        %1829 = vmatpush1.xpose.msra.mxu0 0.0
        %1830 = vmatprep.subr.mxu0 0.0
        %1831 = vmatpush1.xpose.msra.mxu0 0.0
        %1832 = vmatprep.subr.mxu0 0.0
        %1833 = vmatpush1.xpose.msra.mxu0 0.0
        %1834 = vmatprep.subr.mxu0 0.0
        %1835 = vmatpush1.xpose.msra.mxu0 0.0
        %1836 = vmatprep.subr.mxu0 0.0
        %1837 = vmatpush1.xpose.msra.mxu0 0.0
        %1838 = vmatprep.subr.mxu0 0.0
        %1839 = vmatpush1.xpose.msra.mxu0 0.0
        %1840 = vmatprep.subr.mxu0 0.0
        %1841 = vmatpush1.xpose.msra.mxu0 0.0
        %1842 = vmatprep.subr.mxu0 0.0
        %1843 = vmatpush1.xpose.msra.mxu0 0.0
        %1844 = vmatprep.subr.mxu0 0.0
        %1845 = vmatpush1.xpose.msra.mxu0 0.0
        %1846 = vmatprep.subr.mxu0 0.0
        %1847 = vmatpush1.xpose.msra.mxu0 0.0
        %1848 = vmatprep.subr.mxu0 0.0
        %1849 = vmatpush1.xpose.msra.mxu0 0.0
        %1850 = vmatprep.subr.mxu0 0.0
        %1851 = vmatpush1.xpose.msra.mxu0 %v1818
        %1852 = vmatprep.subr.mxu0 0.0
        %1853 = vmatpush2.xpose.msra.mxu0 0.0
        %1854 = vmatprep.subr.mxu0 0.0
        %1855 = vmatpush2.xpose.msra.mxu0 0.0
        %1856 = vmatprep.subr.mxu0 0.0
        %1857 = vmatpush2.xpose.msra.mxu0 0.0
        %1858 = vmatprep.subr.mxu0 0.0
        %1859 = vmatpush2.xpose.msra.mxu0 0.0
        %1860 = vmatprep.subr.mxu0 0.0
        %1861 = vmatpush2.xpose.msra.mxu0 0.0
        %1862 = vmatprep.subr.mxu0 0.0
        %1863 = vmatpush2.xpose.msra.mxu0 0.0
        %1864 = vmatprep.subr.mxu0 0.0
        %1865 = vmatpush2.xpose.msra.mxu0 0.0
        %1866 = vmatprep.subr.mxu0 0.0
        %1867 = vmatpush2.xpose.msra.mxu0 0.0
        %1868 = vmatprep.subr.mxu0 0.0
        %1869 = vmatpush2.xpose.msra.mxu0 0.0
        %1870 = vmatprep.subr.mxu0 0.0
        %1871 = vmatpush2.xpose.msra.mxu0 0.0
        %1872 = vmatprep.subr.mxu0 0.0
        %1873 = vmatpush2.xpose.msra.mxu0 0.0
        %1874 = vmatprep.subr.mxu0 0.0
        %1875 = vmatpush2.xpose.msra.mxu0 0.0
        %1876 = vmatprep.subr.mxu0 0.0
        %1877 = vmatpush2.xpose.msra.mxu0 0.0
        %1878 = vmatprep.subr.mxu0 0.0
        %1879 = vmatpush2.xpose.msra.mxu0 0.0
        %1880 = vmatprep.subr.mxu0 0.0
        %1881 = vmatpush2.xpose.msra.mxu0 0.0
        %1882 = vmatprep.subr.mxu0 0.0
        %1883 = vmatpush2.xpose.msra.mxu0 0.0
        %1884 = vmatprep.mubr.f32.mxu0 0.0
        %1885 = vmatmul.mubr.f32.gmra.mxu0 %v1816
        %v1886 = vpop.f32.mrf.mxu0
        %v1887 = vadd.f32 0.0, %v1886
        %v1888 = vpop.f32.mrf.mxu0
        %1889 = vdwg.mxu0
        %v1890 = vsel %vm1320, %v1887, -inf
        %1891 = vmax.xlane.f32.xlu0 %v1890
        %v1892 = vpop.xlane.xlu0 %1891
        %v1893 = vsub.f32 %v1887, %v1892
        %v1894 = vmul.f32 %v1893, 1.442695
        %v1895 = vpow.pop %v1894
        %v1896 = vsel %vm1320, %v1895, 0.0
        %1897 = vadd.xlane.f32.xlu0 %v1896
        %v1898 = vpop.xlane.xlu0 %1897
        %v1899 = vrcp.pop %v1898
        %v1900 = vmul.f32 %v1895, %v1899
        %1901 = vrot.lane.b32.xlu0 %v1311, 104
        %v1902 = vpop.permute.xlu0 %1901
        %v1905 = vsel %vm1320, %v1900, 0
        %1907 = vmatprep.subr.mxu0 0.0
        %1908 = vmatpush1.msra.mxu0 0.0
        %1909 = vmatprep.subr.mxu0 0.0
        %1910 = vmatpush1.msra.mxu0 0.0
        %1911 = vmatprep.subr.mxu0 0.0
        %1912 = vmatpush1.msra.mxu0 0.0
        %1913 = vmatprep.subr.mxu0 0.0
        %1914 = vmatpush1.msra.mxu0 0.0
        %1915 = vmatprep.subr.mxu0 0.0
        %1916 = vmatpush1.msra.mxu0 0.0
        %1917 = vmatprep.subr.mxu0 0.0
        %1918 = vmatpush1.msra.mxu0 0.0
        %1919 = vmatprep.subr.mxu0 0.0
        %1920 = vmatpush1.msra.mxu0 0.0
        %1921 = vmatprep.subr.mxu0 0.0
        %1922 = vmatpush1.msra.mxu0 0.0
        %1923 = vmatprep.subr.mxu0 0.0
        %1924 = vmatpush1.msra.mxu0 0.0
        %1925 = vmatprep.subr.mxu0 0.0
        %1926 = vmatpush1.msra.mxu0 0.0
        %1927 = vmatprep.subr.mxu0 0.0
        %1928 = vmatpush1.msra.mxu0 0.0
        %1929 = vmatprep.subr.mxu0 0.0
        %1930 = vmatpush1.msra.mxu0 0.0
        %1931 = vmatprep.subr.mxu0 0.0
        %1932 = vmatpush1.msra.mxu0 0.0
        %1933 = vmatprep.subr.mxu0 0.0
        %1934 = vmatpush1.msra.mxu0 0.0
        %1935 = vmatprep.subr.mxu0 0.0
        %1936 = vmatpush1.msra.mxu0 0.0
        %1937 = vmatprep.subr.mxu0 0.0
        %1938 = vmatpush1.msra.mxu0 %v1902
        %1939 = vmatprep.subr.mxu0 0.0
        %1940 = vmatpush2.msra.mxu0 0.0
        %1941 = vmatprep.subr.mxu0 0.0
        %1942 = vmatpush2.msra.mxu0 0.0
        %1943 = vmatprep.subr.mxu0 0.0
        %1944 = vmatpush2.msra.mxu0 0.0
        %1945 = vmatprep.subr.mxu0 0.0
        %1946 = vmatpush2.msra.mxu0 0.0
        %1947 = vmatprep.subr.mxu0 0.0
        %1948 = vmatpush2.msra.mxu0 0.0
        %1949 = vmatprep.subr.mxu0 0.0
        %1950 = vmatpush2.msra.mxu0 0.0
        %1951 = vmatprep.subr.mxu0 0.0
        %1952 = vmatpush2.msra.mxu0 0.0
        %1953 = vmatprep.subr.mxu0 0.0
        %1954 = vmatpush2.msra.mxu0 0.0
        %1955 = vmatprep.subr.mxu0 0.0
        %1956 = vmatpush2.msra.mxu0 0.0
        %1957 = vmatprep.subr.mxu0 0.0
        %1958 = vmatpush2.msra.mxu0 0.0
        %1959 = vmatprep.subr.mxu0 0.0
        %1960 = vmatpush2.msra.mxu0 0.0
        %1961 = vmatprep.subr.mxu0 0.0
        %1962 = vmatpush2.msra.mxu0 0.0
        %1963 = vmatprep.subr.mxu0 0.0
        %1964 = vmatpush2.msra.mxu0 0.0
        %1965 = vmatprep.subr.mxu0 0.0
        %1966 = vmatpush2.msra.mxu0 0.0
        %1967 = vmatprep.subr.mxu0 0.0
        %1968 = vmatpush2.msra.mxu0 0.0
        %1969 = vmatprep.subr.mxu0 0.0
        %1970 = vmatpush2.msra.mxu0 0.0
        %1971 = vmatprep.mubr.f32.mxu0 0.0
        %1972 = vmatmul.mubr.f32.gmra.mxu0 %v1905
        %v1973 = vpop.f32.mrf.mxu0
        %v1974 = vadd.f32 0.0, %v1973
        %v1975 = vpop.f32.mrf.mxu0
        %1976 = vdwg.mxu0
        %1978 = vrot.lane.b32.xlu0 %v1644, 8
        %v1979 = vpop.permute.xlu0 %1978
        %1982 = vrot.lane.b32.xlu0 %v1809, 16
        %v1983 = vpop.permute.xlu0 %1982
        %1986 = vrot.lane.b32.xlu0 %v1974, 24
        %v1987 = vpop.permute.xlu0 %1986
        %v1989 = vsel %vm1320, %v1478, %v1979
        %vm1990 = vcmask 130048
        %v1991 = vsel %vm1990, %v1989, %v1983
        %vm1992 = vcmask 195584
        %v1993 = vsel %vm1992, %v1991, %v1987
        %v1994 = vmul.f32 %v1144, 0.35355338
        %v1996 = vsel %vm1320, %v1994, 0
        %v1999 = vsel %vm1320, %v1227, 0
        %2001 = vmatprep.subr.mxu0 0.0
        %2002 = vmatpush1.xpose.msra.mxu0 0.0
        %2003 = vmatprep.subr.mxu0 0.0
        %2004 = vmatpush1.xpose.msra.mxu0 0.0
        %2005 = vmatprep.subr.mxu0 0.0
        %2006 = vmatpush1.xpose.msra.mxu0 0.0
        %2007 = vmatprep.subr.mxu0 0.0
        %2008 = vmatpush1.xpose.msra.mxu0 0.0
        %2009 = vmatprep.subr.mxu0 0.0
        %2010 = vmatpush1.xpose.msra.mxu0 0.0
        %2011 = vmatprep.subr.mxu0 0.0
        %2012 = vmatpush1.xpose.msra.mxu0 0.0
        %2013 = vmatprep.subr.mxu0 0.0
        %2014 = vmatpush1.xpose.msra.mxu0 0.0
        %2015 = vmatprep.subr.mxu0 0.0
        %2016 = vmatpush1.xpose.msra.mxu0 0.0
        %2017 = vmatprep.subr.mxu0 0.0
        %2018 = vmatpush1.xpose.msra.mxu0 0.0
        %2019 = vmatprep.subr.mxu0 0.0
        %2020 = vmatpush1.xpose.msra.mxu0 0.0
        %2021 = vmatprep.subr.mxu0 0.0
        %2022 = vmatpush1.xpose.msra.mxu0 0.0
        %2023 = vmatprep.subr.mxu0 0.0
        %2024 = vmatpush1.xpose.msra.mxu0 0.0
        %2025 = vmatprep.subr.mxu0 0.0
        %2026 = vmatpush1.xpose.msra.mxu0 0.0
        %2027 = vmatprep.subr.mxu0 0.0
        %2028 = vmatpush1.xpose.msra.mxu0 0.0
        %2029 = vmatprep.subr.mxu0 0.0
        %2030 = vmatpush1.xpose.msra.mxu0 0.0
        %2031 = vmatprep.subr.mxu0 0.0
        %2032 = vmatpush1.xpose.msra.mxu0 %v1999
        %2033 = vmatprep.subr.mxu0 0.0
        %2034 = vmatpush2.xpose.msra.mxu0 0.0
        %2035 = vmatprep.subr.mxu0 0.0
        %2036 = vmatpush2.xpose.msra.mxu0 0.0
        %2037 = vmatprep.subr.mxu0 0.0
        %2038 = vmatpush2.xpose.msra.mxu0 0.0
        %2039 = vmatprep.subr.mxu0 0.0
        %2040 = vmatpush2.xpose.msra.mxu0 0.0
        %2041 = vmatprep.subr.mxu0 0.0
        %2042 = vmatpush2.xpose.msra.mxu0 0.0
        %2043 = vmatprep.subr.mxu0 0.0
        %2044 = vmatpush2.xpose.msra.mxu0 0.0
        %2045 = vmatprep.subr.mxu0 0.0
        %2046 = vmatpush2.xpose.msra.mxu0 0.0
        %2047 = vmatprep.subr.mxu0 0.0
        %2048 = vmatpush2.xpose.msra.mxu0 0.0
        %2049 = vmatprep.subr.mxu0 0.0
        %2050 = vmatpush2.xpose.msra.mxu0 0.0
        %2051 = vmatprep.subr.mxu0 0.0
        %2052 = vmatpush2.xpose.msra.mxu0 0.0
        %2053 = vmatprep.subr.mxu0 0.0
        %2054 = vmatpush2.xpose.msra.mxu0 0.0
        %2055 = vmatprep.subr.mxu0 0.0
        %2056 = vmatpush2.xpose.msra.mxu0 0.0
        %2057 = vmatprep.subr.mxu0 0.0
        %2058 = vmatpush2.xpose.msra.mxu0 0.0
        %2059 = vmatprep.subr.mxu0 0.0
        %2060 = vmatpush2.xpose.msra.mxu0 0.0
        %2061 = vmatprep.subr.mxu0 0.0
        %2062 = vmatpush2.xpose.msra.mxu0 0.0
        %2063 = vmatprep.subr.mxu0 0.0
        %2064 = vmatpush2.xpose.msra.mxu0 0.0
        %2065 = vmatprep.mubr.f32.mxu0 0.0
        %2066 = vmatmul.mubr.f32.gmra.mxu0 %v1996
        %v2067 = vpop.f32.mrf.mxu0
        %v2068 = vadd.f32 0.0, %v2067
        %v2069 = vpop.f32.mrf.mxu0
        %2070 = vdwg.mxu0
        %v2071 = vsel %vm1320, %v2068, -inf
        %2072 = vmax.xlane.f32.xlu0 %v2071
        %v2073 = vpop.xlane.xlu0 %2072
        %v2074 = vsub.f32 %v2068, %v2073
        %v2075 = vmul.f32 %v2074, 1.442695
        %v2076 = vpow.pop %v2075
        %v2077 = vsel %vm1320, %v2076, 0.0
        %2078 = vadd.xlane.f32.xlu0 %v2077
        %v2079 = vpop.xlane.xlu0 %2078
        %v2080 = vrcp.pop %v2079
        %v2081 = vmul.f32 %v2076, %v2080
        %v2083 = vsel %vm1320, %v2081, 0
        %2085 = vmatprep.subr.mxu0 0.0
        %2086 = vmatpush1.msra.mxu0 0.0
        %2087 = vmatprep.subr.mxu0 0.0
        %2088 = vmatpush1.msra.mxu0 0.0
        %2089 = vmatprep.subr.mxu0 0.0
        %2090 = vmatpush1.msra.mxu0 0.0
        %2091 = vmatprep.subr.mxu0 0.0
        %2092 = vmatpush1.msra.mxu0 0.0
        %2093 = vmatprep.subr.mxu0 0.0
        %2094 = vmatpush1.msra.mxu0 0.0
        %2095 = vmatprep.subr.mxu0 0.0
        %2096 = vmatpush1.msra.mxu0 0.0
        %2097 = vmatprep.subr.mxu0 0.0
        %2098 = vmatpush1.msra.mxu0 0.0
        %2099 = vmatprep.subr.mxu0 0.0
        %2100 = vmatpush1.msra.mxu0 0.0
        %2101 = vmatprep.subr.mxu0 0.0
        %2102 = vmatpush1.msra.mxu0 0.0
        %2103 = vmatprep.subr.mxu0 0.0
        %2104 = vmatpush1.msra.mxu0 0.0
        %2105 = vmatprep.subr.mxu0 0.0
        %2106 = vmatpush1.msra.mxu0 0.0
        %2107 = vmatprep.subr.mxu0 0.0
        %2108 = vmatpush1.msra.mxu0 0.0
        %2109 = vmatprep.subr.mxu0 0.0
        %2110 = vmatpush1.msra.mxu0 0.0
        %2111 = vmatprep.subr.mxu0 0.0
        %2112 = vmatpush1.msra.mxu0 0.0
        %2113 = vmatprep.subr.mxu0 0.0
        %2114 = vmatpush1.msra.mxu0 0.0
        %2115 = vmatprep.subr.mxu0 0.0
        %2116 = vmatpush1.msra.mxu0 %v1316
        %2117 = vmatprep.subr.mxu0 0.0
        %2118 = vmatpush2.msra.mxu0 0.0
        %2119 = vmatprep.subr.mxu0 0.0
        %2120 = vmatpush2.msra.mxu0 0.0
        %2121 = vmatprep.subr.mxu0 0.0
        %2122 = vmatpush2.msra.mxu0 0.0
        %2123 = vmatprep.subr.mxu0 0.0
        %2124 = vmatpush2.msra.mxu0 0.0
        %2125 = vmatprep.subr.mxu0 0.0
        %2126 = vmatpush2.msra.mxu0 0.0
        %2127 = vmatprep.subr.mxu0 0.0
        %2128 = vmatpush2.msra.mxu0 0.0
        %2129 = vmatprep.subr.mxu0 0.0
        %2130 = vmatpush2.msra.mxu0 0.0
        %2131 = vmatprep.subr.mxu0 0.0
        %2132 = vmatpush2.msra.mxu0 0.0
        %2133 = vmatprep.subr.mxu0 0.0
        %2134 = vmatpush2.msra.mxu0 0.0
        %2135 = vmatprep.subr.mxu0 0.0
        %2136 = vmatpush2.msra.mxu0 0.0
        %2137 = vmatprep.subr.mxu0 0.0
        %2138 = vmatpush2.msra.mxu0 0.0
        %2139 = vmatprep.subr.mxu0 0.0
        %2140 = vmatpush2.msra.mxu0 0.0
        %2141 = vmatprep.subr.mxu0 0.0
        %2142 = vmatpush2.msra.mxu0 0.0
        %2143 = vmatprep.subr.mxu0 0.0
        %2144 = vmatpush2.msra.mxu0 0.0
        %2145 = vmatprep.subr.mxu0 0.0
        %2146 = vmatpush2.msra.mxu0 0.0
        %2147 = vmatprep.subr.mxu0 0.0
        %2148 = vmatpush2.msra.mxu0 0.0
        %2149 = vmatprep.mubr.f32.mxu0 0.0
        %2150 = vmatmul.mubr.f32.gmra.mxu0 %v2083
        %v2151 = vpop.f32.mrf.mxu0
        %v2152 = vadd.f32 0.0, %v2151
        %v2153 = vpop.f32.mrf.mxu0
        %2154 = vdwg.mxu0
        %2155 = vrot.lane.b32.xlu0 %v1994, 120
        %v2156 = vpop.permute.xlu0 %2155
        %2157 = vrot.lane.b32.xlu0 %v1227, 120
        %v2158 = vpop.permute.xlu0 %2157
        %v2159 = vsel %vm1320, %v2156, 0
        %v2161 = vsel %vm1320, %v2158, 0
        %2163 = vmatprep.subr.mxu0 0.0
        %2164 = vmatpush1.xpose.msra.mxu0 0.0
        %2165 = vmatprep.subr.mxu0 0.0
        %2166 = vmatpush1.xpose.msra.mxu0 0.0
        %2167 = vmatprep.subr.mxu0 0.0
        %2168 = vmatpush1.xpose.msra.mxu0 0.0
        %2169 = vmatprep.subr.mxu0 0.0
        %2170 = vmatpush1.xpose.msra.mxu0 0.0
        %2171 = vmatprep.subr.mxu0 0.0
        %2172 = vmatpush1.xpose.msra.mxu0 0.0
        %2173 = vmatprep.subr.mxu0 0.0
        %2174 = vmatpush1.xpose.msra.mxu0 0.0
        %2175 = vmatprep.subr.mxu0 0.0
        %2176 = vmatpush1.xpose.msra.mxu0 0.0
        %2177 = vmatprep.subr.mxu0 0.0
        %2178 = vmatpush1.xpose.msra.mxu0 0.0
        %2179 = vmatprep.subr.mxu0 0.0
        %2180 = vmatpush1.xpose.msra.mxu0 0.0
        %2181 = vmatprep.subr.mxu0 0.0
        %2182 = vmatpush1.xpose.msra.mxu0 0.0
        %2183 = vmatprep.subr.mxu0 0.0
        %2184 = vmatpush1.xpose.msra.mxu0 0.0
        %2185 = vmatprep.subr.mxu0 0.0
        %2186 = vmatpush1.xpose.msra.mxu0 0.0
        %2187 = vmatprep.subr.mxu0 0.0
        %2188 = vmatpush1.xpose.msra.mxu0 0.0
        %2189 = vmatprep.subr.mxu0 0.0
        %2190 = vmatpush1.xpose.msra.mxu0 0.0
        %2191 = vmatprep.subr.mxu0 0.0
        %2192 = vmatpush1.xpose.msra.mxu0 0.0
        %2193 = vmatprep.subr.mxu0 0.0
        %2194 = vmatpush1.xpose.msra.mxu0 %v2161
        %2195 = vmatprep.subr.mxu0 0.0
        %2196 = vmatpush2.xpose.msra.mxu0 0.0
        %2197 = vmatprep.subr.mxu0 0.0
        %2198 = vmatpush2.xpose.msra.mxu0 0.0
        %2199 = vmatprep.subr.mxu0 0.0
        %2200 = vmatpush2.xpose.msra.mxu0 0.0
        %2201 = vmatprep.subr.mxu0 0.0
        %2202 = vmatpush2.xpose.msra.mxu0 0.0
        %2203 = vmatprep.subr.mxu0 0.0
        %2204 = vmatpush2.xpose.msra.mxu0 0.0
        %2205 = vmatprep.subr.mxu0 0.0
        %2206 = vmatpush2.xpose.msra.mxu0 0.0
        %2207 = vmatprep.subr.mxu0 0.0
        %2208 = vmatpush2.xpose.msra.mxu0 0.0
        %2209 = vmatprep.subr.mxu0 0.0
        %2210 = vmatpush2.xpose.msra.mxu0 0.0
        %2211 = vmatprep.subr.mxu0 0.0
        %2212 = vmatpush2.xpose.msra.mxu0 0.0
        %2213 = vmatprep.subr.mxu0 0.0
        %2214 = vmatpush2.xpose.msra.mxu0 0.0
        %2215 = vmatprep.subr.mxu0 0.0
        %2216 = vmatpush2.xpose.msra.mxu0 0.0
        %2217 = vmatprep.subr.mxu0 0.0
        %2218 = vmatpush2.xpose.msra.mxu0 0.0
        %2219 = vmatprep.subr.mxu0 0.0
        %2220 = vmatpush2.xpose.msra.mxu0 0.0
        %2221 = vmatprep.subr.mxu0 0.0
        %2222 = vmatpush2.xpose.msra.mxu0 0.0
        %2223 = vmatprep.subr.mxu0 0.0
        %2224 = vmatpush2.xpose.msra.mxu0 0.0
        %2225 = vmatprep.subr.mxu0 0.0
        %2226 = vmatpush2.xpose.msra.mxu0 0.0
        %2227 = vmatprep.mubr.f32.mxu0 0.0
        %2228 = vmatmul.mubr.f32.gmra.mxu0 %v2159
        %v2229 = vpop.f32.mrf.mxu0
        %v2230 = vadd.f32 0.0, %v2229
        %v2231 = vpop.f32.mrf.mxu0
        %2232 = vdwg.mxu0
        %v2233 = vsel %vm1320, %v2230, -inf
        %2234 = vmax.xlane.f32.xlu0 %v2233
        %v2235 = vpop.xlane.xlu0 %2234
        %v2236 = vsub.f32 %v2230, %v2235
        %v2237 = vmul.f32 %v2236, 1.442695
        %v2238 = vpow.pop %v2237
        %v2239 = vsel %vm1320, %v2238, 0.0
        %2240 = vadd.xlane.f32.xlu0 %v2239
        %v2241 = vpop.xlane.xlu0 %2240
        %v2242 = vrcp.pop %v2241
        %v2243 = vmul.f32 %v2238, %v2242
        %2245 = vrot.lane.b32.xlu0 %v1316, 120
        %v2246 = vpop.permute.xlu0 %2245
        %v2249 = vsel %vm1320, %v2243, 0
        %2251 = vmatprep.subr.mxu0 0.0
        %2252 = vmatpush1.msra.mxu0 0.0
        %2253 = vmatprep.subr.mxu0 0.0
        %2254 = vmatpush1.msra.mxu0 0.0
        %2255 = vmatprep.subr.mxu0 0.0
        %2256 = vmatpush1.msra.mxu0 0.0
        %2257 = vmatprep.subr.mxu0 0.0
        %2258 = vmatpush1.msra.mxu0 0.0
        %2259 = vmatprep.subr.mxu0 0.0
        %2260 = vmatpush1.msra.mxu0 0.0
        %2261 = vmatprep.subr.mxu0 0.0
        %2262 = vmatpush1.msra.mxu0 0.0
        %2263 = vmatprep.subr.mxu0 0.0
        %2264 = vmatpush1.msra.mxu0 0.0
        %2265 = vmatprep.subr.mxu0 0.0
        %2266 = vmatpush1.msra.mxu0 0.0
        %2267 = vmatprep.subr.mxu0 0.0
        %2268 = vmatpush1.msra.mxu0 0.0
        %2269 = vmatprep.subr.mxu0 0.0
        %2270 = vmatpush1.msra.mxu0 0.0
        %2271 = vmatprep.subr.mxu0 0.0
        %2272 = vmatpush1.msra.mxu0 0.0
        %2273 = vmatprep.subr.mxu0 0.0
        %2274 = vmatpush1.msra.mxu0 0.0
        %2275 = vmatprep.subr.mxu0 0.0
        %2276 = vmatpush1.msra.mxu0 0.0
        %2277 = vmatprep.subr.mxu0 0.0
        %2278 = vmatpush1.msra.mxu0 0.0
        %2279 = vmatprep.subr.mxu0 0.0
        %2280 = vmatpush1.msra.mxu0 0.0
        %2281 = vmatprep.subr.mxu0 0.0
        %2282 = vmatpush1.msra.mxu0 %v2246
        %2283 = vmatprep.subr.mxu0 0.0
        %2284 = vmatpush2.msra.mxu0 0.0
        %2285 = vmatprep.subr.mxu0 0.0
        %2286 = vmatpush2.msra.mxu0 0.0
        %2287 = vmatprep.subr.mxu0 0.0
        %2288 = vmatpush2.msra.mxu0 0.0
        %2289 = vmatprep.subr.mxu0 0.0
        %2290 = vmatpush2.msra.mxu0 0.0
        %2291 = vmatprep.subr.mxu0 0.0
        %2292 = vmatpush2.msra.mxu0 0.0
        %2293 = vmatprep.subr.mxu0 0.0
        %2294 = vmatpush2.msra.mxu0 0.0
        %2295 = vmatprep.subr.mxu0 0.0
        %2296 = vmatpush2.msra.mxu0 0.0
        %2297 = vmatprep.subr.mxu0 0.0
        %2298 = vmatpush2.msra.mxu0 0.0
        %2299 = vmatprep.subr.mxu0 0.0
        %2300 = vmatpush2.msra.mxu0 0.0
        %2301 = vmatprep.subr.mxu0 0.0
        %2302 = vmatpush2.msra.mxu0 0.0
        %2303 = vmatprep.subr.mxu0 0.0
        %2304 = vmatpush2.msra.mxu0 0.0
        %2305 = vmatprep.subr.mxu0 0.0
        %2306 = vmatpush2.msra.mxu0 0.0
        %2307 = vmatprep.subr.mxu0 0.0
        %2308 = vmatpush2.msra.mxu0 0.0
        %2309 = vmatprep.subr.mxu0 0.0
        %2310 = vmatpush2.msra.mxu0 0.0
        %2311 = vmatprep.subr.mxu0 0.0
        %2312 = vmatpush2.msra.mxu0 0.0
        %2313 = vmatprep.subr.mxu0 0.0
        %2314 = vmatpush2.msra.mxu0 0.0
        %2315 = vmatprep.mubr.f32.mxu0 0.0
        %2316 = vmatmul.mubr.f32.gmra.mxu0 %v2249
        %v2317 = vpop.f32.mrf.mxu0
        %v2318 = vadd.f32 0.0, %v2317
        %v2319 = vpop.f32.mrf.mxu0
        %2320 = vdwg.mxu0
        %2321 = vrot.lane.b32.xlu0 %v1994, 112
        %v2322 = vpop.permute.xlu0 %2321
        %2323 = vrot.lane.b32.xlu0 %v1227, 112
        %v2324 = vpop.permute.xlu0 %2323
        %v2325 = vsel %vm1320, %v2322, 0
        %v2327 = vsel %vm1320, %v2324, 0
        %2329 = vmatprep.subr.mxu0 0.0
        %2330 = vmatpush1.xpose.msra.mxu0 0.0
        %2331 = vmatprep.subr.mxu0 0.0
        %2332 = vmatpush1.xpose.msra.mxu0 0.0
        %2333 = vmatprep.subr.mxu0 0.0
        %2334 = vmatpush1.xpose.msra.mxu0 0.0
        %2335 = vmatprep.subr.mxu0 0.0
        %2336 = vmatpush1.xpose.msra.mxu0 0.0
        %2337 = vmatprep.subr.mxu0 0.0
        %2338 = vmatpush1.xpose.msra.mxu0 0.0
        %2339 = vmatprep.subr.mxu0 0.0
        %2340 = vmatpush1.xpose.msra.mxu0 0.0
        %2341 = vmatprep.subr.mxu0 0.0
        %2342 = vmatpush1.xpose.msra.mxu0 0.0
        %2343 = vmatprep.subr.mxu0 0.0
        %2344 = vmatpush1.xpose.msra.mxu0 0.0
        %2345 = vmatprep.subr.mxu0 0.0
        %2346 = vmatpush1.xpose.msra.mxu0 0.0
        %2347 = vmatprep.subr.mxu0 0.0
        %2348 = vmatpush1.xpose.msra.mxu0 0.0
        %2349 = vmatprep.subr.mxu0 0.0
        %2350 = vmatpush1.xpose.msra.mxu0 0.0
        %2351 = vmatprep.subr.mxu0 0.0
        %2352 = vmatpush1.xpose.msra.mxu0 0.0
        %2353 = vmatprep.subr.mxu0 0.0
        %2354 = vmatpush1.xpose.msra.mxu0 0.0
        %2355 = vmatprep.subr.mxu0 0.0
        %2356 = vmatpush1.xpose.msra.mxu0 0.0
        %2357 = vmatprep.subr.mxu0 0.0
        %2358 = vmatpush1.xpose.msra.mxu0 0.0
        %2359 = vmatprep.subr.mxu0 0.0
        %2360 = vmatpush1.xpose.msra.mxu0 %v2327
        %2361 = vmatprep.subr.mxu0 0.0
        %2362 = vmatpush2.xpose.msra.mxu0 0.0
        %2363 = vmatprep.subr.mxu0 0.0
        %2364 = vmatpush2.xpose.msra.mxu0 0.0
        %2365 = vmatprep.subr.mxu0 0.0
        %2366 = vmatpush2.xpose.msra.mxu0 0.0
        %2367 = vmatprep.subr.mxu0 0.0
        %2368 = vmatpush2.xpose.msra.mxu0 0.0
        %2369 = vmatprep.subr.mxu0 0.0
        %2370 = vmatpush2.xpose.msra.mxu0 0.0
        %2371 = vmatprep.subr.mxu0 0.0
        %2372 = vmatpush2.xpose.msra.mxu0 0.0
        %2373 = vmatprep.subr.mxu0 0.0
        %2374 = vmatpush2.xpose.msra.mxu0 0.0
        %2375 = vmatprep.subr.mxu0 0.0
        %2376 = vmatpush2.xpose.msra.mxu0 0.0
        %2377 = vmatprep.subr.mxu0 0.0
        %2378 = vmatpush2.xpose.msra.mxu0 0.0
        %2379 = vmatprep.subr.mxu0 0.0
        %2380 = vmatpush2.xpose.msra.mxu0 0.0
        %2381 = vmatprep.subr.mxu0 0.0
        %2382 = vmatpush2.xpose.msra.mxu0 0.0
        %2383 = vmatprep.subr.mxu0 0.0
        %2384 = vmatpush2.xpose.msra.mxu0 0.0
        %2385 = vmatprep.subr.mxu0 0.0
        %2386 = vmatpush2.xpose.msra.mxu0 0.0
        %2387 = vmatprep.subr.mxu0 0.0
        %2388 = vmatpush2.xpose.msra.mxu0 0.0
        %2389 = vmatprep.subr.mxu0 0.0
        %2390 = vmatpush2.xpose.msra.mxu0 0.0
        %2391 = vmatprep.subr.mxu0 0.0
        %2392 = vmatpush2.xpose.msra.mxu0 0.0
        %2393 = vmatprep.mubr.f32.mxu0 0.0
        %2394 = vmatmul.mubr.f32.gmra.mxu0 %v2325
        %v2395 = vpop.f32.mrf.mxu0
        %v2396 = vadd.f32 0.0, %v2395
        %v2397 = vpop.f32.mrf.mxu0
        %2398 = vdwg.mxu0
        %v2399 = vsel %vm1320, %v2396, -inf
        %2400 = vmax.xlane.f32.xlu0 %v2399
        %v2401 = vpop.xlane.xlu0 %2400
        %v2402 = vsub.f32 %v2396, %v2401
        %v2403 = vmul.f32 %v2402, 1.442695
        %v2404 = vpow.pop %v2403
        %v2405 = vsel %vm1320, %v2404, 0.0
        %2406 = vadd.xlane.f32.xlu0 %v2405
        %v2407 = vpop.xlane.xlu0 %2406
        %v2408 = vrcp.pop %v2407
        %v2409 = vmul.f32 %v2404, %v2408
        %2410 = vrot.lane.b32.xlu0 %v1316, 112
        %v2411 = vpop.permute.xlu0 %2410
        %v2414 = vsel %vm1320, %v2409, 0
        %2416 = vmatprep.subr.mxu0 0.0
        %2417 = vmatpush1.msra.mxu0 0.0
        %2418 = vmatprep.subr.mxu0 0.0
        %2419 = vmatpush1.msra.mxu0 0.0
        %2420 = vmatprep.subr.mxu0 0.0
        %2421 = vmatpush1.msra.mxu0 0.0
        %2422 = vmatprep.subr.mxu0 0.0
        %2423 = vmatpush1.msra.mxu0 0.0
        %2424 = vmatprep.subr.mxu0 0.0
        %2425 = vmatpush1.msra.mxu0 0.0
        %2426 = vmatprep.subr.mxu0 0.0
        %2427 = vmatpush1.msra.mxu0 0.0
        %2428 = vmatprep.subr.mxu0 0.0
        %2429 = vmatpush1.msra.mxu0 0.0
        %2430 = vmatprep.subr.mxu0 0.0
        %2431 = vmatpush1.msra.mxu0 0.0
        %2432 = vmatprep.subr.mxu0 0.0
        %2433 = vmatpush1.msra.mxu0 0.0
        %2434 = vmatprep.subr.mxu0 0.0
        %2435 = vmatpush1.msra.mxu0 0.0
        %2436 = vmatprep.subr.mxu0 0.0
        %2437 = vmatpush1.msra.mxu0 0.0
        %2438 = vmatprep.subr.mxu0 0.0
        %2439 = vmatpush1.msra.mxu0 0.0
        %2440 = vmatprep.subr.mxu0 0.0
        %2441 = vmatpush1.msra.mxu0 0.0
        %2442 = vmatprep.subr.mxu0 0.0
        %2443 = vmatpush1.msra.mxu0 0.0
        %2444 = vmatprep.subr.mxu0 0.0
        %2445 = vmatpush1.msra.mxu0 0.0
        %2446 = vmatprep.subr.mxu0 0.0
        %2447 = vmatpush1.msra.mxu0 %v2411
        %2448 = vmatprep.subr.mxu0 0.0
        %2449 = vmatpush2.msra.mxu0 0.0
        %2450 = vmatprep.subr.mxu0 0.0
        %2451 = vmatpush2.msra.mxu0 0.0
        %2452 = vmatprep.subr.mxu0 0.0
        %2453 = vmatpush2.msra.mxu0 0.0
        %2454 = vmatprep.subr.mxu0 0.0
        %2455 = vmatpush2.msra.mxu0 0.0
        %2456 = vmatprep.subr.mxu0 0.0
        %2457 = vmatpush2.msra.mxu0 0.0
        %2458 = vmatprep.subr.mxu0 0.0
        %2459 = vmatpush2.msra.mxu0 0.0
        %2460 = vmatprep.subr.mxu0 0.0
        %2461 = vmatpush2.msra.mxu0 0.0
        %2462 = vmatprep.subr.mxu0 0.0
        %2463 = vmatpush2.msra.mxu0 0.0
        %2464 = vmatprep.subr.mxu0 0.0
        %2465 = vmatpush2.msra.mxu0 0.0
        %2466 = vmatprep.subr.mxu0 0.0
        %2467 = vmatpush2.msra.mxu0 0.0
        %2468 = vmatprep.subr.mxu0 0.0
        %2469 = vmatpush2.msra.mxu0 0.0
        %2470 = vmatprep.subr.mxu0 0.0
        %2471 = vmatpush2.msra.mxu0 0.0
        %2472 = vmatprep.subr.mxu0 0.0
        %2473 = vmatpush2.msra.mxu0 0.0
        %2474 = vmatprep.subr.mxu0 0.0
        %2475 = vmatpush2.msra.mxu0 0.0
        %2476 = vmatprep.subr.mxu0 0.0
        %2477 = vmatpush2.msra.mxu0 0.0
        %2478 = vmatprep.subr.mxu0 0.0
        %2479 = vmatpush2.msra.mxu0 0.0
        %2480 = vmatprep.mubr.f32.mxu0 0.0
        %2481 = vmatmul.mubr.f32.gmra.mxu0 %v2414
        %v2482 = vpop.f32.mrf.mxu0
        %v2483 = vadd.f32 0.0, %v2482
        %v2484 = vpop.f32.mrf.mxu0
        %2485 = vdwg.mxu0
        %2486 = vrot.lane.b32.xlu0 %v1994, 104
        %v2487 = vpop.permute.xlu0 %2486
        %2488 = vrot.lane.b32.xlu0 %v1227, 104
        %v2489 = vpop.permute.xlu0 %2488
        %v2490 = vsel %vm1320, %v2487, 0
        %v2492 = vsel %vm1320, %v2489, 0
        %2494 = vmatprep.subr.mxu0 0.0
        %2495 = vmatpush1.xpose.msra.mxu0 0.0
        %2496 = vmatprep.subr.mxu0 0.0
        %2497 = vmatpush1.xpose.msra.mxu0 0.0
        %2498 = vmatprep.subr.mxu0 0.0
        %2499 = vmatpush1.xpose.msra.mxu0 0.0
        %2500 = vmatprep.subr.mxu0 0.0
        %2501 = vmatpush1.xpose.msra.mxu0 0.0
        %2502 = vmatprep.subr.mxu0 0.0
        %2503 = vmatpush1.xpose.msra.mxu0 0.0
        %2504 = vmatprep.subr.mxu0 0.0
        %2505 = vmatpush1.xpose.msra.mxu0 0.0
        %2506 = vmatprep.subr.mxu0 0.0
        %2507 = vmatpush1.xpose.msra.mxu0 0.0
        %2508 = vmatprep.subr.mxu0 0.0
        %2509 = vmatpush1.xpose.msra.mxu0 0.0
        %2510 = vmatprep.subr.mxu0 0.0
        %2511 = vmatpush1.xpose.msra.mxu0 0.0
        %2512 = vmatprep.subr.mxu0 0.0
        %2513 = vmatpush1.xpose.msra.mxu0 0.0
        %2514 = vmatprep.subr.mxu0 0.0
        %2515 = vmatpush1.xpose.msra.mxu0 0.0
        %2516 = vmatprep.subr.mxu0 0.0
        %2517 = vmatpush1.xpose.msra.mxu0 0.0
        %2518 = vmatprep.subr.mxu0 0.0
        %2519 = vmatpush1.xpose.msra.mxu0 0.0
        %2520 = vmatprep.subr.mxu0 0.0
        %2521 = vmatpush1.xpose.msra.mxu0 0.0
        %2522 = vmatprep.subr.mxu0 0.0
        %2523 = vmatpush1.xpose.msra.mxu0 0.0
        %2524 = vmatprep.subr.mxu0 0.0
        %2525 = vmatpush1.xpose.msra.mxu0 %v2492
        %2526 = vmatprep.subr.mxu0 0.0
        %2527 = vmatpush2.xpose.msra.mxu0 0.0
        %2528 = vmatprep.subr.mxu0 0.0
        %2529 = vmatpush2.xpose.msra.mxu0 0.0
        %2530 = vmatprep.subr.mxu0 0.0
        %2531 = vmatpush2.xpose.msra.mxu0 0.0
        %2532 = vmatprep.subr.mxu0 0.0
        %2533 = vmatpush2.xpose.msra.mxu0 0.0
        %2534 = vmatprep.subr.mxu0 0.0
        %2535 = vmatpush2.xpose.msra.mxu0 0.0
        %2536 = vmatprep.subr.mxu0 0.0
        %2537 = vmatpush2.xpose.msra.mxu0 0.0
        %2538 = vmatprep.subr.mxu0 0.0
        %2539 = vmatpush2.xpose.msra.mxu0 0.0
        %2540 = vmatprep.subr.mxu0 0.0
        %2541 = vmatpush2.xpose.msra.mxu0 0.0
        %2542 = vmatprep.subr.mxu0 0.0
        %2543 = vmatpush2.xpose.msra.mxu0 0.0
        %2544 = vmatprep.subr.mxu0 0.0
        %2545 = vmatpush2.xpose.msra.mxu0 0.0
        %2546 = vmatprep.subr.mxu0 0.0
        %2547 = vmatpush2.xpose.msra.mxu0 0.0
        %2548 = vmatprep.subr.mxu0 0.0
        %2549 = vmatpush2.xpose.msra.mxu0 0.0
        %2550 = vmatprep.subr.mxu0 0.0
        %2551 = vmatpush2.xpose.msra.mxu0 0.0
        %2552 = vmatprep.subr.mxu0 0.0
        %2553 = vmatpush2.xpose.msra.mxu0 0.0
        %2554 = vmatprep.subr.mxu0 0.0
        %2555 = vmatpush2.xpose.msra.mxu0 0.0
        %2556 = vmatprep.subr.mxu0 0.0
        %2557 = vmatpush2.xpose.msra.mxu0 0.0
        %2558 = vmatprep.mubr.f32.mxu0 0.0
        %2559 = vmatmul.mubr.f32.gmra.mxu0 %v2490
        %v2560 = vpop.f32.mrf.mxu0
        %v2561 = vadd.f32 0.0, %v2560
        %v2562 = vpop.f32.mrf.mxu0
        %2563 = vdwg.mxu0
        %v2564 = vsel %vm1320, %v2561, -inf
        %2565 = vmax.xlane.f32.xlu0 %v2564
        %v2566 = vpop.xlane.xlu0 %2565
        %v2567 = vsub.f32 %v2561, %v2566
        %v2568 = vmul.f32 %v2567, 1.442695
        %v2569 = vpow.pop %v2568
        %v2570 = vsel %vm1320, %v2569, 0.0
        %2571 = vadd.xlane.f32.xlu0 %v2570
        %v2572 = vpop.xlane.xlu0 %2571
        %v2573 = vrcp.pop %v2572
        %v2574 = vmul.f32 %v2569, %v2573
        %2575 = vrot.lane.b32.xlu0 %v1316, 104
        %v2576 = vpop.permute.xlu0 %2575
        %v2579 = vsel %vm1320, %v2574, 0
        %2581 = vmatprep.subr.mxu0 0.0
        %2582 = vmatpush1.msra.mxu0 0.0
        %2583 = vmatprep.subr.mxu0 0.0
        %2584 = vmatpush1.msra.mxu0 0.0
        %2585 = vmatprep.subr.mxu0 0.0
        %2586 = vmatpush1.msra.mxu0 0.0
        %2587 = vmatprep.subr.mxu0 0.0
        %2588 = vmatpush1.msra.mxu0 0.0
        %2589 = vmatprep.subr.mxu0 0.0
        %2590 = vmatpush1.msra.mxu0 0.0
        %2591 = vmatprep.subr.mxu0 0.0
        %2592 = vmatpush1.msra.mxu0 0.0
        %2593 = vmatprep.subr.mxu0 0.0
        %2594 = vmatpush1.msra.mxu0 0.0
        %2595 = vmatprep.subr.mxu0 0.0
        %2596 = vmatpush1.msra.mxu0 0.0
        %2597 = vmatprep.subr.mxu0 0.0
        %2598 = vmatpush1.msra.mxu0 0.0
        %2599 = vmatprep.subr.mxu0 0.0
        %2600 = vmatpush1.msra.mxu0 0.0
        %2601 = vmatprep.subr.mxu0 0.0
        %2602 = vmatpush1.msra.mxu0 0.0
        %2603 = vmatprep.subr.mxu0 0.0
        %2604 = vmatpush1.msra.mxu0 0.0
        %2605 = vmatprep.subr.mxu0 0.0
        %2606 = vmatpush1.msra.mxu0 0.0
        %2607 = vmatprep.subr.mxu0 0.0
        %2608 = vmatpush1.msra.mxu0 0.0
        %2609 = vmatprep.subr.mxu0 0.0
        %2610 = vmatpush1.msra.mxu0 0.0
        %2611 = vmatprep.subr.mxu0 0.0
        %2612 = vmatpush1.msra.mxu0 %v2576
        %2613 = vmatprep.subr.mxu0 0.0
        %2614 = vmatpush2.msra.mxu0 0.0
        %2615 = vmatprep.subr.mxu0 0.0
        %2616 = vmatpush2.msra.mxu0 0.0
        %2617 = vmatprep.subr.mxu0 0.0
        %2618 = vmatpush2.msra.mxu0 0.0
        %2619 = vmatprep.subr.mxu0 0.0
        %2620 = vmatpush2.msra.mxu0 0.0
        %2621 = vmatprep.subr.mxu0 0.0
        %2622 = vmatpush2.msra.mxu0 0.0
        %2623 = vmatprep.subr.mxu0 0.0
        %2624 = vmatpush2.msra.mxu0 0.0
        %2625 = vmatprep.subr.mxu0 0.0
        %2626 = vmatpush2.msra.mxu0 0.0
        %2627 = vmatprep.subr.mxu0 0.0
        %2628 = vmatpush2.msra.mxu0 0.0
        %2629 = vmatprep.subr.mxu0 0.0
        %2630 = vmatpush2.msra.mxu0 0.0
        %2631 = vmatprep.subr.mxu0 0.0
        %2632 = vmatpush2.msra.mxu0 0.0
        %2633 = vmatprep.subr.mxu0 0.0
        %2634 = vmatpush2.msra.mxu0 0.0
        %2635 = vmatprep.subr.mxu0 0.0
        %2636 = vmatpush2.msra.mxu0 0.0
        %2637 = vmatprep.subr.mxu0 0.0
        %2638 = vmatpush2.msra.mxu0 0.0
        %2639 = vmatprep.subr.mxu0 0.0
        %2640 = vmatpush2.msra.mxu0 0.0
        %2641 = vmatprep.subr.mxu0 0.0
        %2642 = vmatpush2.msra.mxu0 0.0
        %2643 = vmatprep.subr.mxu0 0.0
        %2644 = vmatpush2.msra.mxu0 0.0
        %2645 = vmatprep.mubr.f32.mxu0 0.0
        %2646 = vmatmul.mubr.f32.gmra.mxu0 %v2579
        %v2647 = vpop.f32.mrf.mxu0
        %v2648 = vadd.f32 0.0, %v2647
        %v2649 = vpop.f32.mrf.mxu0
        %2650 = vdwg.mxu0
        %2652 = vrot.lane.b32.xlu0 %v2318, 8
        %v2653 = vpop.permute.xlu0 %2652
        %2656 = vrot.lane.b32.xlu0 %v2483, 16
        %v2657 = vpop.permute.xlu0 %2656
        %2660 = vrot.lane.b32.xlu0 %v2648, 24
        %v2661 = vpop.permute.xlu0 %2660
        %v2663 = vsel %vm1320, %v2152, %v2653
        %v2664 = vsel %vm1990, %v2663, %v2657
        %v2665 = vsel %vm1992, %v2664, %v2661
        %v2666 = vld [vmem:[%s1003] sm:$0xff]
        %v2667 = vld [vmem:[%s1003 + $0x8] sm:$0xff]
        %v2668 = vld [vmem:[%s1003 + $0x10] sm:$0xff]
        %v2669 = vld [vmem:[%s1003 + $0x18] sm:$0xff]
        %v2670 = vlaneseq
        %v2671 = vshrl.u32 %v2670, 7
        %v2672 = vsub.s32 3, %v2671
        %v2673 = vrot.slane %v1052, %v2672
        %v2675 = vsel %vm1065, %v1993, 0
        %v2678 = vsel %vm1065, %v2665, 0
        %2680 = vmatprep.subr.mxu0 0.0
        %2681 = vmatpush1.msra.mxu0 0.0
        %2682 = vmatprep.subr.mxu0 0.0
        %2683 = vmatpush1.msra.mxu0 0.0
        %2684 = vmatprep.subr.mxu0 0.0
        %2685 = vmatpush1.msra.mxu0 0.0
        %2686 = vmatprep.subr.mxu0 0.0
        %2687 = vmatpush1.msra.mxu0 0.0
        %2688 = vmatprep.subr.mxu0 0.0
        %2689 = vmatpush1.msra.mxu0 0.0
        %2690 = vmatprep.subr.mxu0 0.0
        %2691 = vmatpush1.msra.mxu0 0.0
        %2692 = vmatprep.subr.mxu0 0.0
        %2693 = vmatpush1.msra.mxu0 0.0
        %2694 = vmatprep.subr.mxu0 0.0
        %2695 = vmatpush1.msra.mxu0 0.0
        %2696 = vmatprep.subr.mxu0 0.0
        %2697 = vmatpush1.msra.mxu0 0.0
        %2698 = vmatprep.subr.mxu0 0.0
        %2699 = vmatpush1.msra.mxu0 0.0
        %2700 = vmatprep.subr.mxu0 0.0
        %2701 = vmatpush1.msra.mxu0 0.0
        %2702 = vmatprep.subr.mxu0 0.0
        %2703 = vmatpush1.msra.mxu0 0.0
        %2704 = vmatprep.subr.mxu0 0.0
        %2705 = vmatpush1.msra.mxu0 %v2669
        %2706 = vmatprep.subr.mxu0 0.0
        %2707 = vmatpush1.msra.mxu0 %v2668
        %2708 = vmatprep.subr.mxu0 0.0
        %2709 = vmatpush1.msra.mxu0 %v2667
        %2710 = vmatprep.subr.mxu0 0.0
        %2711 = vmatpush1.msra.mxu0 %v2666
        %2712 = vmatprep.subr.mxu0 0.0
        %2713 = vmatpush2.msra.mxu0 0.0
        %2714 = vmatprep.subr.mxu0 0.0
        %2715 = vmatpush2.msra.mxu0 0.0
        %2716 = vmatprep.subr.mxu0 0.0
        %2717 = vmatpush2.msra.mxu0 0.0
        %2718 = vmatprep.subr.mxu0 0.0
        %2719 = vmatpush2.msra.mxu0 0.0
        %2720 = vmatprep.subr.mxu0 0.0
        %2721 = vmatpush2.msra.mxu0 0.0
        %2722 = vmatprep.subr.mxu0 0.0
        %2723 = vmatpush2.msra.mxu0 0.0
        %2724 = vmatprep.subr.mxu0 0.0
        %2725 = vmatpush2.msra.mxu0 0.0
        %2726 = vmatprep.subr.mxu0 0.0
        %2727 = vmatpush2.msra.mxu0 0.0
        %2728 = vmatprep.subr.mxu0 0.0
        %2729 = vmatpush2.msra.mxu0 0.0
        %2730 = vmatprep.subr.mxu0 0.0
        %2731 = vmatpush2.msra.mxu0 0.0
        %2732 = vmatprep.subr.mxu0 0.0
        %2733 = vmatpush2.msra.mxu0 0.0
        %2734 = vmatprep.subr.mxu0 0.0
        %2735 = vmatpush2.msra.mxu0 0.0
        %2736 = vmatprep.subr.mxu0 0.0
        %2737 = vmatpush2.msra.mxu0 0.0
        %2738 = vmatprep.subr.mxu0 0.0
        %2739 = vmatpush2.msra.mxu0 0.0
        %2740 = vmatprep.subr.mxu0 0.0
        %2741 = vmatpush2.msra.mxu0 0.0
        %2742 = vmatprep.subr.mxu0 0.0
        %2743 = vmatpush2.msra.mxu0 0.0
        %2744 = vmatprep.mubr.f32.mxu0 0.0
        %2745 = vmatmul.mubr.f32.gmra.mxu0 %v2675
        %v2746 = vpop.f32.mrf.mxu0
        %v2747 = vadd.f32 %v2673, %v2746
        %v2748 = vpop.f32.mrf.mxu0
        %2749 = vmatprep.mubr.f32.mxu0 0.0
        %2750 = vmatmul.mubr.f32.gmra.mxu0 %v2678
        %v2751 = vpop.f32.mrf.mxu0
        %v2752 = vadd.f32 %v2673, %v2751
        %v2753 = vpop.f32.mrf.mxu0
        %2754 = vdwg.mxu0
        %v2755 = vadd.f32 %v1040, %v2747
        %v2756 = vadd.f32 %v1041, %v2752
        %v2757 = vsel %vm1065, %v2755, 0.0
        %2758 = vadd.xlane.f32.xlu0 %v2757
        %v2759 = vpop.xlane.xlu0 %2758
        %v2760 = vsel %vm1065, %v2756, 0.0
        %2761 = vadd.xlane.f32.xlu0 %v2760
        %v2762 = vpop.xlane.xlu0 %2761
        %v2763 = vmul.f32 %v2755, %v2755
        %v2764 = vmul.f32 %v2756, %v2756
        %v2765 = vsel %vm1065, %v2763, 0.0
        %2766 = vadd.xlane.f32.xlu0 %v2765
        %v2767 = vpop.xlane.xlu0 %2766
        %v2768 = vsel %vm1065, %v2764, 0.0
        %2769 = vadd.xlane.f32.xlu0 %v2768
        %v2770 = vpop.xlane.xlu0 %2769
        %v2771 = vmul.f32 %v2759, 0.03125
        %v2772 = vmul.f32 %v2762, 0.03125
        %v2773 = vmul.f32 %v2767, 0.03125
        %v2774 = vmul.f32 %v2770, 0.03125
        %v2775 = vmul.f32 %v2771, %v2771
        %v2776 = vmul.f32 %v2772, %v2772
        %v2777 = vsub.f32 %v2773, %v2775
        %v2778 = vsub.f32 %v2774, %v2776
        %v2779 = vsub.f32 %v2755, %v2771
        %v2780 = vsub.f32 %v2756, %v2772
        %v2781 = vadd.f32 %v2777, 1e-05
        %v2782 = vadd.f32 %v2778, 1e-05
        %v2783 = vrsqrt.pop %v2781
        %v2784 = vrsqrt.pop %v2782
        %v2785 = vmul.f32 %v2779, %v2783
        %v2786 = vmul.f32 %v2780, %v2784
        %v2787 = vlaneseq
        %v2788 = vshrl.u32 %v2787, 7
        %v2789 = vsub.s32 1, %v2788
        %v2790 = vrot.slane %v1053, %v2789
        %v2791 = vmul.f32 %v2785, %v2790
        %v2792 = vmul.f32 %v2786, %v2790
        %v2793 = vlaneseq
        %v2794 = vshrl.u32 %v2793, 7
        %v2795 = vsub.s32 2, %v2794
        %v2796 = vrot.slane %v1053, %v2795
        %v2797 = vadd.f32 %v2791, %v2796
        %v2798 = vadd.f32 %v2792, %v2796
        %v2799 = vadd.f32 %v2797, %v1042
        %v2800 = vadd.f32 %v2798, %v1043
        %v2801 = vld [vmem:[%s1008] sm:$0xff]
        %v2802 = vld [vmem:[%s1008 + $0x8] sm:$0xff]
        %v2803 = vld [vmem:[%s1008 + $0x10] sm:$0xff]
        %v2804 = vld [vmem:[%s1008 + $0x18] sm:$0xff]
        %v2805 = vlaneseq
        %v2806 = vshrl.u32 %v2805, 7
        %v2807 = vsub.s32 4, %v2806
        %v2808 = vrot.slane %v1052, %v2807
        %v2810 = vsel %vm1065, %v2799, 0
        %v2813 = vsel %vm1065, %v2800, 0
        %2815 = vmatprep.subr.mxu0 0.0
        %2816 = vmatpush1.msra.mxu0 0.0
        %2817 = vmatprep.subr.mxu0 0.0
        %2818 = vmatpush1.msra.mxu0 0.0
        %2819 = vmatprep.subr.mxu0 0.0
        %2820 = vmatpush1.msra.mxu0 0.0
        %2821 = vmatprep.subr.mxu0 0.0
        %2822 = vmatpush1.msra.mxu0 0.0
        %2823 = vmatprep.subr.mxu0 0.0
        %2824 = vmatpush1.msra.mxu0 0.0
        %2825 = vmatprep.subr.mxu0 0.0
        %2826 = vmatpush1.msra.mxu0 0.0
        %2827 = vmatprep.subr.mxu0 0.0
        %2828 = vmatpush1.msra.mxu0 0.0
        %2829 = vmatprep.subr.mxu0 0.0
        %2830 = vmatpush1.msra.mxu0 0.0
        %2831 = vmatprep.subr.mxu0 0.0
        %2832 = vmatpush1.msra.mxu0 0.0
        %2833 = vmatprep.subr.mxu0 0.0
        %2834 = vmatpush1.msra.mxu0 0.0
        %2835 = vmatprep.subr.mxu0 0.0
        %2836 = vmatpush1.msra.mxu0 0.0
        %2837 = vmatprep.subr.mxu0 0.0
        %2838 = vmatpush1.msra.mxu0 0.0
        %2839 = vmatprep.subr.mxu0 0.0
        %2840 = vmatpush1.msra.mxu0 %v2804
        %2841 = vmatprep.subr.mxu0 0.0
        %2842 = vmatpush1.msra.mxu0 %v2803
        %2843 = vmatprep.subr.mxu0 0.0
        %2844 = vmatpush1.msra.mxu0 %v2802
        %2845 = vmatprep.subr.mxu0 0.0
        %2846 = vmatpush1.msra.mxu0 %v2801
        %2847 = vmatprep.subr.mxu0 0.0
        %2848 = vmatpush2.msra.mxu0 0.0
        %2849 = vmatprep.subr.mxu0 0.0
        %2850 = vmatpush2.msra.mxu0 0.0
        %2851 = vmatprep.subr.mxu0 0.0
        %2852 = vmatpush2.msra.mxu0 0.0
        %2853 = vmatprep.subr.mxu0 0.0
        %2854 = vmatpush2.msra.mxu0 0.0
        %2855 = vmatprep.subr.mxu0 0.0
        %2856 = vmatpush2.msra.mxu0 0.0
        %2857 = vmatprep.subr.mxu0 0.0
        %2858 = vmatpush2.msra.mxu0 0.0
        %2859 = vmatprep.subr.mxu0 0.0
        %2860 = vmatpush2.msra.mxu0 0.0
        %2861 = vmatprep.subr.mxu0 0.0
        %2862 = vmatpush2.msra.mxu0 0.0
        %2863 = vmatprep.subr.mxu0 0.0
        %2864 = vmatpush2.msra.mxu0 0.0
        %2865 = vmatprep.subr.mxu0 0.0
        %2866 = vmatpush2.msra.mxu0 0.0
        %2867 = vmatprep.subr.mxu0 0.0
        %2868 = vmatpush2.msra.mxu0 0.0
        %2869 = vmatprep.subr.mxu0 0.0
        %2870 = vmatpush2.msra.mxu0 0.0
        %2871 = vmatprep.subr.mxu0 0.0
        %2872 = vmatpush2.msra.mxu0 0.0
        %2873 = vmatprep.subr.mxu0 0.0
        %2874 = vmatpush2.msra.mxu0 0.0
        %2875 = vmatprep.subr.mxu0 0.0
        %2876 = vmatpush2.msra.mxu0 0.0
        %2877 = vmatprep.subr.mxu0 0.0
        %2878 = vmatpush2.msra.mxu0 0.0
        %2879 = vmatprep.mubr.f32.mxu0 0.0
        %2880 = vmatmul.mubr.f32.gmra.mxu0 %v2810
        %v2881 = vpop.f32.mrf.mxu0
        %v2882 = vadd.f32 %v2808, %v2881
        %v2883 = vpop.f32.mrf.mxu0
        %2884 = vmatprep.mubr.f32.mxu0 0.0
        %2885 = vmatmul.mubr.f32.gmra.mxu0 %v2813
        %v2886 = vpop.f32.mrf.mxu0
        %v2887 = vadd.f32 %v2808, %v2886
        %v2888 = vpop.f32.mrf.mxu0
        %2889 = vdwg.mxu0
        %v2890 = vadd.f32 %v1044, %v1048
        %v2891 = vadd.f32 %v1045, %v1049
        %v2892 = vadd.f32 %v1046, %v1050
        %v2893 = vadd.f32 %v1047, %v1051
        %v2894 = vld [vmem:[%s1013] sm:$0xff]
        %v2895 = vld [vmem:[%s1013 + $0x8] sm:$0xff]
        %v2896 = vld [vmem:[%s1013 + $0x10] sm:$0xff]
        %v2897 = vld [vmem:[%s1013 + $0x18] sm:$0xff]
        %v2898 = vlaneseq
        %v2899 = vshrl.u32 %v2898, 7
        %v2900 = vsub.s32 5, %v2899
        %v2901 = vrot.slane %v1052, %v2900
        %v2903 = vsel %vm1065, %v2890, 0
        %v2906 = vsel %vm1065, %v2891, 0
        %v2909 = vsel %vm1065, %v2892, 0
        %v2912 = vsel %vm1065, %v2893, 0
        %2914 = vmatprep.subr.mxu0 0.0
        %2915 = vmatpush1.msra.mxu0 0.0
        %2916 = vmatprep.subr.mxu0 0.0
        %2917 = vmatpush1.msra.mxu0 0.0
        %2918 = vmatprep.subr.mxu0 0.0
        %2919 = vmatpush1.msra.mxu0 0.0
        %2920 = vmatprep.subr.mxu0 0.0
        %2921 = vmatpush1.msra.mxu0 0.0
        %2922 = vmatprep.subr.mxu0 0.0
        %2923 = vmatpush1.msra.mxu0 0.0
        %2924 = vmatprep.subr.mxu0 0.0
        %2925 = vmatpush1.msra.mxu0 0.0
        %2926 = vmatprep.subr.mxu0 0.0
        %2927 = vmatpush1.msra.mxu0 0.0
        %2928 = vmatprep.subr.mxu0 0.0
        %2929 = vmatpush1.msra.mxu0 0.0
        %2930 = vmatprep.subr.mxu0 0.0
        %2931 = vmatpush1.msra.mxu0 0.0
        %2932 = vmatprep.subr.mxu0 0.0
        %2933 = vmatpush1.msra.mxu0 0.0
        %2934 = vmatprep.subr.mxu0 0.0
        %2935 = vmatpush1.msra.mxu0 0.0
        %2936 = vmatprep.subr.mxu0 0.0
        %2937 = vmatpush1.msra.mxu0 0.0
        %2938 = vmatprep.subr.mxu0 0.0
        %2939 = vmatpush1.msra.mxu0 %v2897
        %2940 = vmatprep.subr.mxu0 0.0
        %2941 = vmatpush1.msra.mxu0 %v2896
        %2942 = vmatprep.subr.mxu0 0.0
        %2943 = vmatpush1.msra.mxu0 %v2895
        %2944 = vmatprep.subr.mxu0 0.0
        %2945 = vmatpush1.msra.mxu0 %v2894
        %2946 = vmatprep.subr.mxu0 0.0
        %2947 = vmatpush2.msra.mxu0 0.0
        %2948 = vmatprep.subr.mxu0 0.0
        %2949 = vmatpush2.msra.mxu0 0.0
        %2950 = vmatprep.subr.mxu0 0.0
        %2951 = vmatpush2.msra.mxu0 0.0
        %2952 = vmatprep.subr.mxu0 0.0
        %2953 = vmatpush2.msra.mxu0 0.0
        %2954 = vmatprep.subr.mxu0 0.0
        %2955 = vmatpush2.msra.mxu0 0.0
        %2956 = vmatprep.subr.mxu0 0.0
        %2957 = vmatpush2.msra.mxu0 0.0
        %2958 = vmatprep.subr.mxu0 0.0
        %2959 = vmatpush2.msra.mxu0 0.0
        %2960 = vmatprep.subr.mxu0 0.0
        %2961 = vmatpush2.msra.mxu0 0.0
        %2962 = vmatprep.subr.mxu0 0.0
        %2963 = vmatpush2.msra.mxu0 0.0
        %2964 = vmatprep.subr.mxu0 0.0
        %2965 = vmatpush2.msra.mxu0 0.0
        %2966 = vmatprep.subr.mxu0 0.0
        %2967 = vmatpush2.msra.mxu0 0.0
        %2968 = vmatprep.subr.mxu0 0.0
        %2969 = vmatpush2.msra.mxu0 0.0
        %2970 = vmatprep.subr.mxu0 0.0
        %2971 = vmatpush2.msra.mxu0 0.0
        %2972 = vmatprep.subr.mxu0 0.0
        %2973 = vmatpush2.msra.mxu0 0.0
        %2974 = vmatprep.subr.mxu0 0.0
        %2975 = vmatpush2.msra.mxu0 0.0
        %2976 = vmatprep.subr.mxu0 0.0
        %2977 = vmatpush2.msra.mxu0 0.0
        %2978 = vmatprep.mubr.f32.mxu0 0.0
        %2979 = vmatmul.mubr.f32.gmra.mxu0 %v2903
        %v2980 = vpop.f32.mrf.mxu0
        %v2981 = vadd.f32 %v2901, %v2980
        %v2982 = vpop.f32.mrf.mxu0
        %2983 = vmatprep.mubr.f32.mxu0 0.0
        %2984 = vmatmul.mubr.f32.gmra.mxu0 %v2906
        %v2985 = vpop.f32.mrf.mxu0
        %v2986 = vadd.f32 %v2901, %v2985
        %v2987 = vpop.f32.mrf.mxu0
        %2988 = vmatprep.mubr.f32.mxu0 0.0
        %2989 = vmatmul.mubr.f32.gmra.mxu0 %v2909
        %v2990 = vpop.f32.mrf.mxu0
        %v2991 = vadd.f32 %v2901, %v2990
        %v2992 = vpop.f32.mrf.mxu0
        %2993 = vmatprep.mubr.f32.mxu0 0.0
        %2994 = vmatmul.mubr.f32.gmra.mxu0 %v2912
        %v2995 = vpop.f32.mrf.mxu0
        %v2996 = vadd.f32 %v2901, %v2995
        %v2997 = vpop.f32.mrf.mxu0
        %2998 = vdwg.mxu0
        %v2999 = vld [vmem:[%s793] sm:$0xff]
        %v3000 = vld [vmem:[%s793 + $0x8] sm:$0xff]
        %v3001 = vld [vmem:[%s793 + $0x10] sm:$0xff]
        %v3002 = vld [vmem:[%s793 + $0x18] sm:$0xff]
        %v3003 = vlaneseq
        %v3004 = vshrl.u32 %v3003, 7
        %v3005 = vsub.s32 6, %v3004
        %v3006 = vrot.slane %v1052, %v3005
        %v3008 = vsel %vm1065, %v1044, 0
        %v3011 = vsel %vm1065, %v1045, 0
        %v3014 = vsel %vm1065, %v1046, 0
        %v3017 = vsel %vm1065, %v1047, 0
        %3019 = vmatprep.subr.mxu0 0.0
        %3020 = vmatpush1.msra.mxu0 0.0
        %3021 = vmatprep.subr.mxu0 0.0
        %3022 = vmatpush1.msra.mxu0 0.0
        %3023 = vmatprep.subr.mxu0 0.0
        %3024 = vmatpush1.msra.mxu0 0.0
        %3025 = vmatprep.subr.mxu0 0.0
        %3026 = vmatpush1.msra.mxu0 0.0
        %3027 = vmatprep.subr.mxu0 0.0
        %3028 = vmatpush1.msra.mxu0 0.0
        %3029 = vmatprep.subr.mxu0 0.0
        %3030 = vmatpush1.msra.mxu0 0.0
        %3031 = vmatprep.subr.mxu0 0.0
        %3032 = vmatpush1.msra.mxu0 0.0
        %3033 = vmatprep.subr.mxu0 0.0
        %3034 = vmatpush1.msra.mxu0 0.0
        %3035 = vmatprep.subr.mxu0 0.0
        %3036 = vmatpush1.msra.mxu0 0.0
        %3037 = vmatprep.subr.mxu0 0.0
        %3038 = vmatpush1.msra.mxu0 0.0
        %3039 = vmatprep.subr.mxu0 0.0
        %3040 = vmatpush1.msra.mxu0 0.0
        %3041 = vmatprep.subr.mxu0 0.0
        %3042 = vmatpush1.msra.mxu0 0.0
        %3043 = vmatprep.subr.mxu0 0.0
        %3044 = vmatpush1.msra.mxu0 %v3002
        %3045 = vmatprep.subr.mxu0 0.0
        %3046 = vmatpush1.msra.mxu0 %v3001
        %3047 = vmatprep.subr.mxu0 0.0
        %3048 = vmatpush1.msra.mxu0 %v3000
        %3049 = vmatprep.subr.mxu0 0.0
        %3050 = vmatpush1.msra.mxu0 %v2999
        %3051 = vmatprep.subr.mxu0 0.0
        %3052 = vmatpush2.msra.mxu0 0.0
        %3053 = vmatprep.subr.mxu0 0.0
        %3054 = vmatpush2.msra.mxu0 0.0
        %3055 = vmatprep.subr.mxu0 0.0
        %3056 = vmatpush2.msra.mxu0 0.0
        %3057 = vmatprep.subr.mxu0 0.0
        %3058 = vmatpush2.msra.mxu0 0.0
        %3059 = vmatprep.subr.mxu0 0.0
        %3060 = vmatpush2.msra.mxu0 0.0
        %3061 = vmatprep.subr.mxu0 0.0
        %3062 = vmatpush2.msra.mxu0 0.0
        %3063 = vmatprep.subr.mxu0 0.0
        %3064 = vmatpush2.msra.mxu0 0.0
        %3065 = vmatprep.subr.mxu0 0.0
        %3066 = vmatpush2.msra.mxu0 0.0
        %3067 = vmatprep.subr.mxu0 0.0
        %3068 = vmatpush2.msra.mxu0 0.0
        %3069 = vmatprep.subr.mxu0 0.0
        %3070 = vmatpush2.msra.mxu0 0.0
        %3071 = vmatprep.subr.mxu0 0.0
        %3072 = vmatpush2.msra.mxu0 0.0
        %3073 = vmatprep.subr.mxu0 0.0
        %3074 = vmatpush2.msra.mxu0 0.0
        %3075 = vmatprep.subr.mxu0 0.0
        %3076 = vmatpush2.msra.mxu0 0.0
        %3077 = vmatprep.subr.mxu0 0.0
        %3078 = vmatpush2.msra.mxu0 0.0
        %3079 = vmatprep.subr.mxu0 0.0
        %3080 = vmatpush2.msra.mxu0 0.0
        %3081 = vmatprep.subr.mxu0 0.0
        %3082 = vmatpush2.msra.mxu0 0.0
        %3083 = vmatprep.mubr.f32.mxu0 0.0
        %3084 = vmatmul.mubr.f32.gmra.mxu0 %v3008
        %v3085 = vpop.f32.mrf.mxu0
        %v3086 = vadd.f32 %v3006, %v3085
        %v3087 = vpop.f32.mrf.mxu0
        %3088 = vmatprep.mubr.f32.mxu0 0.0
        %3089 = vmatmul.mubr.f32.gmra.mxu0 %v3011
        %v3090 = vpop.f32.mrf.mxu0
        %v3091 = vadd.f32 %v3006, %v3090
        %v3092 = vpop.f32.mrf.mxu0
        %3093 = vmatprep.mubr.f32.mxu0 0.0
        %3094 = vmatmul.mubr.f32.gmra.mxu0 %v3014
        %v3095 = vpop.f32.mrf.mxu0
        %v3096 = vadd.f32 %v3006, %v3095
        %v3097 = vpop.f32.mrf.mxu0
        %3098 = vmatprep.mubr.f32.mxu0 0.0
        %3099 = vmatmul.mubr.f32.gmra.mxu0 %v3017
        %v3100 = vpop.f32.mrf.mxu0
        %v3101 = vadd.f32 %v3006, %v3100
        %v3102 = vpop.f32.mrf.mxu0
        %3103 = vdwg.mxu0
        %v3104 = vmul.f32 %v2882, 0.35355338
        %v3106 = vsel %vm1320, %v3104, 0
        %v3109 = vsel %vm1320, %v2981, 0
        %v3112 = vsel %vm1320, %v2986, 0
        %3114 = vmatprep.subr.mxu0 0.0
        %3115 = vmatpush1.xpose.msra.mxu0 0.0
        %3116 = vmatprep.subr.mxu0 0.0
        %3117 = vmatpush1.xpose.msra.mxu0 0.0
        %3118 = vmatprep.subr.mxu0 0.0
        %3119 = vmatpush1.xpose.msra.mxu0 0.0
        %3120 = vmatprep.subr.mxu0 0.0
        %3121 = vmatpush1.xpose.msra.mxu0 0.0
        %3122 = vmatprep.subr.mxu0 0.0
        %3123 = vmatpush1.xpose.msra.mxu0 0.0
        %3124 = vmatprep.subr.mxu0 0.0
        %3125 = vmatpush1.xpose.msra.mxu0 0.0
        %3126 = vmatprep.subr.mxu0 0.0
        %3127 = vmatpush1.xpose.msra.mxu0 0.0
        %3128 = vmatprep.subr.mxu0 0.0
        %3129 = vmatpush1.xpose.msra.mxu0 0.0
        %3130 = vmatprep.subr.mxu0 0.0
        %3131 = vmatpush1.xpose.msra.mxu0 0.0
        %3132 = vmatprep.subr.mxu0 0.0
        %3133 = vmatpush1.xpose.msra.mxu0 0.0
        %3134 = vmatprep.subr.mxu0 0.0
        %3135 = vmatpush1.xpose.msra.mxu0 0.0
        %3136 = vmatprep.subr.mxu0 0.0
        %3137 = vmatpush1.xpose.msra.mxu0 0.0
        %3138 = vmatprep.subr.mxu0 0.0
        %3139 = vmatpush1.xpose.msra.mxu0 0.0
        %3140 = vmatprep.subr.mxu0 0.0
        %3141 = vmatpush1.xpose.msra.mxu0 0.0
        %3142 = vmatprep.subr.mxu0 0.0
        %3143 = vmatpush1.xpose.msra.mxu0 %v3112
        %3144 = vmatprep.subr.mxu0 0.0
        %3145 = vmatpush1.xpose.msra.mxu0 %v3109
        %3146 = vmatprep.subr.mxu0 0.0
        %3147 = vmatpush2.xpose.msra.mxu0 0.0
        %3148 = vmatprep.subr.mxu0 0.0
        %3149 = vmatpush2.xpose.msra.mxu0 0.0
        %3150 = vmatprep.subr.mxu0 0.0
        %3151 = vmatpush2.xpose.msra.mxu0 0.0
        %3152 = vmatprep.subr.mxu0 0.0
        %3153 = vmatpush2.xpose.msra.mxu0 0.0
        %3154 = vmatprep.subr.mxu0 0.0
        %3155 = vmatpush2.xpose.msra.mxu0 0.0
        %3156 = vmatprep.subr.mxu0 0.0
        %3157 = vmatpush2.xpose.msra.mxu0 0.0
        %3158 = vmatprep.subr.mxu0 0.0
        %3159 = vmatpush2.xpose.msra.mxu0 0.0
        %3160 = vmatprep.subr.mxu0 0.0
        %3161 = vmatpush2.xpose.msra.mxu0 0.0
        %3162 = vmatprep.subr.mxu0 0.0
        %3163 = vmatpush2.xpose.msra.mxu0 0.0
        %3164 = vmatprep.subr.mxu0 0.0
        %3165 = vmatpush2.xpose.msra.mxu0 0.0
        %3166 = vmatprep.subr.mxu0 0.0
        %3167 = vmatpush2.xpose.msra.mxu0 0.0
        %3168 = vmatprep.subr.mxu0 0.0
        %3169 = vmatpush2.xpose.msra.mxu0 0.0
        %3170 = vmatprep.subr.mxu0 0.0
        %3171 = vmatpush2.xpose.msra.mxu0 0.0
        %3172 = vmatprep.subr.mxu0 0.0
        %3173 = vmatpush2.xpose.msra.mxu0 0.0
        %3174 = vmatprep.subr.mxu0 0.0
        %3175 = vmatpush2.xpose.msra.mxu0 0.0
        %3176 = vmatprep.subr.mxu0 0.0
        %3177 = vmatpush2.xpose.msra.mxu0 0.0
        %3178 = vmatprep.mubr.f32.mxu0 0.0
        %3179 = vmatmul.mubr.f32.gmra.mxu0 %v3106
        %v3180 = vpop.f32.mrf.mxu0
        %v3181 = vadd.f32 0.0, %v3180
        %v3182 = vpop.f32.mrf.mxu0
        %3183 = vdwg.mxu0
        %v3184 = vsel %vm1990, %v3181, -inf
        %3185 = vmax.xlane.f32.xlu0 %v3184
        %v3186 = vpop.xlane.xlu0 %3185
        %v3187 = vsub.f32 %v3181, %v3186
        %v3188 = vmul.f32 %v3187, 1.442695
        %v3189 = vpow.pop %v3188
        %v3190 = vsel %vm1990, %v3189, 0.0
        %3191 = vadd.xlane.f32.xlu0 %v3190
        %v3192 = vpop.xlane.xlu0 %3191
        %v3193 = vrcp.pop %v3192
        %v3194 = vmul.f32 %v3189, %v3193
        %v3196 = vsel %vm1990, %v3194, 0
        %3198 = vmatprep.subr.mxu0 0.0
        %3199 = vmatpush1.msra.mxu0 0.0
        %3200 = vmatprep.subr.mxu0 0.0
        %3201 = vmatpush1.msra.mxu0 0.0
        %3202 = vmatprep.subr.mxu0 0.0
        %3203 = vmatpush1.msra.mxu0 0.0
        %3204 = vmatprep.subr.mxu0 0.0
        %3205 = vmatpush1.msra.mxu0 0.0
        %3206 = vmatprep.subr.mxu0 0.0
        %3207 = vmatpush1.msra.mxu0 0.0
        %3208 = vmatprep.subr.mxu0 0.0
        %3209 = vmatpush1.msra.mxu0 0.0
        %3210 = vmatprep.subr.mxu0 0.0
        %3211 = vmatpush1.msra.mxu0 0.0
        %3212 = vmatprep.subr.mxu0 0.0
        %3213 = vmatpush1.msra.mxu0 0.0
        %3214 = vmatprep.subr.mxu0 0.0
        %3215 = vmatpush1.msra.mxu0 0.0
        %3216 = vmatprep.subr.mxu0 0.0
        %3217 = vmatpush1.msra.mxu0 0.0
        %3218 = vmatprep.subr.mxu0 0.0
        %3219 = vmatpush1.msra.mxu0 0.0
        %3220 = vmatprep.subr.mxu0 0.0
        %3221 = vmatpush1.msra.mxu0 0.0
        %3222 = vmatprep.subr.mxu0 0.0
        %3223 = vmatpush1.msra.mxu0 0.0
        %3224 = vmatprep.subr.mxu0 0.0
        %3225 = vmatpush1.msra.mxu0 0.0
        %3226 = vmatprep.subr.mxu0 0.0
        %3227 = vmatpush1.msra.mxu0 %v3091
        %3228 = vmatprep.subr.mxu0 0.0
        %3229 = vmatpush1.msra.mxu0 %v3086
        %3230 = vmatprep.subr.mxu0 0.0
        %3231 = vmatpush2.msra.mxu0 0.0
        %3232 = vmatprep.subr.mxu0 0.0
        %3233 = vmatpush2.msra.mxu0 0.0
        %3234 = vmatprep.subr.mxu0 0.0
        %3235 = vmatpush2.msra.mxu0 0.0
        %3236 = vmatprep.subr.mxu0 0.0
        %3237 = vmatpush2.msra.mxu0 0.0
        %3238 = vmatprep.subr.mxu0 0.0
        %3239 = vmatpush2.msra.mxu0 0.0
        %3240 = vmatprep.subr.mxu0 0.0
        %3241 = vmatpush2.msra.mxu0 0.0
        %3242 = vmatprep.subr.mxu0 0.0
        %3243 = vmatpush2.msra.mxu0 0.0
        %3244 = vmatprep.subr.mxu0 0.0
        %3245 = vmatpush2.msra.mxu0 0.0
        %3246 = vmatprep.subr.mxu0 0.0
        %3247 = vmatpush2.msra.mxu0 0.0
        %3248 = vmatprep.subr.mxu0 0.0
        %3249 = vmatpush2.msra.mxu0 0.0
        %3250 = vmatprep.subr.mxu0 0.0
        %3251 = vmatpush2.msra.mxu0 0.0
        %3252 = vmatprep.subr.mxu0 0.0
        %3253 = vmatpush2.msra.mxu0 0.0
        %3254 = vmatprep.subr.mxu0 0.0
        %3255 = vmatpush2.msra.mxu0 0.0
        %3256 = vmatprep.subr.mxu0 0.0
        %3257 = vmatpush2.msra.mxu0 0.0
        %3258 = vmatprep.subr.mxu0 0.0
        %3259 = vmatpush2.msra.mxu0 0.0
        %3260 = vmatprep.subr.mxu0 0.0
        %3261 = vmatpush2.msra.mxu0 0.0
        %3262 = vmatprep.mubr.f32.mxu0 0.0
        %3263 = vmatmul.mubr.f32.gmra.mxu0 %v3196
        %v3264 = vpop.f32.mrf.mxu0
        %v3265 = vadd.f32 0.0, %v3264
        %v3266 = vpop.f32.mrf.mxu0
        %3267 = vdwg.mxu0
        %3268 = vrot.lane.b32.xlu0 %v3104, 120
        %v3269 = vpop.permute.xlu0 %3268
        %3270 = vrot.lane.b32.xlu0 %v2981, 120
        %v3271 = vpop.permute.xlu0 %3270
        %3272 = vrot.lane.b32.xlu0 %v2986, 120
        %v3273 = vpop.permute.xlu0 %3272
        %v3274 = vsel %vm1320, %v3269, 0
        %v3276 = vsel %vm1320, %v3271, 0
        %v3278 = vsel %vm1320, %v3273, 0
        %3280 = vmatprep.subr.mxu0 0.0
        %3281 = vmatpush1.xpose.msra.mxu0 0.0
        %3282 = vmatprep.subr.mxu0 0.0
        %3283 = vmatpush1.xpose.msra.mxu0 0.0
        %3284 = vmatprep.subr.mxu0 0.0
        %3285 = vmatpush1.xpose.msra.mxu0 0.0
        %3286 = vmatprep.subr.mxu0 0.0
        %3287 = vmatpush1.xpose.msra.mxu0 0.0
        %3288 = vmatprep.subr.mxu0 0.0
        %3289 = vmatpush1.xpose.msra.mxu0 0.0
        %3290 = vmatprep.subr.mxu0 0.0
        %3291 = vmatpush1.xpose.msra.mxu0 0.0
        %3292 = vmatprep.subr.mxu0 0.0
        %3293 = vmatpush1.xpose.msra.mxu0 0.0
        %3294 = vmatprep.subr.mxu0 0.0
        %3295 = vmatpush1.xpose.msra.mxu0 0.0
        %3296 = vmatprep.subr.mxu0 0.0
        %3297 = vmatpush1.xpose.msra.mxu0 0.0
        %3298 = vmatprep.subr.mxu0 0.0
        %3299 = vmatpush1.xpose.msra.mxu0 0.0
        %3300 = vmatprep.subr.mxu0 0.0
        %3301 = vmatpush1.xpose.msra.mxu0 0.0
        %3302 = vmatprep.subr.mxu0 0.0
        %3303 = vmatpush1.xpose.msra.mxu0 0.0
        %3304 = vmatprep.subr.mxu0 0.0
        %3305 = vmatpush1.xpose.msra.mxu0 0.0
        %3306 = vmatprep.subr.mxu0 0.0
        %3307 = vmatpush1.xpose.msra.mxu0 0.0
        %3308 = vmatprep.subr.mxu0 0.0
        %3309 = vmatpush1.xpose.msra.mxu0 %v3278
        %3310 = vmatprep.subr.mxu0 0.0
        %3311 = vmatpush1.xpose.msra.mxu0 %v3276
        %3312 = vmatprep.subr.mxu0 0.0
        %3313 = vmatpush2.xpose.msra.mxu0 0.0
        %3314 = vmatprep.subr.mxu0 0.0
        %3315 = vmatpush2.xpose.msra.mxu0 0.0
        %3316 = vmatprep.subr.mxu0 0.0
        %3317 = vmatpush2.xpose.msra.mxu0 0.0
        %3318 = vmatprep.subr.mxu0 0.0
        %3319 = vmatpush2.xpose.msra.mxu0 0.0
        %3320 = vmatprep.subr.mxu0 0.0
        %3321 = vmatpush2.xpose.msra.mxu0 0.0
        %3322 = vmatprep.subr.mxu0 0.0
        %3323 = vmatpush2.xpose.msra.mxu0 0.0
        %3324 = vmatprep.subr.mxu0 0.0
        %3325 = vmatpush2.xpose.msra.mxu0 0.0
        %3326 = vmatprep.subr.mxu0 0.0
        %3327 = vmatpush2.xpose.msra.mxu0 0.0
        %3328 = vmatprep.subr.mxu0 0.0
        %3329 = vmatpush2.xpose.msra.mxu0 0.0
        %3330 = vmatprep.subr.mxu0 0.0
        %3331 = vmatpush2.xpose.msra.mxu0 0.0
        %3332 = vmatprep.subr.mxu0 0.0
        %3333 = vmatpush2.xpose.msra.mxu0 0.0
        %3334 = vmatprep.subr.mxu0 0.0
        %3335 = vmatpush2.xpose.msra.mxu0 0.0
        %3336 = vmatprep.subr.mxu0 0.0
        %3337 = vmatpush2.xpose.msra.mxu0 0.0
        %3338 = vmatprep.subr.mxu0 0.0
        %3339 = vmatpush2.xpose.msra.mxu0 0.0
        %3340 = vmatprep.subr.mxu0 0.0
        %3341 = vmatpush2.xpose.msra.mxu0 0.0
        %3342 = vmatprep.subr.mxu0 0.0
        %3343 = vmatpush2.xpose.msra.mxu0 0.0
        %3344 = vmatprep.mubr.f32.mxu0 0.0
        %3345 = vmatmul.mubr.f32.gmra.mxu0 %v3274
        %v3346 = vpop.f32.mrf.mxu0
        %v3347 = vadd.f32 0.0, %v3346
        %v3348 = vpop.f32.mrf.mxu0
        %3349 = vdwg.mxu0
        %v3350 = vsel %vm1990, %v3347, -inf
        %3351 = vmax.xlane.f32.xlu0 %v3350
        %v3352 = vpop.xlane.xlu0 %3351
        %v3353 = vsub.f32 %v3347, %v3352
        %v3354 = vmul.f32 %v3353, 1.442695
        %v3355 = vpow.pop %v3354
        %v3356 = vsel %vm1990, %v3355, 0.0
        %3357 = vadd.xlane.f32.xlu0 %v3356
        %v3358 = vpop.xlane.xlu0 %3357
        %v3359 = vrcp.pop %v3358
        %v3360 = vmul.f32 %v3355, %v3359
        %v3361 = vadd.f32 %v3194, %v3360
        %3364 = vrot.lane.b32.xlu0 %v3086, 120
        %v3365 = vpop.permute.xlu0 %3364
        %3366 = vrot.lane.b32.xlu0 %v3091, 120
        %v3367 = vpop.permute.xlu0 %3366
        %v3371 = vsel %vm1990, %v3360, 0
        %3373 = vmatprep.subr.mxu0 0.0
        %3374 = vmatpush1.msra.mxu0 0.0
        %3375 = vmatprep.subr.mxu0 0.0
        %3376 = vmatpush1.msra.mxu0 0.0
        %3377 = vmatprep.subr.mxu0 0.0
        %3378 = vmatpush1.msra.mxu0 0.0
        %3379 = vmatprep.subr.mxu0 0.0
        %3380 = vmatpush1.msra.mxu0 0.0
        %3381 = vmatprep.subr.mxu0 0.0
        %3382 = vmatpush1.msra.mxu0 0.0
        %3383 = vmatprep.subr.mxu0 0.0
        %3384 = vmatpush1.msra.mxu0 0.0
        %3385 = vmatprep.subr.mxu0 0.0
        %3386 = vmatpush1.msra.mxu0 0.0
        %3387 = vmatprep.subr.mxu0 0.0
        %3388 = vmatpush1.msra.mxu0 0.0
        %3389 = vmatprep.subr.mxu0 0.0
        %3390 = vmatpush1.msra.mxu0 0.0
        %3391 = vmatprep.subr.mxu0 0.0
        %3392 = vmatpush1.msra.mxu0 0.0
        %3393 = vmatprep.subr.mxu0 0.0
        %3394 = vmatpush1.msra.mxu0 0.0
        %3395 = vmatprep.subr.mxu0 0.0
        %3396 = vmatpush1.msra.mxu0 0.0
        %3397 = vmatprep.subr.mxu0 0.0
        %3398 = vmatpush1.msra.mxu0 0.0
        %3399 = vmatprep.subr.mxu0 0.0
        %3400 = vmatpush1.msra.mxu0 0.0
        %3401 = vmatprep.subr.mxu0 0.0
        %3402 = vmatpush1.msra.mxu0 %v3367
        %3403 = vmatprep.subr.mxu0 0.0
        %3404 = vmatpush1.msra.mxu0 %v3365
        %3405 = vmatprep.subr.mxu0 0.0
        %3406 = vmatpush2.msra.mxu0 0.0
        %3407 = vmatprep.subr.mxu0 0.0
        %3408 = vmatpush2.msra.mxu0 0.0
        %3409 = vmatprep.subr.mxu0 0.0
        %3410 = vmatpush2.msra.mxu0 0.0
        %3411 = vmatprep.subr.mxu0 0.0
        %3412 = vmatpush2.msra.mxu0 0.0
        %3413 = vmatprep.subr.mxu0 0.0
        %3414 = vmatpush2.msra.mxu0 0.0
        %3415 = vmatprep.subr.mxu0 0.0
        %3416 = vmatpush2.msra.mxu0 0.0
        %3417 = vmatprep.subr.mxu0 0.0
        %3418 = vmatpush2.msra.mxu0 0.0
        %3419 = vmatprep.subr.mxu0 0.0
        %3420 = vmatpush2.msra.mxu0 0.0
        %3421 = vmatprep.subr.mxu0 0.0
        %3422 = vmatpush2.msra.mxu0 0.0
        %3423 = vmatprep.subr.mxu0 0.0
        %3424 = vmatpush2.msra.mxu0 0.0
        %3425 = vmatprep.subr.mxu0 0.0
        %3426 = vmatpush2.msra.mxu0 0.0
        %3427 = vmatprep.subr.mxu0 0.0
        %3428 = vmatpush2.msra.mxu0 0.0
        %3429 = vmatprep.subr.mxu0 0.0
        %3430 = vmatpush2.msra.mxu0 0.0
        %3431 = vmatprep.subr.mxu0 0.0
        %3432 = vmatpush2.msra.mxu0 0.0
        %3433 = vmatprep.subr.mxu0 0.0
        %3434 = vmatpush2.msra.mxu0 0.0
        %3435 = vmatprep.subr.mxu0 0.0
        %3436 = vmatpush2.msra.mxu0 0.0
        %3437 = vmatprep.mubr.f32.mxu0 0.0
        %3438 = vmatmul.mubr.f32.gmra.mxu0 %v3371
        %v3439 = vpop.f32.mrf.mxu0
        %v3440 = vadd.f32 0.0, %v3439
        %v3441 = vpop.f32.mrf.mxu0
        %3442 = vdwg.mxu0
        %3443 = vrot.lane.b32.xlu0 %v3104, 112
        %v3444 = vpop.permute.xlu0 %3443
        %3445 = vrot.lane.b32.xlu0 %v2981, 112
        %v3446 = vpop.permute.xlu0 %3445
        %3447 = vrot.lane.b32.xlu0 %v2986, 112
        %v3448 = vpop.permute.xlu0 %3447
        %v3449 = vsel %vm1320, %v3444, 0
        %v3451 = vsel %vm1320, %v3446, 0
        %v3453 = vsel %vm1320, %v3448, 0
        %3455 = vmatprep.subr.mxu0 0.0
        %3456 = vmatpush1.xpose.msra.mxu0 0.0
        %3457 = vmatprep.subr.mxu0 0.0
        %3458 = vmatpush1.xpose.msra.mxu0 0.0
        %3459 = vmatprep.subr.mxu0 0.0
        %3460 = vmatpush1.xpose.msra.mxu0 0.0
        %3461 = vmatprep.subr.mxu0 0.0
        %3462 = vmatpush1.xpose.msra.mxu0 0.0
        %3463 = vmatprep.subr.mxu0 0.0
        %3464 = vmatpush1.xpose.msra.mxu0 0.0
        %3465 = vmatprep.subr.mxu0 0.0
        %3466 = vmatpush1.xpose.msra.mxu0 0.0
        %3467 = vmatprep.subr.mxu0 0.0
        %3468 = vmatpush1.xpose.msra.mxu0 0.0
        %3469 = vmatprep.subr.mxu0 0.0
        %3470 = vmatpush1.xpose.msra.mxu0 0.0
        %3471 = vmatprep.subr.mxu0 0.0
        %3472 = vmatpush1.xpose.msra.mxu0 0.0
        %3473 = vmatprep.subr.mxu0 0.0
        %3474 = vmatpush1.xpose.msra.mxu0 0.0
        %3475 = vmatprep.subr.mxu0 0.0
        %3476 = vmatpush1.xpose.msra.mxu0 0.0
        %3477 = vmatprep.subr.mxu0 0.0
        %3478 = vmatpush1.xpose.msra.mxu0 0.0
        %3479 = vmatprep.subr.mxu0 0.0
        %3480 = vmatpush1.xpose.msra.mxu0 0.0
        %3481 = vmatprep.subr.mxu0 0.0
        %3482 = vmatpush1.xpose.msra.mxu0 0.0
        %3483 = vmatprep.subr.mxu0 0.0
        %3484 = vmatpush1.xpose.msra.mxu0 %v3453
        %3485 = vmatprep.subr.mxu0 0.0
        %3486 = vmatpush1.xpose.msra.mxu0 %v3451
        %3487 = vmatprep.subr.mxu0 0.0
        %3488 = vmatpush2.xpose.msra.mxu0 0.0
        %3489 = vmatprep.subr.mxu0 0.0
        %3490 = vmatpush2.xpose.msra.mxu0 0.0
        %3491 = vmatprep.subr.mxu0 0.0
        %3492 = vmatpush2.xpose.msra.mxu0 0.0
        %3493 = vmatprep.subr.mxu0 0.0
        %3494 = vmatpush2.xpose.msra.mxu0 0.0
        %3495 = vmatprep.subr.mxu0 0.0
        %3496 = vmatpush2.xpose.msra.mxu0 0.0
        %3497 = vmatprep.subr.mxu0 0.0
        %3498 = vmatpush2.xpose.msra.mxu0 0.0
        %3499 = vmatprep.subr.mxu0 0.0
        %3500 = vmatpush2.xpose.msra.mxu0 0.0
        %3501 = vmatprep.subr.mxu0 0.0
        %3502 = vmatpush2.xpose.msra.mxu0 0.0
        %3503 = vmatprep.subr.mxu0 0.0
        %3504 = vmatpush2.xpose.msra.mxu0 0.0
        %3505 = vmatprep.subr.mxu0 0.0
        %3506 = vmatpush2.xpose.msra.mxu0 0.0
        %3507 = vmatprep.subr.mxu0 0.0
        %3508 = vmatpush2.xpose.msra.mxu0 0.0
        %3509 = vmatprep.subr.mxu0 0.0
        %3510 = vmatpush2.xpose.msra.mxu0 0.0
        %3511 = vmatprep.subr.mxu0 0.0
        %3512 = vmatpush2.xpose.msra.mxu0 0.0
        %3513 = vmatprep.subr.mxu0 0.0
        %3514 = vmatpush2.xpose.msra.mxu0 0.0
        %3515 = vmatprep.subr.mxu0 0.0
        %3516 = vmatpush2.xpose.msra.mxu0 0.0
        %3517 = vmatprep.subr.mxu0 0.0
        %3518 = vmatpush2.xpose.msra.mxu0 0.0
        %3519 = vmatprep.mubr.f32.mxu0 0.0
        %3520 = vmatmul.mubr.f32.gmra.mxu0 %v3449
        %v3521 = vpop.f32.mrf.mxu0
        %v3522 = vadd.f32 0.0, %v3521
        %v3523 = vpop.f32.mrf.mxu0
        %3524 = vdwg.mxu0
        %v3525 = vsel %vm1990, %v3522, -inf
        %3526 = vmax.xlane.f32.xlu0 %v3525
        %v3527 = vpop.xlane.xlu0 %3526
        %v3528 = vsub.f32 %v3522, %v3527
        %v3529 = vmul.f32 %v3528, 1.442695
        %v3530 = vpow.pop %v3529
        %v3531 = vsel %vm1990, %v3530, 0.0
        %3532 = vadd.xlane.f32.xlu0 %v3531
        %v3533 = vpop.xlane.xlu0 %3532
        %v3534 = vrcp.pop %v3533
        %v3535 = vmul.f32 %v3530, %v3534
        %v3536 = vadd.f32 %v3361, %v3535
        %3537 = vrot.lane.b32.xlu0 %v3086, 112
        %v3538 = vpop.permute.xlu0 %3537
        %3539 = vrot.lane.b32.xlu0 %v3091, 112
        %v3540 = vpop.permute.xlu0 %3539
        %v3544 = vsel %vm1990, %v3535, 0
        %3546 = vmatprep.subr.mxu0 0.0
        %3547 = vmatpush1.msra.mxu0 0.0
        %3548 = vmatprep.subr.mxu0 0.0
        %3549 = vmatpush1.msra.mxu0 0.0
        %3550 = vmatprep.subr.mxu0 0.0
        %3551 = vmatpush1.msra.mxu0 0.0
        %3552 = vmatprep.subr.mxu0 0.0
        %3553 = vmatpush1.msra.mxu0 0.0
        %3554 = vmatprep.subr.mxu0 0.0
        %3555 = vmatpush1.msra.mxu0 0.0
        %3556 = vmatprep.subr.mxu0 0.0
        %3557 = vmatpush1.msra.mxu0 0.0
        %3558 = vmatprep.subr.mxu0 0.0
        %3559 = vmatpush1.msra.mxu0 0.0
        %3560 = vmatprep.subr.mxu0 0.0
        %3561 = vmatpush1.msra.mxu0 0.0
        %3562 = vmatprep.subr.mxu0 0.0
        %3563 = vmatpush1.msra.mxu0 0.0
        %3564 = vmatprep.subr.mxu0 0.0
        %3565 = vmatpush1.msra.mxu0 0.0
        %3566 = vmatprep.subr.mxu0 0.0
        %3567 = vmatpush1.msra.mxu0 0.0
        %3568 = vmatprep.subr.mxu0 0.0
        %3569 = vmatpush1.msra.mxu0 0.0
        %3570 = vmatprep.subr.mxu0 0.0
        %3571 = vmatpush1.msra.mxu0 0.0
        %3572 = vmatprep.subr.mxu0 0.0
        %3573 = vmatpush1.msra.mxu0 0.0
        %3574 = vmatprep.subr.mxu0 0.0
        %3575 = vmatpush1.msra.mxu0 %v3540
        %3576 = vmatprep.subr.mxu0 0.0
        %3577 = vmatpush1.msra.mxu0 %v3538
        %3578 = vmatprep.subr.mxu0 0.0
        %3579 = vmatpush2.msra.mxu0 0.0
        %3580 = vmatprep.subr.mxu0 0.0
        %3581 = vmatpush2.msra.mxu0 0.0
        %3582 = vmatprep.subr.mxu0 0.0
        %3583 = vmatpush2.msra.mxu0 0.0
        %3584 = vmatprep.subr.mxu0 0.0
        %3585 = vmatpush2.msra.mxu0 0.0
        %3586 = vmatprep.subr.mxu0 0.0
        %3587 = vmatpush2.msra.mxu0 0.0
        %3588 = vmatprep.subr.mxu0 0.0
        %3589 = vmatpush2.msra.mxu0 0.0
        %3590 = vmatprep.subr.mxu0 0.0
        %3591 = vmatpush2.msra.mxu0 0.0
        %3592 = vmatprep.subr.mxu0 0.0
        %3593 = vmatpush2.msra.mxu0 0.0
        %3594 = vmatprep.subr.mxu0 0.0
        %3595 = vmatpush2.msra.mxu0 0.0
        %3596 = vmatprep.subr.mxu0 0.0
        %3597 = vmatpush2.msra.mxu0 0.0
        %3598 = vmatprep.subr.mxu0 0.0
        %3599 = vmatpush2.msra.mxu0 0.0
        %3600 = vmatprep.subr.mxu0 0.0
        %3601 = vmatpush2.msra.mxu0 0.0
        %3602 = vmatprep.subr.mxu0 0.0
        %3603 = vmatpush2.msra.mxu0 0.0
        %3604 = vmatprep.subr.mxu0 0.0
        %3605 = vmatpush2.msra.mxu0 0.0
        %3606 = vmatprep.subr.mxu0 0.0
        %3607 = vmatpush2.msra.mxu0 0.0
        %3608 = vmatprep.subr.mxu0 0.0
        %3609 = vmatpush2.msra.mxu0 0.0
        %3610 = vmatprep.mubr.f32.mxu0 0.0
        %3611 = vmatmul.mubr.f32.gmra.mxu0 %v3544
        %v3612 = vpop.f32.mrf.mxu0
        %v3613 = vadd.f32 0.0, %v3612
        %v3614 = vpop.f32.mrf.mxu0
        %3615 = vdwg.mxu0
        %3616 = vrot.lane.b32.xlu0 %v3104, 104
        %v3617 = vpop.permute.xlu0 %3616
        %3618 = vrot.lane.b32.xlu0 %v2981, 104
        %v3619 = vpop.permute.xlu0 %3618
        %3620 = vrot.lane.b32.xlu0 %v2986, 104
        %v3621 = vpop.permute.xlu0 %3620
        %v3622 = vsel %vm1320, %v3617, 0
        %v3624 = vsel %vm1320, %v3619, 0
        %v3626 = vsel %vm1320, %v3621, 0
        %3628 = vmatprep.subr.mxu0 0.0
        %3629 = vmatpush1.xpose.msra.mxu0 0.0
        %3630 = vmatprep.subr.mxu0 0.0
        %3631 = vmatpush1.xpose.msra.mxu0 0.0
        %3632 = vmatprep.subr.mxu0 0.0
        %3633 = vmatpush1.xpose.msra.mxu0 0.0
        %3634 = vmatprep.subr.mxu0 0.0
        %3635 = vmatpush1.xpose.msra.mxu0 0.0
        %3636 = vmatprep.subr.mxu0 0.0
        %3637 = vmatpush1.xpose.msra.mxu0 0.0
        %3638 = vmatprep.subr.mxu0 0.0
        %3639 = vmatpush1.xpose.msra.mxu0 0.0
        %3640 = vmatprep.subr.mxu0 0.0
        %3641 = vmatpush1.xpose.msra.mxu0 0.0
        %3642 = vmatprep.subr.mxu0 0.0
        %3643 = vmatpush1.xpose.msra.mxu0 0.0
        %3644 = vmatprep.subr.mxu0 0.0
        %3645 = vmatpush1.xpose.msra.mxu0 0.0
        %3646 = vmatprep.subr.mxu0 0.0
        %3647 = vmatpush1.xpose.msra.mxu0 0.0
        %3648 = vmatprep.subr.mxu0 0.0
        %3649 = vmatpush1.xpose.msra.mxu0 0.0
        %3650 = vmatprep.subr.mxu0 0.0
        %3651 = vmatpush1.xpose.msra.mxu0 0.0
        %3652 = vmatprep.subr.mxu0 0.0
        %3653 = vmatpush1.xpose.msra.mxu0 0.0
        %3654 = vmatprep.subr.mxu0 0.0
        %3655 = vmatpush1.xpose.msra.mxu0 0.0
        %3656 = vmatprep.subr.mxu0 0.0
        %3657 = vmatpush1.xpose.msra.mxu0 %v3626
        %3658 = vmatprep.subr.mxu0 0.0
        %3659 = vmatpush1.xpose.msra.mxu0 %v3624
        %3660 = vmatprep.subr.mxu0 0.0
        %3661 = vmatpush2.xpose.msra.mxu0 0.0
        %3662 = vmatprep.subr.mxu0 0.0
        %3663 = vmatpush2.xpose.msra.mxu0 0.0
        %3664 = vmatprep.subr.mxu0 0.0
        %3665 = vmatpush2.xpose.msra.mxu0 0.0
        %3666 = vmatprep.subr.mxu0 0.0
        %3667 = vmatpush2.xpose.msra.mxu0 0.0
        %3668 = vmatprep.subr.mxu0 0.0
        %3669 = vmatpush2.xpose.msra.mxu0 0.0
        %3670 = vmatprep.subr.mxu0 0.0
        %3671 = vmatpush2.xpose.msra.mxu0 0.0
        %3672 = vmatprep.subr.mxu0 0.0
        %3673 = vmatpush2.xpose.msra.mxu0 0.0
        %3674 = vmatprep.subr.mxu0 0.0
        %3675 = vmatpush2.xpose.msra.mxu0 0.0
        %3676 = vmatprep.subr.mxu0 0.0
        %3677 = vmatpush2.xpose.msra.mxu0 0.0
        %3678 = vmatprep.subr.mxu0 0.0
        %3679 = vmatpush2.xpose.msra.mxu0 0.0
        %3680 = vmatprep.subr.mxu0 0.0
        %3681 = vmatpush2.xpose.msra.mxu0 0.0
        %3682 = vmatprep.subr.mxu0 0.0
        %3683 = vmatpush2.xpose.msra.mxu0 0.0
        %3684 = vmatprep.subr.mxu0 0.0
        %3685 = vmatpush2.xpose.msra.mxu0 0.0
        %3686 = vmatprep.subr.mxu0 0.0
        %3687 = vmatpush2.xpose.msra.mxu0 0.0
        %3688 = vmatprep.subr.mxu0 0.0
        %3689 = vmatpush2.xpose.msra.mxu0 0.0
        %3690 = vmatprep.subr.mxu0 0.0
        %3691 = vmatpush2.xpose.msra.mxu0 0.0
        %3692 = vmatprep.mubr.f32.mxu0 0.0
        %3693 = vmatmul.mubr.f32.gmra.mxu0 %v3622
        %v3694 = vpop.f32.mrf.mxu0
        %v3695 = vadd.f32 0.0, %v3694
        %v3696 = vpop.f32.mrf.mxu0
        %3697 = vdwg.mxu0
        %v3698 = vsel %vm1990, %v3695, -inf
        %3699 = vmax.xlane.f32.xlu0 %v3698
        %v3700 = vpop.xlane.xlu0 %3699
        %v3701 = vsub.f32 %v3695, %v3700
        %v3702 = vmul.f32 %v3701, 1.442695
        %v3703 = vpow.pop %v3702
        %v3704 = vsel %vm1990, %v3703, 0.0
        %3705 = vadd.xlane.f32.xlu0 %v3704
        %v3706 = vpop.xlane.xlu0 %3705
        %v3707 = vrcp.pop %v3706
        %v3708 = vmul.f32 %v3703, %v3707
        %v3709 = vadd.f32 %v3536, %v3708
        %3710 = vrot.lane.b32.xlu0 %v3086, 104
        %v3711 = vpop.permute.xlu0 %3710
        %3712 = vrot.lane.b32.xlu0 %v3091, 104
        %v3713 = vpop.permute.xlu0 %3712
        %v3717 = vsel %vm1990, %v3708, 0
        %3719 = vmatprep.subr.mxu0 0.0
        %3720 = vmatpush1.msra.mxu0 0.0
        %3721 = vmatprep.subr.mxu0 0.0
        %3722 = vmatpush1.msra.mxu0 0.0
        %3723 = vmatprep.subr.mxu0 0.0
        %3724 = vmatpush1.msra.mxu0 0.0
        %3725 = vmatprep.subr.mxu0 0.0
        %3726 = vmatpush1.msra.mxu0 0.0
        %3727 = vmatprep.subr.mxu0 0.0
        %3728 = vmatpush1.msra.mxu0 0.0
        %3729 = vmatprep.subr.mxu0 0.0
        %3730 = vmatpush1.msra.mxu0 0.0
        %3731 = vmatprep.subr.mxu0 0.0
        %3732 = vmatpush1.msra.mxu0 0.0
        %3733 = vmatprep.subr.mxu0 0.0
        %3734 = vmatpush1.msra.mxu0 0.0
        %3735 = vmatprep.subr.mxu0 0.0
        %3736 = vmatpush1.msra.mxu0 0.0
        %3737 = vmatprep.subr.mxu0 0.0
        %3738 = vmatpush1.msra.mxu0 0.0
        %3739 = vmatprep.subr.mxu0 0.0
        %3740 = vmatpush1.msra.mxu0 0.0
        %3741 = vmatprep.subr.mxu0 0.0
        %3742 = vmatpush1.msra.mxu0 0.0
        %3743 = vmatprep.subr.mxu0 0.0
        %3744 = vmatpush1.msra.mxu0 0.0
        %3745 = vmatprep.subr.mxu0 0.0
        %3746 = vmatpush1.msra.mxu0 0.0
        %3747 = vmatprep.subr.mxu0 0.0
        %3748 = vmatpush1.msra.mxu0 %v3713
        %3749 = vmatprep.subr.mxu0 0.0
        %3750 = vmatpush1.msra.mxu0 %v3711
        %3751 = vmatprep.subr.mxu0 0.0
        %3752 = vmatpush2.msra.mxu0 0.0
        %3753 = vmatprep.subr.mxu0 0.0
        %3754 = vmatpush2.msra.mxu0 0.0
        %3755 = vmatprep.subr.mxu0 0.0
        %3756 = vmatpush2.msra.mxu0 0.0
        %3757 = vmatprep.subr.mxu0 0.0
        %3758 = vmatpush2.msra.mxu0 0.0
        %3759 = vmatprep.subr.mxu0 0.0
        %3760 = vmatpush2.msra.mxu0 0.0
        %3761 = vmatprep.subr.mxu0 0.0
        %3762 = vmatpush2.msra.mxu0 0.0
        %3763 = vmatprep.subr.mxu0 0.0
        %3764 = vmatpush2.msra.mxu0 0.0
        %3765 = vmatprep.subr.mxu0 0.0
        %3766 = vmatpush2.msra.mxu0 0.0
        %3767 = vmatprep.subr.mxu0 0.0
        %3768 = vmatpush2.msra.mxu0 0.0
        %3769 = vmatprep.subr.mxu0 0.0
        %3770 = vmatpush2.msra.mxu0 0.0
        %3771 = vmatprep.subr.mxu0 0.0
        %3772 = vmatpush2.msra.mxu0 0.0
        %3773 = vmatprep.subr.mxu0 0.0
        %3774 = vmatpush2.msra.mxu0 0.0
        %3775 = vmatprep.subr.mxu0 0.0
        %3776 = vmatpush2.msra.mxu0 0.0
        %3777 = vmatprep.subr.mxu0 0.0
        %3778 = vmatpush2.msra.mxu0 0.0
        %3779 = vmatprep.subr.mxu0 0.0
        %3780 = vmatpush2.msra.mxu0 0.0
        %3781 = vmatprep.subr.mxu0 0.0
        %3782 = vmatpush2.msra.mxu0 0.0
        %3783 = vmatprep.mubr.f32.mxu0 0.0
        %3784 = vmatmul.mubr.f32.gmra.mxu0 %v3717
        %v3785 = vpop.f32.mrf.mxu0
        %v3786 = vadd.f32 0.0, %v3785
        %v3787 = vpop.f32.mrf.mxu0
        %3788 = vdwg.mxu0
        %3790 = vrot.lane.b32.xlu0 %v3440, 8
        %v3791 = vpop.permute.xlu0 %3790
        %3794 = vrot.lane.b32.xlu0 %v3613, 16
        %v3795 = vpop.permute.xlu0 %3794
        %3798 = vrot.lane.b32.xlu0 %v3786, 24
        %v3799 = vpop.permute.xlu0 %3798
        %v3801 = vsel %vm1320, %v3265, %v3791
        %v3802 = vsel %vm1990, %v3801, %v3795
        %v3803 = vsel %vm1992, %v3802, %v3799
        %v3804 = vmul.f32 %v3709, 0.25
        %v3805 = vmul.f32 %v2887, 0.35355338
        %v3807 = vsel %vm1320, %v3805, 0
        %v3810 = vsel %vm1320, %v2991, 0
        %v3813 = vsel %vm1320, %v2996, 0
        %3815 = vmatprep.subr.mxu0 0.0
        %3816 = vmatpush1.xpose.msra.mxu0 0.0
        %3817 = vmatprep.subr.mxu0 0.0
        %3818 = vmatpush1.xpose.msra.mxu0 0.0
        %3819 = vmatprep.subr.mxu0 0.0
        %3820 = vmatpush1.xpose.msra.mxu0 0.0
        %3821 = vmatprep.subr.mxu0 0.0
        %3822 = vmatpush1.xpose.msra.mxu0 0.0
        %3823 = vmatprep.subr.mxu0 0.0
        %3824 = vmatpush1.xpose.msra.mxu0 0.0
        %3825 = vmatprep.subr.mxu0 0.0
        %3826 = vmatpush1.xpose.msra.mxu0 0.0
        %3827 = vmatprep.subr.mxu0 0.0
        %3828 = vmatpush1.xpose.msra.mxu0 0.0
        %3829 = vmatprep.subr.mxu0 0.0
        %3830 = vmatpush1.xpose.msra.mxu0 0.0
        %3831 = vmatprep.subr.mxu0 0.0
        %3832 = vmatpush1.xpose.msra.mxu0 0.0
        %3833 = vmatprep.subr.mxu0 0.0
        %3834 = vmatpush1.xpose.msra.mxu0 0.0
        %3835 = vmatprep.subr.mxu0 0.0
        %3836 = vmatpush1.xpose.msra.mxu0 0.0
        %3837 = vmatprep.subr.mxu0 0.0
        %3838 = vmatpush1.xpose.msra.mxu0 0.0
        %3839 = vmatprep.subr.mxu0 0.0
        %3840 = vmatpush1.xpose.msra.mxu0 0.0
        %3841 = vmatprep.subr.mxu0 0.0
        %3842 = vmatpush1.xpose.msra.mxu0 0.0
        %3843 = vmatprep.subr.mxu0 0.0
        %3844 = vmatpush1.xpose.msra.mxu0 %v3813
        %3845 = vmatprep.subr.mxu0 0.0
        %3846 = vmatpush1.xpose.msra.mxu0 %v3810
        %3847 = vmatprep.subr.mxu0 0.0
        %3848 = vmatpush2.xpose.msra.mxu0 0.0
        %3849 = vmatprep.subr.mxu0 0.0
        %3850 = vmatpush2.xpose.msra.mxu0 0.0
        %3851 = vmatprep.subr.mxu0 0.0
        %3852 = vmatpush2.xpose.msra.mxu0 0.0
        %3853 = vmatprep.subr.mxu0 0.0
        %3854 = vmatpush2.xpose.msra.mxu0 0.0
        %3855 = vmatprep.subr.mxu0 0.0
        %3856 = vmatpush2.xpose.msra.mxu0 0.0
        %3857 = vmatprep.subr.mxu0 0.0
        %3858 = vmatpush2.xpose.msra.mxu0 0.0
        %3859 = vmatprep.subr.mxu0 0.0
        %3860 = vmatpush2.xpose.msra.mxu0 0.0
        %3861 = vmatprep.subr.mxu0 0.0
        %3862 = vmatpush2.xpose.msra.mxu0 0.0
        %3863 = vmatprep.subr.mxu0 0.0
        %3864 = vmatpush2.xpose.msra.mxu0 0.0
        %3865 = vmatprep.subr.mxu0 0.0
        %3866 = vmatpush2.xpose.msra.mxu0 0.0
        %3867 = vmatprep.subr.mxu0 0.0
        %3868 = vmatpush2.xpose.msra.mxu0 0.0
        %3869 = vmatprep.subr.mxu0 0.0
        %3870 = vmatpush2.xpose.msra.mxu0 0.0
        %3871 = vmatprep.subr.mxu0 0.0
        %3872 = vmatpush2.xpose.msra.mxu0 0.0
        %3873 = vmatprep.subr.mxu0 0.0
        %3874 = vmatpush2.xpose.msra.mxu0 0.0
        %3875 = vmatprep.subr.mxu0 0.0
        %3876 = vmatpush2.xpose.msra.mxu0 0.0
        %3877 = vmatprep.subr.mxu0 0.0
        %3878 = vmatpush2.xpose.msra.mxu0 0.0
        %3879 = vmatprep.mubr.f32.mxu0 0.0
        %3880 = vmatmul.mubr.f32.gmra.mxu0 %v3807
        %v3881 = vpop.f32.mrf.mxu0
        %v3882 = vadd.f32 0.0, %v3881
        %v3883 = vpop.f32.mrf.mxu0
        %3884 = vdwg.mxu0
        %v3885 = vsel %vm1990, %v3882, -inf
        %3886 = vmax.xlane.f32.xlu0 %v3885
        %v3887 = vpop.xlane.xlu0 %3886
        %v3888 = vsub.f32 %v3882, %v3887
        %v3889 = vmul.f32 %v3888, 1.442695
        %v3890 = vpow.pop %v3889
        %v3891 = vsel %vm1990, %v3890, 0.0
        %3892 = vadd.xlane.f32.xlu0 %v3891
        %v3893 = vpop.xlane.xlu0 %3892
        %v3894 = vrcp.pop %v3893
        %v3895 = vmul.f32 %v3890, %v3894
        %v3897 = vsel %vm1990, %v3895, 0
        %3899 = vmatprep.subr.mxu0 0.0
        %3900 = vmatpush1.msra.mxu0 0.0
        %3901 = vmatprep.subr.mxu0 0.0
        %3902 = vmatpush1.msra.mxu0 0.0
        %3903 = vmatprep.subr.mxu0 0.0
        %3904 = vmatpush1.msra.mxu0 0.0
        %3905 = vmatprep.subr.mxu0 0.0
        %3906 = vmatpush1.msra.mxu0 0.0
        %3907 = vmatprep.subr.mxu0 0.0
        %3908 = vmatpush1.msra.mxu0 0.0
        %3909 = vmatprep.subr.mxu0 0.0
        %3910 = vmatpush1.msra.mxu0 0.0
        %3911 = vmatprep.subr.mxu0 0.0
        %3912 = vmatpush1.msra.mxu0 0.0
        %3913 = vmatprep.subr.mxu0 0.0
        %3914 = vmatpush1.msra.mxu0 0.0
        %3915 = vmatprep.subr.mxu0 0.0
        %3916 = vmatpush1.msra.mxu0 0.0
        %3917 = vmatprep.subr.mxu0 0.0
        %3918 = vmatpush1.msra.mxu0 0.0
        %3919 = vmatprep.subr.mxu0 0.0
        %3920 = vmatpush1.msra.mxu0 0.0
        %3921 = vmatprep.subr.mxu0 0.0
        %3922 = vmatpush1.msra.mxu0 0.0
        %3923 = vmatprep.subr.mxu0 0.0
        %3924 = vmatpush1.msra.mxu0 0.0
        %3925 = vmatprep.subr.mxu0 0.0
        %3926 = vmatpush1.msra.mxu0 0.0
        %3927 = vmatprep.subr.mxu0 0.0
        %3928 = vmatpush1.msra.mxu0 %v3101
        %3929 = vmatprep.subr.mxu0 0.0
        %3930 = vmatpush1.msra.mxu0 %v3096
        %3931 = vmatprep.subr.mxu0 0.0
        %3932 = vmatpush2.msra.mxu0 0.0
        %3933 = vmatprep.subr.mxu0 0.0
        %3934 = vmatpush2.msra.mxu0 0.0
        %3935 = vmatprep.subr.mxu0 0.0
        %3936 = vmatpush2.msra.mxu0 0.0
        %3937 = vmatprep.subr.mxu0 0.0
        %3938 = vmatpush2.msra.mxu0 0.0
        %3939 = vmatprep.subr.mxu0 0.0
        %3940 = vmatpush2.msra.mxu0 0.0
        %3941 = vmatprep.subr.mxu0 0.0
        %3942 = vmatpush2.msra.mxu0 0.0
        %3943 = vmatprep.subr.mxu0 0.0
        %3944 = vmatpush2.msra.mxu0 0.0
        %3945 = vmatprep.subr.mxu0 0.0
        %3946 = vmatpush2.msra.mxu0 0.0
        %3947 = vmatprep.subr.mxu0 0.0
        %3948 = vmatpush2.msra.mxu0 0.0
        %3949 = vmatprep.subr.mxu0 0.0
        %3950 = vmatpush2.msra.mxu0 0.0
        %3951 = vmatprep.subr.mxu0 0.0
        %3952 = vmatpush2.msra.mxu0 0.0
        %3953 = vmatprep.subr.mxu0 0.0
        %3954 = vmatpush2.msra.mxu0 0.0
        %3955 = vmatprep.subr.mxu0 0.0
        %3956 = vmatpush2.msra.mxu0 0.0
        %3957 = vmatprep.subr.mxu0 0.0
        %3958 = vmatpush2.msra.mxu0 0.0
        %3959 = vmatprep.subr.mxu0 0.0
        %3960 = vmatpush2.msra.mxu0 0.0
        %3961 = vmatprep.subr.mxu0 0.0
        %3962 = vmatpush2.msra.mxu0 0.0
        %3963 = vmatprep.mubr.f32.mxu0 0.0
        %3964 = vmatmul.mubr.f32.gmra.mxu0 %v3897
        %v3965 = vpop.f32.mrf.mxu0
        %v3966 = vadd.f32 0.0, %v3965
        %v3967 = vpop.f32.mrf.mxu0
        %3968 = vdwg.mxu0
        %3969 = vrot.lane.b32.xlu0 %v3805, 120
        %v3970 = vpop.permute.xlu0 %3969
        %3971 = vrot.lane.b32.xlu0 %v2991, 120
        %v3972 = vpop.permute.xlu0 %3971
        %3973 = vrot.lane.b32.xlu0 %v2996, 120
        %v3974 = vpop.permute.xlu0 %3973
        %v3975 = vsel %vm1320, %v3970, 0
        %v3977 = vsel %vm1320, %v3972, 0
        %v3979 = vsel %vm1320, %v3974, 0
        %3981 = vmatprep.subr.mxu0 0.0
        %3982 = vmatpush1.xpose.msra.mxu0 0.0
        %3983 = vmatprep.subr.mxu0 0.0
        %3984 = vmatpush1.xpose.msra.mxu0 0.0
        %3985 = vmatprep.subr.mxu0 0.0
        %3986 = vmatpush1.xpose.msra.mxu0 0.0
        %3987 = vmatprep.subr.mxu0 0.0
        %3988 = vmatpush1.xpose.msra.mxu0 0.0
        %3989 = vmatprep.subr.mxu0 0.0
        %3990 = vmatpush1.xpose.msra.mxu0 0.0
        %3991 = vmatprep.subr.mxu0 0.0
        %3992 = vmatpush1.xpose.msra.mxu0 0.0
        %3993 = vmatprep.subr.mxu0 0.0
        %3994 = vmatpush1.xpose.msra.mxu0 0.0
        %3995 = vmatprep.subr.mxu0 0.0
        %3996 = vmatpush1.xpose.msra.mxu0 0.0
        %3997 = vmatprep.subr.mxu0 0.0
        %3998 = vmatpush1.xpose.msra.mxu0 0.0
        %3999 = vmatprep.subr.mxu0 0.0
        %4000 = vmatpush1.xpose.msra.mxu0 0.0
        %4001 = vmatprep.subr.mxu0 0.0
        %4002 = vmatpush1.xpose.msra.mxu0 0.0
        %4003 = vmatprep.subr.mxu0 0.0
        %4004 = vmatpush1.xpose.msra.mxu0 0.0
        %4005 = vmatprep.subr.mxu0 0.0
        %4006 = vmatpush1.xpose.msra.mxu0 0.0
        %4007 = vmatprep.subr.mxu0 0.0
        %4008 = vmatpush1.xpose.msra.mxu0 0.0
        %4009 = vmatprep.subr.mxu0 0.0
        %4010 = vmatpush1.xpose.msra.mxu0 %v3979
        %4011 = vmatprep.subr.mxu0 0.0
        %4012 = vmatpush1.xpose.msra.mxu0 %v3977
        %4013 = vmatprep.subr.mxu0 0.0
        %4014 = vmatpush2.xpose.msra.mxu0 0.0
        %4015 = vmatprep.subr.mxu0 0.0
        %4016 = vmatpush2.xpose.msra.mxu0 0.0
        %4017 = vmatprep.subr.mxu0 0.0
        %4018 = vmatpush2.xpose.msra.mxu0 0.0
        %4019 = vmatprep.subr.mxu0 0.0
        %4020 = vmatpush2.xpose.msra.mxu0 0.0
        %4021 = vmatprep.subr.mxu0 0.0
        %4022 = vmatpush2.xpose.msra.mxu0 0.0
        %4023 = vmatprep.subr.mxu0 0.0
        %4024 = vmatpush2.xpose.msra.mxu0 0.0
        %4025 = vmatprep.subr.mxu0 0.0
        %4026 = vmatpush2.xpose.msra.mxu0 0.0
        %4027 = vmatprep.subr.mxu0 0.0
        %4028 = vmatpush2.xpose.msra.mxu0 0.0
        %4029 = vmatprep.subr.mxu0 0.0
        %4030 = vmatpush2.xpose.msra.mxu0 0.0
        %4031 = vmatprep.subr.mxu0 0.0
        %4032 = vmatpush2.xpose.msra.mxu0 0.0
        %4033 = vmatprep.subr.mxu0 0.0
        %4034 = vmatpush2.xpose.msra.mxu0 0.0
        %4035 = vmatprep.subr.mxu0 0.0
        %4036 = vmatpush2.xpose.msra.mxu0 0.0
        %4037 = vmatprep.subr.mxu0 0.0
        %4038 = vmatpush2.xpose.msra.mxu0 0.0
        %4039 = vmatprep.subr.mxu0 0.0
        %4040 = vmatpush2.xpose.msra.mxu0 0.0
        %4041 = vmatprep.subr.mxu0 0.0
        %4042 = vmatpush2.xpose.msra.mxu0 0.0
        %4043 = vmatprep.subr.mxu0 0.0
        %4044 = vmatpush2.xpose.msra.mxu0 0.0
        %4045 = vmatprep.mubr.f32.mxu0 0.0
        %4046 = vmatmul.mubr.f32.gmra.mxu0 %v3975
        %v4047 = vpop.f32.mrf.mxu0
        %v4048 = vadd.f32 0.0, %v4047
        %v4049 = vpop.f32.mrf.mxu0
        %4050 = vdwg.mxu0
        %v4051 = vsel %vm1990, %v4048, -inf
        %4052 = vmax.xlane.f32.xlu0 %v4051
        %v4053 = vpop.xlane.xlu0 %4052
        %v4054 = vsub.f32 %v4048, %v4053
        %v4055 = vmul.f32 %v4054, 1.442695
        %v4056 = vpow.pop %v4055
        %v4057 = vsel %vm1990, %v4056, 0.0
        %4058 = vadd.xlane.f32.xlu0 %v4057
        %v4059 = vpop.xlane.xlu0 %4058
        %v4060 = vrcp.pop %v4059
        %v4061 = vmul.f32 %v4056, %v4060
        %v4062 = vadd.f32 %v3895, %v4061
        %4065 = vrot.lane.b32.xlu0 %v3096, 120
        %v4066 = vpop.permute.xlu0 %4065
        %4067 = vrot.lane.b32.xlu0 %v3101, 120
        %v4068 = vpop.permute.xlu0 %4067
        %v4072 = vsel %vm1990, %v4061, 0
        %4074 = vmatprep.subr.mxu0 0.0
        %4075 = vmatpush1.msra.mxu0 0.0
        %4076 = vmatprep.subr.mxu0 0.0
        %4077 = vmatpush1.msra.mxu0 0.0
        %4078 = vmatprep.subr.mxu0 0.0
        %4079 = vmatpush1.msra.mxu0 0.0
        %4080 = vmatprep.subr.mxu0 0.0
        %4081 = vmatpush1.msra.mxu0 0.0
        %4082 = vmatprep.subr.mxu0 0.0
        %4083 = vmatpush1.msra.mxu0 0.0
        %4084 = vmatprep.subr.mxu0 0.0
        %4085 = vmatpush1.msra.mxu0 0.0
        %4086 = vmatprep.subr.mxu0 0.0
        %4087 = vmatpush1.msra.mxu0 0.0
        %4088 = vmatprep.subr.mxu0 0.0
        %4089 = vmatpush1.msra.mxu0 0.0
        %4090 = vmatprep.subr.mxu0 0.0
        %4091 = vmatpush1.msra.mxu0 0.0
        %4092 = vmatprep.subr.mxu0 0.0
        %4093 = vmatpush1.msra.mxu0 0.0
        %4094 = vmatprep.subr.mxu0 0.0
        %4095 = vmatpush1.msra.mxu0 0.0
        %4096 = vmatprep.subr.mxu0 0.0
        %4097 = vmatpush1.msra.mxu0 0.0
        %4098 = vmatprep.subr.mxu0 0.0
        %4099 = vmatpush1.msra.mxu0 0.0
        %4100 = vmatprep.subr.mxu0 0.0
        %4101 = vmatpush1.msra.mxu0 0.0
        %4102 = vmatprep.subr.mxu0 0.0
        %4103 = vmatpush1.msra.mxu0 %v4068
        %4104 = vmatprep.subr.mxu0 0.0
        %4105 = vmatpush1.msra.mxu0 %v4066
        %4106 = vmatprep.subr.mxu0 0.0
        %4107 = vmatpush2.msra.mxu0 0.0
        %4108 = vmatprep.subr.mxu0 0.0
        %4109 = vmatpush2.msra.mxu0 0.0
        %4110 = vmatprep.subr.mxu0 0.0
        %4111 = vmatpush2.msra.mxu0 0.0
        %4112 = vmatprep.subr.mxu0 0.0
        %4113 = vmatpush2.msra.mxu0 0.0
        %4114 = vmatprep.subr.mxu0 0.0
        %4115 = vmatpush2.msra.mxu0 0.0
        %4116 = vmatprep.subr.mxu0 0.0
        %4117 = vmatpush2.msra.mxu0 0.0
        %4118 = vmatprep.subr.mxu0 0.0
        %4119 = vmatpush2.msra.mxu0 0.0
        %4120 = vmatprep.subr.mxu0 0.0
        %4121 = vmatpush2.msra.mxu0 0.0
        %4122 = vmatprep.subr.mxu0 0.0
        %4123 = vmatpush2.msra.mxu0 0.0
        %4124 = vmatprep.subr.mxu0 0.0
        %4125 = vmatpush2.msra.mxu0 0.0
        %4126 = vmatprep.subr.mxu0 0.0
        %4127 = vmatpush2.msra.mxu0 0.0
        %4128 = vmatprep.subr.mxu0 0.0
        %4129 = vmatpush2.msra.mxu0 0.0
        %4130 = vmatprep.subr.mxu0 0.0
        %4131 = vmatpush2.msra.mxu0 0.0
        %4132 = vmatprep.subr.mxu0 0.0
        %4133 = vmatpush2.msra.mxu0 0.0
        %4134 = vmatprep.subr.mxu0 0.0
        %4135 = vmatpush2.msra.mxu0 0.0
        %4136 = vmatprep.subr.mxu0 0.0
        %4137 = vmatpush2.msra.mxu0 0.0
        %4138 = vmatprep.mubr.f32.mxu0 0.0
        %4139 = vmatmul.mubr.f32.gmra.mxu0 %v4072
        %v4140 = vpop.f32.mrf.mxu0
        %v4141 = vadd.f32 0.0, %v4140
        %v4142 = vpop.f32.mrf.mxu0
        %4143 = vdwg.mxu0
        %4144 = vrot.lane.b32.xlu0 %v3805, 112
        %v4145 = vpop.permute.xlu0 %4144
        %4146 = vrot.lane.b32.xlu0 %v2991, 112
        %v4147 = vpop.permute.xlu0 %4146
        %4148 = vrot.lane.b32.xlu0 %v2996, 112
        %v4149 = vpop.permute.xlu0 %4148
        %v4150 = vsel %vm1320, %v4145, 0
        %v4152 = vsel %vm1320, %v4147, 0
        %v4154 = vsel %vm1320, %v4149, 0
        %4156 = vmatprep.subr.mxu0 0.0
        %4157 = vmatpush1.xpose.msra.mxu0 0.0
        %4158 = vmatprep.subr.mxu0 0.0
        %4159 = vmatpush1.xpose.msra.mxu0 0.0
        %4160 = vmatprep.subr.mxu0 0.0
        %4161 = vmatpush1.xpose.msra.mxu0 0.0
        %4162 = vmatprep.subr.mxu0 0.0
        %4163 = vmatpush1.xpose.msra.mxu0 0.0
        %4164 = vmatprep.subr.mxu0 0.0
        %4165 = vmatpush1.xpose.msra.mxu0 0.0
        %4166 = vmatprep.subr.mxu0 0.0
        %4167 = vmatpush1.xpose.msra.mxu0 0.0
        %4168 = vmatprep.subr.mxu0 0.0
        %4169 = vmatpush1.xpose.msra.mxu0 0.0
        %4170 = vmatprep.subr.mxu0 0.0
        %4171 = vmatpush1.xpose.msra.mxu0 0.0
        %4172 = vmatprep.subr.mxu0 0.0
        %4173 = vmatpush1.xpose.msra.mxu0 0.0
        %4174 = vmatprep.subr.mxu0 0.0
        %4175 = vmatpush1.xpose.msra.mxu0 0.0
        %4176 = vmatprep.subr.mxu0 0.0
        %4177 = vmatpush1.xpose.msra.mxu0 0.0
        %4178 = vmatprep.subr.mxu0 0.0
        %4179 = vmatpush1.xpose.msra.mxu0 0.0
        %4180 = vmatprep.subr.mxu0 0.0
        %4181 = vmatpush1.xpose.msra.mxu0 0.0
        %4182 = vmatprep.subr.mxu0 0.0
        %4183 = vmatpush1.xpose.msra.mxu0 0.0
        %4184 = vmatprep.subr.mxu0 0.0
        %4185 = vmatpush1.xpose.msra.mxu0 %v4154
        %4186 = vmatprep.subr.mxu0 0.0
        %4187 = vmatpush1.xpose.msra.mxu0 %v4152
        %4188 = vmatprep.subr.mxu0 0.0
        %4189 = vmatpush2.xpose.msra.mxu0 0.0
        %4190 = vmatprep.subr.mxu0 0.0
        %4191 = vmatpush2.xpose.msra.mxu0 0.0
        %4192 = vmatprep.subr.mxu0 0.0
        %4193 = vmatpush2.xpose.msra.mxu0 0.0
        %4194 = vmatprep.subr.mxu0 0.0
        %4195 = vmatpush2.xpose.msra.mxu0 0.0
        %4196 = vmatprep.subr.mxu0 0.0
        %4197 = vmatpush2.xpose.msra.mxu0 0.0
        %4198 = vmatprep.subr.mxu0 0.0
        %4199 = vmatpush2.xpose.msra.mxu0 0.0
        %4200 = vmatprep.subr.mxu0 0.0
        %4201 = vmatpush2.xpose.msra.mxu0 0.0
        %4202 = vmatprep.subr.mxu0 0.0
        %4203 = vmatpush2.xpose.msra.mxu0 0.0
        %4204 = vmatprep.subr.mxu0 0.0
        %4205 = vmatpush2.xpose.msra.mxu0 0.0
        %4206 = vmatprep.subr.mxu0 0.0
        %4207 = vmatpush2.xpose.msra.mxu0 0.0
        %4208 = vmatprep.subr.mxu0 0.0
        %4209 = vmatpush2.xpose.msra.mxu0 0.0
        %4210 = vmatprep.subr.mxu0 0.0
        %4211 = vmatpush2.xpose.msra.mxu0 0.0
        %4212 = vmatprep.subr.mxu0 0.0
        %4213 = vmatpush2.xpose.msra.mxu0 0.0
        %4214 = vmatprep.subr.mxu0 0.0
        %4215 = vmatpush2.xpose.msra.mxu0 0.0
        %4216 = vmatprep.subr.mxu0 0.0
        %4217 = vmatpush2.xpose.msra.mxu0 0.0
        %4218 = vmatprep.subr.mxu0 0.0
        %4219 = vmatpush2.xpose.msra.mxu0 0.0
        %4220 = vmatprep.mubr.f32.mxu0 0.0
        %4221 = vmatmul.mubr.f32.gmra.mxu0 %v4150
        %v4222 = vpop.f32.mrf.mxu0
        %v4223 = vadd.f32 0.0, %v4222
        %v4224 = vpop.f32.mrf.mxu0
        %4225 = vdwg.mxu0
        %v4226 = vsel %vm1990, %v4223, -inf
        %4227 = vmax.xlane.f32.xlu0 %v4226
        %v4228 = vpop.xlane.xlu0 %4227
        %v4229 = vsub.f32 %v4223, %v4228
        %v4230 = vmul.f32 %v4229, 1.442695
        %v4231 = vpow.pop %v4230
        %v4232 = vsel %vm1990, %v4231, 0.0
        %4233 = vadd.xlane.f32.xlu0 %v4232
        %v4234 = vpop.xlane.xlu0 %4233
        %v4235 = vrcp.pop %v4234
        %v4236 = vmul.f32 %v4231, %v4235
        %v4237 = vadd.f32 %v4062, %v4236
        %4238 = vrot.lane.b32.xlu0 %v3096, 112
        %v4239 = vpop.permute.xlu0 %4238
        %4240 = vrot.lane.b32.xlu0 %v3101, 112
        %v4241 = vpop.permute.xlu0 %4240
        %v4245 = vsel %vm1990, %v4236, 0
        %4247 = vmatprep.subr.mxu0 0.0
        %4248 = vmatpush1.msra.mxu0 0.0
        %4249 = vmatprep.subr.mxu0 0.0
        %4250 = vmatpush1.msra.mxu0 0.0
        %4251 = vmatprep.subr.mxu0 0.0
        %4252 = vmatpush1.msra.mxu0 0.0
        %4253 = vmatprep.subr.mxu0 0.0
        %4254 = vmatpush1.msra.mxu0 0.0
        %4255 = vmatprep.subr.mxu0 0.0
        %4256 = vmatpush1.msra.mxu0 0.0
        %4257 = vmatprep.subr.mxu0 0.0
        %4258 = vmatpush1.msra.mxu0 0.0
        %4259 = vmatprep.subr.mxu0 0.0
        %4260 = vmatpush1.msra.mxu0 0.0
        %4261 = vmatprep.subr.mxu0 0.0
        %4262 = vmatpush1.msra.mxu0 0.0
        %4263 = vmatprep.subr.mxu0 0.0
        %4264 = vmatpush1.msra.mxu0 0.0
        %4265 = vmatprep.subr.mxu0 0.0
        %4266 = vmatpush1.msra.mxu0 0.0
        %4267 = vmatprep.subr.mxu0 0.0
        %4268 = vmatpush1.msra.mxu0 0.0
        %4269 = vmatprep.subr.mxu0 0.0
        %4270 = vmatpush1.msra.mxu0 0.0
        %4271 = vmatprep.subr.mxu0 0.0
        %4272 = vmatpush1.msra.mxu0 0.0
        %4273 = vmatprep.subr.mxu0 0.0
        %4274 = vmatpush1.msra.mxu0 0.0
        %4275 = vmatprep.subr.mxu0 0.0
        %4276 = vmatpush1.msra.mxu0 %v4241
        %4277 = vmatprep.subr.mxu0 0.0
        %4278 = vmatpush1.msra.mxu0 %v4239
        %4279 = vmatprep.subr.mxu0 0.0
        %4280 = vmatpush2.msra.mxu0 0.0
        %4281 = vmatprep.subr.mxu0 0.0
        %4282 = vmatpush2.msra.mxu0 0.0
        %4283 = vmatprep.subr.mxu0 0.0
        %4284 = vmatpush2.msra.mxu0 0.0
        %4285 = vmatprep.subr.mxu0 0.0
        %4286 = vmatpush2.msra.mxu0 0.0
        %4287 = vmatprep.subr.mxu0 0.0
        %4288 = vmatpush2.msra.mxu0 0.0
        %4289 = vmatprep.subr.mxu0 0.0
        %4290 = vmatpush2.msra.mxu0 0.0
        %4291 = vmatprep.subr.mxu0 0.0
        %4292 = vmatpush2.msra.mxu0 0.0
        %4293 = vmatprep.subr.mxu0 0.0
        %4294 = vmatpush2.msra.mxu0 0.0
        %4295 = vmatprep.subr.mxu0 0.0
        %4296 = vmatpush2.msra.mxu0 0.0
        %4297 = vmatprep.subr.mxu0 0.0
        %4298 = vmatpush2.msra.mxu0 0.0
        %4299 = vmatprep.subr.mxu0 0.0
        %4300 = vmatpush2.msra.mxu0 0.0
        %4301 = vmatprep.subr.mxu0 0.0
        %4302 = vmatpush2.msra.mxu0 0.0
        %4303 = vmatprep.subr.mxu0 0.0
        %4304 = vmatpush2.msra.mxu0 0.0
        %4305 = vmatprep.subr.mxu0 0.0
        %4306 = vmatpush2.msra.mxu0 0.0
        %4307 = vmatprep.subr.mxu0 0.0
        %4308 = vmatpush2.msra.mxu0 0.0
        %4309 = vmatprep.subr.mxu0 0.0
        %4310 = vmatpush2.msra.mxu0 0.0
        %4311 = vmatprep.mubr.f32.mxu0 0.0
        %4312 = vmatmul.mubr.f32.gmra.mxu0 %v4245
        %v4313 = vpop.f32.mrf.mxu0
        %v4314 = vadd.f32 0.0, %v4313
        %v4315 = vpop.f32.mrf.mxu0
        %4316 = vdwg.mxu0
        %4317 = vrot.lane.b32.xlu0 %v3805, 104
        %v4318 = vpop.permute.xlu0 %4317
        %4319 = vrot.lane.b32.xlu0 %v2991, 104
        %v4320 = vpop.permute.xlu0 %4319
        %4321 = vrot.lane.b32.xlu0 %v2996, 104
        %v4322 = vpop.permute.xlu0 %4321
        %v4323 = vsel %vm1320, %v4318, 0
        %v4325 = vsel %vm1320, %v4320, 0
        %v4327 = vsel %vm1320, %v4322, 0
        %4329 = vmatprep.subr.mxu0 0.0
        %4330 = vmatpush1.xpose.msra.mxu0 0.0
        %4331 = vmatprep.subr.mxu0 0.0
        %4332 = vmatpush1.xpose.msra.mxu0 0.0
        %4333 = vmatprep.subr.mxu0 0.0
        %4334 = vmatpush1.xpose.msra.mxu0 0.0
        %4335 = vmatprep.subr.mxu0 0.0
        %4336 = vmatpush1.xpose.msra.mxu0 0.0
        %4337 = vmatprep.subr.mxu0 0.0
        %4338 = vmatpush1.xpose.msra.mxu0 0.0
        %4339 = vmatprep.subr.mxu0 0.0
        %4340 = vmatpush1.xpose.msra.mxu0 0.0
        %4341 = vmatprep.subr.mxu0 0.0
        %4342 = vmatpush1.xpose.msra.mxu0 0.0
        %4343 = vmatprep.subr.mxu0 0.0
        %4344 = vmatpush1.xpose.msra.mxu0 0.0
        %4345 = vmatprep.subr.mxu0 0.0
        %4346 = vmatpush1.xpose.msra.mxu0 0.0
        %4347 = vmatprep.subr.mxu0 0.0
        %4348 = vmatpush1.xpose.msra.mxu0 0.0
        %4349 = vmatprep.subr.mxu0 0.0
        %4350 = vmatpush1.xpose.msra.mxu0 0.0
        %4351 = vmatprep.subr.mxu0 0.0
        %4352 = vmatpush1.xpose.msra.mxu0 0.0
        %4353 = vmatprep.subr.mxu0 0.0
        %4354 = vmatpush1.xpose.msra.mxu0 0.0
        %4355 = vmatprep.subr.mxu0 0.0
        %4356 = vmatpush1.xpose.msra.mxu0 0.0
        %4357 = vmatprep.subr.mxu0 0.0
        %4358 = vmatpush1.xpose.msra.mxu0 %v4327
        %4359 = vmatprep.subr.mxu0 0.0
        %4360 = vmatpush1.xpose.msra.mxu0 %v4325
        %4361 = vmatprep.subr.mxu0 0.0
        %4362 = vmatpush2.xpose.msra.mxu0 0.0
        %4363 = vmatprep.subr.mxu0 0.0
        %4364 = vmatpush2.xpose.msra.mxu0 0.0
        %4365 = vmatprep.subr.mxu0 0.0
        %4366 = vmatpush2.xpose.msra.mxu0 0.0
        %4367 = vmatprep.subr.mxu0 0.0
        %4368 = vmatpush2.xpose.msra.mxu0 0.0
        %4369 = vmatprep.subr.mxu0 0.0
        %4370 = vmatpush2.xpose.msra.mxu0 0.0
        %4371 = vmatprep.subr.mxu0 0.0
        %4372 = vmatpush2.xpose.msra.mxu0 0.0
        %4373 = vmatprep.subr.mxu0 0.0
        %4374 = vmatpush2.xpose.msra.mxu0 0.0
        %4375 = vmatprep.subr.mxu0 0.0
        %4376 = vmatpush2.xpose.msra.mxu0 0.0
        %4377 = vmatprep.subr.mxu0 0.0
        %4378 = vmatpush2.xpose.msra.mxu0 0.0
        %4379 = vmatprep.subr.mxu0 0.0
        %4380 = vmatpush2.xpose.msra.mxu0 0.0
        %4381 = vmatprep.subr.mxu0 0.0
        %4382 = vmatpush2.xpose.msra.mxu0 0.0
        %4383 = vmatprep.subr.mxu0 0.0
        %4384 = vmatpush2.xpose.msra.mxu0 0.0
        %4385 = vmatprep.subr.mxu0 0.0
        %4386 = vmatpush2.xpose.msra.mxu0 0.0
        %4387 = vmatprep.subr.mxu0 0.0
        %4388 = vmatpush2.xpose.msra.mxu0 0.0
        %4389 = vmatprep.subr.mxu0 0.0
        %4390 = vmatpush2.xpose.msra.mxu0 0.0
        %4391 = vmatprep.subr.mxu0 0.0
        %4392 = vmatpush2.xpose.msra.mxu0 0.0
        %4393 = vmatprep.mubr.f32.mxu0 0.0
        %4394 = vmatmul.mubr.f32.gmra.mxu0 %v4323
        %v4395 = vpop.f32.mrf.mxu0
        %v4396 = vadd.f32 0.0, %v4395
        %v4397 = vpop.f32.mrf.mxu0
        %4398 = vdwg.mxu0
        %v4399 = vsel %vm1990, %v4396, -inf
        %4400 = vmax.xlane.f32.xlu0 %v4399
        %v4401 = vpop.xlane.xlu0 %4400
        %v4402 = vsub.f32 %v4396, %v4401
        %v4403 = vmul.f32 %v4402, 1.442695
        %v4404 = vpow.pop %v4403
        %v4405 = vsel %vm1990, %v4404, 0.0
        %4406 = vadd.xlane.f32.xlu0 %v4405
        %v4407 = vpop.xlane.xlu0 %4406
        %v4408 = vrcp.pop %v4407
        %v4409 = vmul.f32 %v4404, %v4408
        %v4410 = vadd.f32 %v4237, %v4409
        %4411 = vrot.lane.b32.xlu0 %v3096, 104
        %v4412 = vpop.permute.xlu0 %4411
        %4413 = vrot.lane.b32.xlu0 %v3101, 104
        %v4414 = vpop.permute.xlu0 %4413
        %v4418 = vsel %vm1990, %v4409, 0
        %4420 = vmatprep.subr.mxu0 0.0
        %4421 = vmatpush1.msra.mxu0 0.0
        %4422 = vmatprep.subr.mxu0 0.0
        %4423 = vmatpush1.msra.mxu0 0.0
        %4424 = vmatprep.subr.mxu0 0.0
        %4425 = vmatpush1.msra.mxu0 0.0
        %4426 = vmatprep.subr.mxu0 0.0
        %4427 = vmatpush1.msra.mxu0 0.0
        %4428 = vmatprep.subr.mxu0 0.0
        %4429 = vmatpush1.msra.mxu0 0.0
        %4430 = vmatprep.subr.mxu0 0.0
        %4431 = vmatpush1.msra.mxu0 0.0
        %4432 = vmatprep.subr.mxu0 0.0
        %4433 = vmatpush1.msra.mxu0 0.0
        %4434 = vmatprep.subr.mxu0 0.0
        %4435 = vmatpush1.msra.mxu0 0.0
        %4436 = vmatprep.subr.mxu0 0.0
        %4437 = vmatpush1.msra.mxu0 0.0
        %4438 = vmatprep.subr.mxu0 0.0
        %4439 = vmatpush1.msra.mxu0 0.0
        %4440 = vmatprep.subr.mxu0 0.0
        %4441 = vmatpush1.msra.mxu0 0.0
        %4442 = vmatprep.subr.mxu0 0.0
        %4443 = vmatpush1.msra.mxu0 0.0
        %4444 = vmatprep.subr.mxu0 0.0
        %4445 = vmatpush1.msra.mxu0 0.0
        %4446 = vmatprep.subr.mxu0 0.0
        %4447 = vmatpush1.msra.mxu0 0.0
        %4448 = vmatprep.subr.mxu0 0.0
        %4449 = vmatpush1.msra.mxu0 %v4414
        %4450 = vmatprep.subr.mxu0 0.0
        %4451 = vmatpush1.msra.mxu0 %v4412
        %4452 = vmatprep.subr.mxu0 0.0
        %4453 = vmatpush2.msra.mxu0 0.0
        %4454 = vmatprep.subr.mxu0 0.0
        %4455 = vmatpush2.msra.mxu0 0.0
        %4456 = vmatprep.subr.mxu0 0.0
        %4457 = vmatpush2.msra.mxu0 0.0
        %4458 = vmatprep.subr.mxu0 0.0
        %4459 = vmatpush2.msra.mxu0 0.0
        %4460 = vmatprep.subr.mxu0 0.0
        %4461 = vmatpush2.msra.mxu0 0.0
        %4462 = vmatprep.subr.mxu0 0.0
        %4463 = vmatpush2.msra.mxu0 0.0
        %4464 = vmatprep.subr.mxu0 0.0
        %4465 = vmatpush2.msra.mxu0 0.0
        %4466 = vmatprep.subr.mxu0 0.0
        %4467 = vmatpush2.msra.mxu0 0.0
        %4468 = vmatprep.subr.mxu0 0.0
        %4469 = vmatpush2.msra.mxu0 0.0
        %4470 = vmatprep.subr.mxu0 0.0
        %4471 = vmatpush2.msra.mxu0 0.0
        %4472 = vmatprep.subr.mxu0 0.0
        %4473 = vmatpush2.msra.mxu0 0.0
        %4474 = vmatprep.subr.mxu0 0.0
        %4475 = vmatpush2.msra.mxu0 0.0
        %4476 = vmatprep.subr.mxu0 0.0
        %4477 = vmatpush2.msra.mxu0 0.0
        %4478 = vmatprep.subr.mxu0 0.0
        %4479 = vmatpush2.msra.mxu0 0.0
        %4480 = vmatprep.subr.mxu0 0.0
        %4481 = vmatpush2.msra.mxu0 0.0
        %4482 = vmatprep.subr.mxu0 0.0
        %4483 = vmatpush2.msra.mxu0 0.0
        %4484 = vmatprep.mubr.f32.mxu0 0.0
        %4485 = vmatmul.mubr.f32.gmra.mxu0 %v4418
        %v4486 = vpop.f32.mrf.mxu0
        %v4487 = vadd.f32 0.0, %v4486
        %v4488 = vpop.f32.mrf.mxu0
        %4489 = vdwg.mxu0
        %4491 = vrot.lane.b32.xlu0 %v4141, 8
        %v4492 = vpop.permute.xlu0 %4491
        %4495 = vrot.lane.b32.xlu0 %v4314, 16
        %v4496 = vpop.permute.xlu0 %4495
        %4499 = vrot.lane.b32.xlu0 %v4487, 24
        %v4500 = vpop.permute.xlu0 %4499
        %v4502 = vsel %vm1320, %v3966, %v4492
        %v4503 = vsel %vm1990, %v4502, %v4496
        %v4504 = vsel %vm1992, %v4503, %v4500
        %v4505 = vmul.f32 %v4410, 0.25
        %v4506 = vld [vmem:[%s802] sm:$0xff]
        %v4507 = vld [vmem:[%s802 + $0x8] sm:$0xff]
        %v4508 = vld [vmem:[%s802 + $0x10] sm:$0xff]
        %v4509 = vld [vmem:[%s802 + $0x18] sm:$0xff]
        %v4510 = vlaneseq
        %v4511 = vshrl.u32 %v4510, 7
        %v4512 = vsub.s32 7, %v4511
        %v4513 = vrot.slane %v1052, %v4512
        %v4515 = vsel %vm1065, %v3803, 0
        %v4518 = vsel %vm1065, %v4504, 0
        %4520 = vmatprep.subr.mxu0 0.0
        %4521 = vmatpush1.msra.mxu0 0.0
        %4522 = vmatprep.subr.mxu0 0.0
        %4523 = vmatpush1.msra.mxu0 0.0
        %4524 = vmatprep.subr.mxu0 0.0
        %4525 = vmatpush1.msra.mxu0 0.0
        %4526 = vmatprep.subr.mxu0 0.0
        %4527 = vmatpush1.msra.mxu0 0.0
        %4528 = vmatprep.subr.mxu0 0.0
        %4529 = vmatpush1.msra.mxu0 0.0
        %4530 = vmatprep.subr.mxu0 0.0
        %4531 = vmatpush1.msra.mxu0 0.0
        %4532 = vmatprep.subr.mxu0 0.0
        %4533 = vmatpush1.msra.mxu0 0.0
        %4534 = vmatprep.subr.mxu0 0.0
        %4535 = vmatpush1.msra.mxu0 0.0
        %4536 = vmatprep.subr.mxu0 0.0
        %4537 = vmatpush1.msra.mxu0 0.0
        %4538 = vmatprep.subr.mxu0 0.0
        %4539 = vmatpush1.msra.mxu0 0.0
        %4540 = vmatprep.subr.mxu0 0.0
        %4541 = vmatpush1.msra.mxu0 0.0
        %4542 = vmatprep.subr.mxu0 0.0
        %4543 = vmatpush1.msra.mxu0 0.0
        %4544 = vmatprep.subr.mxu0 0.0
        %4545 = vmatpush1.msra.mxu0 %v4509
        %4546 = vmatprep.subr.mxu0 0.0
        %4547 = vmatpush1.msra.mxu0 %v4508
        %4548 = vmatprep.subr.mxu0 0.0
        %4549 = vmatpush1.msra.mxu0 %v4507
        %4550 = vmatprep.subr.mxu0 0.0
        %4551 = vmatpush1.msra.mxu0 %v4506
        %4552 = vmatprep.subr.mxu0 0.0
        %4553 = vmatpush2.msra.mxu0 0.0
        %4554 = vmatprep.subr.mxu0 0.0
        %4555 = vmatpush2.msra.mxu0 0.0
        %4556 = vmatprep.subr.mxu0 0.0
        %4557 = vmatpush2.msra.mxu0 0.0
        %4558 = vmatprep.subr.mxu0 0.0
        %4559 = vmatpush2.msra.mxu0 0.0
        %4560 = vmatprep.subr.mxu0 0.0
        %4561 = vmatpush2.msra.mxu0 0.0
        %4562 = vmatprep.subr.mxu0 0.0
        %4563 = vmatpush2.msra.mxu0 0.0
        %4564 = vmatprep.subr.mxu0 0.0
        %4565 = vmatpush2.msra.mxu0 0.0
        %4566 = vmatprep.subr.mxu0 0.0
        %4567 = vmatpush2.msra.mxu0 0.0
        %4568 = vmatprep.subr.mxu0 0.0
        %4569 = vmatpush2.msra.mxu0 0.0
        %4570 = vmatprep.subr.mxu0 0.0
        %4571 = vmatpush2.msra.mxu0 0.0
        %4572 = vmatprep.subr.mxu0 0.0
        %4573 = vmatpush2.msra.mxu0 0.0
        %4574 = vmatprep.subr.mxu0 0.0
        %4575 = vmatpush2.msra.mxu0 0.0
        %4576 = vmatprep.subr.mxu0 0.0
        %4577 = vmatpush2.msra.mxu0 0.0
        %4578 = vmatprep.subr.mxu0 0.0
        %4579 = vmatpush2.msra.mxu0 0.0
        %4580 = vmatprep.subr.mxu0 0.0
        %4581 = vmatpush2.msra.mxu0 0.0
        %4582 = vmatprep.subr.mxu0 0.0
        %4583 = vmatpush2.msra.mxu0 0.0
        %4584 = vmatprep.mubr.f32.mxu0 0.0
        %4585 = vmatmul.mubr.f32.gmra.mxu0 %v4515
        %v4586 = vpop.f32.mrf.mxu0
        %v4587 = vadd.f32 %v4513, %v4586
        %v4588 = vpop.f32.mrf.mxu0
        %4589 = vmatprep.mubr.f32.mxu0 0.0
        %4590 = vmatmul.mubr.f32.gmra.mxu0 %v4518
        %v4591 = vpop.f32.mrf.mxu0
        %v4592 = vadd.f32 %v4513, %v4591
        %v4593 = vpop.f32.mrf.mxu0
        %4594 = vdwg.mxu0
        %v4595 = vadd.f32 %v2797, %v4587
        %v4596 = vadd.f32 %v2798, %v4592
        %v4597 = vsel %vm1065, %v4595, 0.0
        %4598 = vadd.xlane.f32.xlu0 %v4597
        %v4599 = vpop.xlane.xlu0 %4598
        %v4600 = vsel %vm1065, %v4596, 0.0
        %4601 = vadd.xlane.f32.xlu0 %v4600
        %v4602 = vpop.xlane.xlu0 %4601
        %v4603 = vmul.f32 %v4595, %v4595
        %v4604 = vmul.f32 %v4596, %v4596
        %v4605 = vsel %vm1065, %v4603, 0.0
        %4606 = vadd.xlane.f32.xlu0 %v4605
        %v4607 = vpop.xlane.xlu0 %4606
        %v4608 = vsel %vm1065, %v4604, 0.0
        %4609 = vadd.xlane.f32.xlu0 %v4608
        %v4610 = vpop.xlane.xlu0 %4609
        %v4611 = vmul.f32 %v4599, 0.03125
        %v4612 = vmul.f32 %v4602, 0.03125
        %v4613 = vmul.f32 %v4607, 0.03125
        %v4614 = vmul.f32 %v4610, 0.03125
        %v4615 = vmul.f32 %v4611, %v4611
        %v4616 = vmul.f32 %v4612, %v4612
        %v4617 = vsub.f32 %v4613, %v4615
        %v4618 = vsub.f32 %v4614, %v4616
        %v4619 = vsub.f32 %v4595, %v4611
        %v4620 = vsub.f32 %v4596, %v4612
        %v4621 = vadd.f32 %v4617, 1e-05
        %v4622 = vadd.f32 %v4618, 1e-05
        %v4623 = vrsqrt.pop %v4621
        %v4624 = vrsqrt.pop %v4622
        %v4625 = vmul.f32 %v4619, %v4623
        %v4626 = vmul.f32 %v4620, %v4624
        %v4627 = vlaneseq
        %v4628 = vshrl.u32 %v4627, 7
        %v4629 = vsub.s32 3, %v4628
        %v4630 = vrot.slane %v1053, %v4629
        %v4631 = vmul.f32 %v4625, %v4630
        %v4632 = vmul.f32 %v4626, %v4630
        %v4633 = vlaneseq
        %v4634 = vshrl.u32 %v4633, 7
        %v4635 = vsub.s32 4, %v4634
        %v4636 = vrot.slane %v1053, %v4635
        %v4637 = vadd.f32 %v4631, %v4636
        %v4638 = vadd.f32 %v4632, %v4636
        %v4639 = vld [vmem:[%s811] sm:$0xff]
        %v4640 = vld [vmem:[%s811 + $0x8] sm:$0xff]
        %v4641 = vld [vmem:[%s811 + $0x10] sm:$0xff]
        %v4642 = vld [vmem:[%s811 + $0x18] sm:$0xff]
        %v4644 = vlaneseq
        %v4645 = vshrl.u32 %v4644, 7
        %v4646 = vsub.s32 0, %v4645
        %v4647 = vrot.slane %v1054, %v4646
        %v4650 = vsel %vm1065, %v4637, 0
        %v4653 = vsel %vm1065, %v4638, 0
        %4655 = vmatprep.subr.mxu0 0.0
        %4656 = vmatpush1.msra.mxu0 0.0
        %4657 = vmatprep.subr.mxu0 0.0
        %4658 = vmatpush1.msra.mxu0 0.0
        %4659 = vmatprep.subr.mxu0 0.0
        %4660 = vmatpush1.msra.mxu0 0.0
        %4661 = vmatprep.subr.mxu0 0.0
        %4662 = vmatpush1.msra.mxu0 0.0
        %4663 = vmatprep.subr.mxu0 0.0
        %4664 = vmatpush1.msra.mxu0 0.0
        %4665 = vmatprep.subr.mxu0 0.0
        %4666 = vmatpush1.msra.mxu0 0.0
        %4667 = vmatprep.subr.mxu0 0.0
        %4668 = vmatpush1.msra.mxu0 0.0
        %4669 = vmatprep.subr.mxu0 0.0
        %4670 = vmatpush1.msra.mxu0 0.0
        %4671 = vmatprep.subr.mxu0 0.0
        %4672 = vmatpush1.msra.mxu0 0.0
        %4673 = vmatprep.subr.mxu0 0.0
        %4674 = vmatpush1.msra.mxu0 0.0
        %4675 = vmatprep.subr.mxu0 0.0
        %4676 = vmatpush1.msra.mxu0 0.0
        %4677 = vmatprep.subr.mxu0 0.0
        %4678 = vmatpush1.msra.mxu0 0.0
        %4679 = vmatprep.subr.mxu0 0.0
        %4680 = vmatpush1.msra.mxu0 %v4642
        %4681 = vmatprep.subr.mxu0 0.0
        %4682 = vmatpush1.msra.mxu0 %v4641
        %4683 = vmatprep.subr.mxu0 0.0
        %4684 = vmatpush1.msra.mxu0 %v4640
        %4685 = vmatprep.subr.mxu0 0.0
        %4686 = vmatpush1.msra.mxu0 %v4639
        %4687 = vmatprep.subr.mxu0 0.0
        %4688 = vmatpush2.msra.mxu0 0.0
        %4689 = vmatprep.subr.mxu0 0.0
        %4690 = vmatpush2.msra.mxu0 0.0
        %4691 = vmatprep.subr.mxu0 0.0
        %4692 = vmatpush2.msra.mxu0 0.0
        %4693 = vmatprep.subr.mxu0 0.0
        %4694 = vmatpush2.msra.mxu0 0.0
        %4695 = vmatprep.subr.mxu0 0.0
        %4696 = vmatpush2.msra.mxu0 0.0
        %4697 = vmatprep.subr.mxu0 0.0
        %4698 = vmatpush2.msra.mxu0 0.0
        %4699 = vmatprep.subr.mxu0 0.0
        %4700 = vmatpush2.msra.mxu0 0.0
        %4701 = vmatprep.subr.mxu0 0.0
        %4702 = vmatpush2.msra.mxu0 0.0
        %4703 = vmatprep.subr.mxu0 0.0
        %4704 = vmatpush2.msra.mxu0 0.0
        %4705 = vmatprep.subr.mxu0 0.0
        %4706 = vmatpush2.msra.mxu0 0.0
        %4707 = vmatprep.subr.mxu0 0.0
        %4708 = vmatpush2.msra.mxu0 0.0
        %4709 = vmatprep.subr.mxu0 0.0
        %4710 = vmatpush2.msra.mxu0 0.0
        %4711 = vmatprep.subr.mxu0 0.0
        %4712 = vmatpush2.msra.mxu0 0.0
        %4713 = vmatprep.subr.mxu0 0.0
        %4714 = vmatpush2.msra.mxu0 0.0
        %4715 = vmatprep.subr.mxu0 0.0
        %4716 = vmatpush2.msra.mxu0 0.0
        %4717 = vmatprep.subr.mxu0 0.0
        %4718 = vmatpush2.msra.mxu0 0.0
        %4719 = vmatprep.mubr.f32.mxu0 0.0
        %4720 = vmatmul.mubr.f32.gmra.mxu0 %v4650
        %v4721 = vpop.f32.mrf.mxu0
        %v4722 = vadd.f32 %v4647, %v4721
        %v4723 = vpop.f32.mrf.mxu0
        %4724 = vmatprep.mubr.f32.mxu0 0.0
        %4725 = vmatmul.mubr.f32.gmra.mxu0 %v4653
        %v4726 = vpop.f32.mrf.mxu0
        %v4727 = vadd.f32 %v4647, %v4726
        %v4728 = vpop.f32.mrf.mxu0
        %4729 = vdwg.mxu0
        %v4730 = vmax.f32 %v4722, 0.0
        %v4731 = vmax.f32 %v4727, 0.0
        %v4732 = vld [vmem:[%s1018] sm:$0xff]
        %v4733 = vld [vmem:[%s1018 + $0x8] sm:$0xff]
        %v4734 = vld [vmem:[%s1018 + $0x10] sm:$0xff]
        %v4735 = vld [vmem:[%s1018 + $0x18] sm:$0xff]
        %v4736 = vld [vmem:[%s1018 + $0x20] sm:$0xff]
        %v4737 = vld [vmem:[%s1018 + $0x28] sm:$0xff]
        %v4738 = vld [vmem:[%s1018 + $0x30] sm:$0xff]
        %v4739 = vld [vmem:[%s1018 + $0x38] sm:$0xff]
        %v4740 = vlaneseq
        %v4741 = vshrl.u32 %v4740, 7
        %v4742 = vsub.s32 0, %v4741
        %v4743 = vrot.slane %v1053, %v4742
        %vm4744 = vcmask 523264
        %v4746 = vsel %vm4744, %v4730, 0
        %v4749 = vsel %vm4744, %v4731, 0
        %4751 = vmatprep.subr.mxu0 0.0
        %4752 = vmatpush1.msra.mxu0 0.0
        %4753 = vmatprep.subr.mxu0 0.0
        %4754 = vmatpush1.msra.mxu0 0.0
        %4755 = vmatprep.subr.mxu0 0.0
        %4756 = vmatpush1.msra.mxu0 0.0
        %4757 = vmatprep.subr.mxu0 0.0
        %4758 = vmatpush1.msra.mxu0 0.0
        %4759 = vmatprep.subr.mxu0 0.0
        %4760 = vmatpush1.msra.mxu0 0.0
        %4761 = vmatprep.subr.mxu0 0.0
        %4762 = vmatpush1.msra.mxu0 0.0
        %4763 = vmatprep.subr.mxu0 0.0
        %4764 = vmatpush1.msra.mxu0 0.0
        %4765 = vmatprep.subr.mxu0 0.0
        %4766 = vmatpush1.msra.mxu0 0.0
        %4767 = vmatprep.subr.mxu0 0.0
        %4768 = vmatpush1.msra.mxu0 %v4739
        %4769 = vmatprep.subr.mxu0 0.0
        %4770 = vmatpush1.msra.mxu0 %v4738
        %4771 = vmatprep.subr.mxu0 0.0
        %4772 = vmatpush1.msra.mxu0 %v4737
        %4773 = vmatprep.subr.mxu0 0.0
        %4774 = vmatpush1.msra.mxu0 %v4736
        %4775 = vmatprep.subr.mxu0 0.0
        %4776 = vmatpush1.msra.mxu0 %v4735
        %4777 = vmatprep.subr.mxu0 0.0
        %4778 = vmatpush1.msra.mxu0 %v4734
        %4779 = vmatprep.subr.mxu0 0.0
        %4780 = vmatpush1.msra.mxu0 %v4733
        %4781 = vmatprep.subr.mxu0 0.0
        %4782 = vmatpush1.msra.mxu0 %v4732
        %4783 = vmatprep.subr.mxu0 0.0
        %4784 = vmatpush2.msra.mxu0 0.0
        %4785 = vmatprep.subr.mxu0 0.0
        %4786 = vmatpush2.msra.mxu0 0.0
        %4787 = vmatprep.subr.mxu0 0.0
        %4788 = vmatpush2.msra.mxu0 0.0
        %4789 = vmatprep.subr.mxu0 0.0
        %4790 = vmatpush2.msra.mxu0 0.0
        %4791 = vmatprep.subr.mxu0 0.0
        %4792 = vmatpush2.msra.mxu0 0.0
        %4793 = vmatprep.subr.mxu0 0.0
        %4794 = vmatpush2.msra.mxu0 0.0
        %4795 = vmatprep.subr.mxu0 0.0
        %4796 = vmatpush2.msra.mxu0 0.0
        %4797 = vmatprep.subr.mxu0 0.0
        %4798 = vmatpush2.msra.mxu0 0.0
        %4799 = vmatprep.subr.mxu0 0.0
        %4800 = vmatpush2.msra.mxu0 0.0
        %4801 = vmatprep.subr.mxu0 0.0
        %4802 = vmatpush2.msra.mxu0 0.0
        %4803 = vmatprep.subr.mxu0 0.0
        %4804 = vmatpush2.msra.mxu0 0.0
        %4805 = vmatprep.subr.mxu0 0.0
        %4806 = vmatpush2.msra.mxu0 0.0
        %4807 = vmatprep.subr.mxu0 0.0
        %4808 = vmatpush2.msra.mxu0 0.0
        %4809 = vmatprep.subr.mxu0 0.0
        %4810 = vmatpush2.msra.mxu0 0.0
        %4811 = vmatprep.subr.mxu0 0.0
        %4812 = vmatpush2.msra.mxu0 0.0
        %4813 = vmatprep.subr.mxu0 0.0
        %4814 = vmatpush2.msra.mxu0 0.0
        %4815 = vmatprep.mubr.f32.mxu0 0.0
        %4816 = vmatmul.mubr.f32.gmra.mxu0 %v4746
        %v4817 = vpop.f32.mrf.mxu0
        %v4818 = vadd.f32 %v4743, %v4817
        %v4819 = vpop.f32.mrf.mxu0
        %4820 = vmatprep.mubr.f32.mxu0 0.0
        %4821 = vmatmul.mubr.f32.gmra.mxu0 %v4749
        %v4822 = vpop.f32.mrf.mxu0
        %v4823 = vadd.f32 %v4743, %v4822
        %v4824 = vpop.f32.mrf.mxu0
        %4825 = vdwg.mxu0
        %v4826 = vadd.f32 %v4637, %v4818
        %v4827 = vadd.f32 %v4638, %v4823
        %v4828 = vsel %vm1065, %v4826, 0.0
        %4829 = vadd.xlane.f32.xlu0 %v4828
        %v4830 = vpop.xlane.xlu0 %4829
        %v4831 = vsel %vm1065, %v4827, 0.0
        %4832 = vadd.xlane.f32.xlu0 %v4831
        %v4833 = vpop.xlane.xlu0 %4832
        %v4834 = vmul.f32 %v4826, %v4826
        %v4835 = vmul.f32 %v4827, %v4827
        %v4836 = vsel %vm1065, %v4834, 0.0
        %4837 = vadd.xlane.f32.xlu0 %v4836
        %v4838 = vpop.xlane.xlu0 %4837
        %v4839 = vsel %vm1065, %v4835, 0.0
        %4840 = vadd.xlane.f32.xlu0 %v4839
        %v4841 = vpop.xlane.xlu0 %4840
        %v4842 = vmul.f32 %v4830, 0.03125
        %v4843 = vmul.f32 %v4833, 0.03125
        %v4844 = vmul.f32 %v4838, 0.03125
        %v4845 = vmul.f32 %v4841, 0.03125
        %v4846 = vmul.f32 %v4842, %v4842
        %v4847 = vmul.f32 %v4843, %v4843
        %v4848 = vsub.f32 %v4844, %v4846
        %v4849 = vsub.f32 %v4845, %v4847
        %v4850 = vsub.f32 %v4826, %v4842
        %v4851 = vsub.f32 %v4827, %v4843
        %v4852 = vadd.f32 %v4848, 1e-05
        %v4853 = vadd.f32 %v4849, 1e-05
        %v4854 = vrsqrt.pop %v4852
        %v4855 = vrsqrt.pop %v4853
        %v4856 = vmul.f32 %v4850, %v4854
        %v4857 = vmul.f32 %v4851, %v4855
        %v4858 = vlaneseq
        %v4859 = vshrl.u32 %v4858, 7
        %v4860 = vsub.s32 5, %v4859
        %v4861 = vrot.slane %v1053, %v4860
        %v4862 = vmul.f32 %v4856, %v4861
        %v4863 = vmul.f32 %v4857, %v4861
        %v4864 = vlaneseq
        %v4865 = vshrl.u32 %v4864, 7
        %v4866 = vsub.s32 6, %v4865
        %v4867 = vrot.slane %v1053, %v4866
        %v4868 = vadd.f32 %v4862, %v4867
        %v4869 = vadd.f32 %v4863, %v4867
        %4870 = vst.msk [vmem:[%s1028] sm:$0xff] %vm1065, %v4868
        %4871 = vst.msk [vmem:[%s1028 + $0x8] sm:$0xff] %vm1065, %v4869
        %p4872 = scmp.eq.s32.totalorder %s47, 1
        // Predicated region
        $region121: #{transformer_decoder.1} parent=91 // pred_check
          %p4873 = pneg %p4872
        $region122: #{transformer_decoder.1} parent=91 // pred_check_branch
          %4875 = sbr.rel (%p4873) target = $region124
        $region123: #{transformer_decoder.1} parent=91 // pred_region
          %v4876 = vld [vmem:[#allocation10] sm:$0x1]
          %v4877 = vld [vmem:[#allocation11] sm:$0x1]
          %v4878 = vsel %vm1065, %v4868, 0.0
          %4879 = vadd.xlane.f32.xlu0 %v4878
          %v4880 = vpop.xlane.xlu0 %4879
          %v4881 = vsel %vm1065, %v4869, 0.0
          %4882 = vadd.xlane.f32.xlu0 %v4881
          %v4883 = vpop.xlane.xlu0 %4882
          %v4884 = vmul.f32 %v4868, %v4868
          %v4885 = vmul.f32 %v4869, %v4869
          %v4886 = vsel %vm1065, %v4884, 0.0
          %4887 = vadd.xlane.f32.xlu0 %v4886
          %v4888 = vpop.xlane.xlu0 %4887
          %v4889 = vsel %vm1065, %v4885, 0.0
          %4890 = vadd.xlane.f32.xlu0 %v4889
          %v4891 = vpop.xlane.xlu0 %4890
          %v4892 = vmul.f32 %v4880, 0.03125
          %v4893 = vmul.f32 %v4883, 0.03125
          %v4894 = vmul.f32 %v4888, 0.03125
          %v4895 = vmul.f32 %v4891, 0.03125
          %v4896 = vmul.f32 %v4892, %v4892
          %v4897 = vmul.f32 %v4893, %v4893
          %v4898 = vsub.f32 %v4894, %v4896
          %v4899 = vsub.f32 %v4895, %v4897
          %v4900 = vsub.f32 %v4868, %v4892
          %v4901 = vsub.f32 %v4869, %v4893
          %v4902 = vadd.f32 %v4898, 1e-05
          %v4903 = vadd.f32 %v4899, 1e-05
          %v4904 = vrsqrt.pop %v4902
          %v4905 = vrsqrt.pop %v4903
          %v4906 = vmul.f32 %v4900, %v4904
          %v4907 = vmul.f32 %v4901, %v4905
          %v4909 = vlaneseq
          %v4910 = vshrl.u32 %v4909, 7
          %v4911 = vsub.s32 0, %v4910
          %v4912 = vrot.slane %v4876, %v4911
          %v4914 = vmul.f32 %v4906, %v4912
          %v4915 = vmul.f32 %v4907, %v4912
          %v4917 = vlaneseq
          %v4918 = vshrl.u32 %v4917, 7
          %v4919 = vsub.s32 0, %v4918
          %v4920 = vrot.slane %v4877, %v4919
          %v4922 = vadd.f32 %v4914, %v4920
          %v4923 = vadd.f32 %v4915, %v4920
          %4924 = vst.msk [vmem:[%s1028] sm:$0xff] %vm1065, %v4922
          %4925 = vst.msk [vmem:[%s1028 + $0x8] sm:$0xff] %vm1065, %v4923
          %4926 = vst.msk [vmem:[#allocation13] sm:$0xff] %vm1990, %v3804
          %4927 = vst.msk [vmem:[#allocation13 + $0x8] sm:$0xff] %vm1990, %v4505
        $region124: #{transformer_decoder.1} parent=91 // pred_fallthru
          _
        %s4928 = smul.u32 2, %s46
        %p4929 = scmp.lt.s32.totalorder %s4928, 1
        %s4930 = scalar_select %p4929, %s4928, 1
        %s4931 = smul.addr %s4930, 8
        %s4932 = scalar_lea.vmem %s18, %s4931
        // Predicated region
        $region125: #{transformer_decoder.1} parent=91 // pred_check
          %p4933 = pneg %p530
        $region126: #{transformer_decoder.1} parent=91 // pred_check_branch
          %4935 = sbr.rel (%p4933) target = $region128
        $region127: #{transformer_decoder.1} parent=91 // pred_region
          %s4936 = smul.u32 2, %s46
        $region128: #{transformer_decoder.1} parent=91 // pred_fallthru
          _
        // Predicated region
        $region129: #{transformer_decoder.1} parent=91 // pred_check
          %p4937 = pneg %p556
        $region130: #{transformer_decoder.1} parent=91 // pred_check_branch
          %4939 = sbr.rel (%p4937) target = $region132
        $region131: #{transformer_decoder.1} parent=91 // pred_region
          %s4940 = smul.u32 2, %s46
          %s4942 = ssub.s32 256, 256
          %4943 = vsyncadd [#allocation4], %s4942
          %s4944 = smul.addr %s4940, 128
          %s4945 = scalar_lea.hbm %s19, %s4944
          %s4946 = sshll.u32 [#allocation13], 4
          %s4947 = int_to_ptr.vmem [resolvable:$true] %s4946
          %4952 = dma.vmem_to_hbm [thread:$0]  %s4947, 256, %s4945, [#allocation4], 128, 128, 8
        $region132: #{transformer_decoder.1} parent=91 // pred_fallthru
          _
        // Predicated region
        $region133: #{transformer_decoder.1} parent=91 // pred_check
          %p4953 = pneg %p530
        $region134: #{transformer_decoder.1} parent=91 // pred_check_branch
          %4955 = sbr.rel (%p4953) target = $region136
        $region135: #{transformer_decoder.1} parent=91 // pred_region
          %s4956 = smul.u32 2, %s46
          %p4957 = scmp.lt.s32.totalorder %s4956, 1
          %s4958 = scalar_select %p4957, %s4956, 1
          %s4959 = smul.addr %s4958, 8
          %s4960 = scalar_lea.vmem %s18, %s4959
        $region136: #{transformer_decoder.1} parent=91 // pred_fallthru
          _
        // Predicated region
        $region137: #{transformer_decoder.1} parent=91 // pred_check
          %p4961 = pneg %p556
        $region138: #{transformer_decoder.1} parent=91 // pred_check_branch
          %4963 = sbr.rel (%p4961) target = $region140
        $region139: #{transformer_decoder.1} parent=91 // pred_region
          %4964 = dma.done [#allocation4], 256
        $region140: #{transformer_decoder.1} parent=91 // pred_fallthru
          _
      $region92: #{transformer_decoder.1} parent=5 // pred_fallthru
        _
      %p4965 = scmp.le.s32.totalorder 2, %s37
      // Predicated region
      $region141: #{transformer_decoder.1} parent=5 // pred_check
        %p4966 = pneg %p4965
      $region142: #{transformer_decoder.1} parent=5 // pred_check_branch
        %4968 = sbr.rel (%p4966) target = $region144
      $region143: #{transformer_decoder.1} parent=5 // pred_region
        %s4969 = ssub.s32 %s37, 2
      $region144: #{transformer_decoder.1} parent=5 // pred_fallthru
        _
    $region6: #{transformer_decoder.1} parent=1 // loop_footer
      %s41 = sadd.s32 1, %s37
    $region7: #{transformer_decoder.1} parent=1 // loop_footer_branch
      %36 = sbr.rel target = $region3
    $region8: #{transformer_decoder.1} parent=1 // loop_exit
      _
    %4970 = vsyncpa [#allocation3], 1
    %s4971 = scalar_lea.sflag [#allocation3], 1
    %4972 = vsyncpa %s4971, 1
    %4973 = vsyncpa [#allocation6], 1
    %s4974 = scalar_lea.sflag [#allocation6], 1
    %4975 = vsyncpa %s4974, 1
    %4976 = vsyncpa [#allocation9], 1
    %s4977 = scalar_lea.sflag [#allocation9], 1
    %4978 = vsyncpa %s4977, 1
    %4979 = vsyncpa [#allocation12], 1
    %4980 = vsyncpa [#allocation4], 1
    %s4981 = scalar_lea.sflag [#allocation4], 1
    %4982 = vsyncpa %s4981, 1

</llo_original>
